<compile_context>
chip_gen: v6e
topology: v6e:2x2x1
jax: 0.10.0
libtpu: 0.0.40
codegen_flags: <defaults>
</compile_context>

<pallas_src>
import functools

import numpy as np
import jax
import jax.numpy as jnp
from jax import lax
from jax.experimental import pallas as pl
from jax.experimental.pallas import tpu as pltpu


# ----------------------------------------------------------------------------
# In-kernel helpers
# ----------------------------------------------------------------------------

def _col_mask(t, hw):
    """(1, t) bool mask of spatial columns inside the valid extent (ragged tail)."""
    j = pl.program_id(1)
    col = j * t + lax.broadcasted_iota(jnp.int32, (1, t), 1)
    return col < hw


def _acc_stat(ref, v):
    """Accumulate the spatial (lane) sum of a (Cc, t) tile into the
    VMEM-resident (1, Cc, 128) stat block (the lane broadcast keeps the single
    per-batch writeback lane dense)."""
    s = jnp.sum(v, axis=1, keepdims=True)               # (Cc, 1)
    ref[...] += jnp.broadcast_to(s[None], ref.shape)


def _sigmoid(z):
    # exp -> EUP, approximate reciprocal -> EUP: no f32 divide on the VALU.
    return pl.reciprocal(1.0 + jnp.exp(-z), approx=True)


# ----------------------------------------------------------------------------
# Kernels
# ----------------------------------------------------------------------------

def _conv1_kernel(x_ref, r_ref, w_ref, b_ref,
                  y_ref, s_ref, ss_ref, p_ref, *, hw, ragged):
    """P1: xa = x + residual ; y1 = W1a @ xa + b1a (stored bf16);
    accumulate BN1 partial stats of y1 and the spatial sum of xa (global pool)."""
    t = x_ref.shape[2]

    @pl.when(pl.program_id(1) == 0)
    def _():
        s_ref[...] = jnp.zeros_like(s_ref)
        ss_ref[...] = jnp.zeros_like(ss_ref)
        p_ref[...] = jnp.zeros_like(p_ref)

    mask = _col_mask(t, hw) if ragged else None
    xa = x_ref[0] + r_ref[0]
    if ragged:                       # ragged tail of x / residual holds garbage
        xa = jnp.where(mask, xa, 0.0)
    y = jnp.dot(w_ref[...], xa, preferred_element_type=jnp.float32) + b_ref[...]
    y_ref[0] = y.astype(y_ref.dtype)
    ym = jnp.where(mask, y, 0.0) if ragged else y
    _acc_stat(s_ref, ym)
    _acc_stat(ss_ref, ym * y)        # masked y^2 (ym already zero on the tail)
    _acc_stat(p_ref, xa)


def _gram_kernel(y1_ref, sc_ref, sh_ref, sumh_ref, gram_ref, *, hw, ragged):
    """P2/P4: h = relu(bn1(y1)); accumulate sum(h) and Gram(h) = h @ h^T so the
    BN2 scale/shift can be derived analytically -> y2 never touches HBM."""
    t = y1_ref.shape[2]

    @pl.when(pl.program_id(1) == 0)
    def _():
        sumh_ref[...] = jnp.zeros_like(sumh_ref)
        gram_ref[...] = jnp.zeros_like(gram_ref)

    h = jnp.maximum(y1_ref[0].astype(jnp.float32) * sc_ref[...] + sh_ref[...], 0.0)
    if ragged:                       # tail columns of y1 hold bias values -> mask
        h = jnp.where(_col_mask(t, hw), h, 0.0)
    _acc_stat(sumh_ref, h)
    g = lax.dot_general(h, h, (((1,), (1,)), ((), ())),
                        preferred_element_type=jnp.float32)
    gram_ref[...] += g[None]


def _fuse_conv1_kernel(y1_ref, x_ref, r_ref, xg_ref, sc1_ref, sh1_ref,
                       w2_ref, sh2_ref, w1_ref, b1_ref,
                       yo_ref, s_ref, ss_ref, p_ref, *, hw, ragged):
    """P3: h = relu(bn1(y1)); xl = bn2(W2 @ h + b2) (BN2 affine + conv bias are
    folded into w2_ref / sh2_ref); wei = sigmoid(xl + xg);
    xi = x*wei + res*(1-wei); y1' = W1' @ xi + b1' (bf16);
    accumulate BN1' partial stats of y1' and the spatial sum of xi."""
    t = x_ref.shape[2]

    @pl.when(pl.program_id(1) == 0)
    def _():
        s_ref[...] = jnp.zeros_like(s_ref)
        ss_ref[...] = jnp.zeros_like(ss_ref)
        p_ref[...] = jnp.zeros_like(p_ref)

    mask = _col_mask(t, hw) if ragged else None
    h = jnp.maximum(y1_ref[0].astype(jnp.float32) * sc1_ref[...] + sh1_ref[...], 0.0)
    xl = jnp.dot(w2_ref[...], h, preferred_element_type=jnp.float32) + sh2_ref[...]
    wei = _sigmoid(xl + xg_ref[0])
    xi = x_ref[0] * wei + r_ref[0] * (1.0 - wei)
    if ragged:                       # garbage x/res tail -> zero via select
        xi = jnp.where(mask, xi, 0.0)
    y = jnp.dot(w1_ref[...], xi, preferred_element_type=jnp.float32) + b1_ref[...]
    yo_ref[0] = y.astype(yo_ref.dtype)
    ym = jnp.where(mask, y, 0.0) if ragged else y
    _acc_stat(s_ref, ym)
    _acc_stat(ss_ref, ym * y)
    _acc_stat(p_ref, xi)


def _fuse_out_kernel(y1_ref, x_ref, r_ref, xg_ref, sc1_ref, sh1_ref,
                     w2_ref, sh2_ref, o_ref):
    """P5: h = relu(bn1'(y1b)); xl2 = bn2'(W2' @ h + b2') (folded);
    wei2 = sigmoid(xl2 + xg2); xo = x*wei2 + res*(1-wei2). Ragged tail columns
    compute garbage, but Pallas clips the partial-block writeback."""
    h = jnp.maximum(y1_ref[0].astype(jnp.float32) * sc1_ref[...] + sh1_ref[...], 0.0)
    xl = jnp.dot(w2_ref[...], h, preferred_element_type=jnp.float32) + sh2_ref[...]
    wei = _sigmoid(xl + xg_ref[0])
    o_ref[0] = x_ref[0] * wei + r_ref[0] * (1.0 - wei)


# ----------------------------------------------------------------------------
# Forward wrapper
# ----------------------------------------------------------------------------

def iaff_forward(x, residual, params, *, eps=1e-5, spatial_tile=2048,
                 act_dtype=jnp.bfloat16):
    N, C, H, W = x.shape
    Ci = params['la1_w1'].shape[0]
    assert C % 8 == 0 and Ci % 8 == 0, "channel dims should be multiples of 8"
    assert spatial_tile % 128 == 0
    hw = H * W
    t = min(spatial_tile, ((hw + 127) // 128) * 128)     # lane-dense spatial tile
    nblk = (hw + t - 1) // t
    hw_pad = nblk * t                                    # intermediates live padded
    ragged = hw_pad != hw                                # no host-side jnp.pad of x/res

    xf = x.reshape(N, C, hw).astype(jnp.float32)
    rf = residual.reshape(N, C, hw).astype(jnp.float32)

    f32 = lambda a: jnp.asarray(a, jnp.float32)
    col = lambda a: f32(a).reshape(-1, 1)
    w1a, b1a = f32(params['la1_w1']), col(params['la1_b1'])
    w2a, b2a = f32(params['la1_w2']), f32(params['la1_b2'])
    w1b, b1b = f32(params['la2_w1']), col(params['la2_b1'])
    w2b, b2b = f32(params['la2_w2']), f32(params['la2_b2'])

    grid = (N, nblk)
    # N parallel (feeds both TCs on v7x); spatial-block axis carries the
    # VMEM-resident stat accumulators -> "arbitrary".
    cp_red = pltpu.CompilerParams(dimension_semantics=("parallel", "arbitrary"))
    cp_par = pltpu.CompilerParams(dimension_semantics=("parallel", "parallel"))
    # TODO(synk): when N == 1 (or N*nblk < 2) fold several batch items / spatial
    # super-blocks into one parallel axis so both v7x TensorCores get work.

    io_spec = lambda cc: pl.BlockSpec((1, cc, t), lambda n, j: (n, 0, j))
    mat_spec = lambda a, b: pl.BlockSpec((a, b), lambda n, j: (0, 0))
    colv_spec = lambda cc: pl.BlockSpec((cc, 1), lambda n, j: (0, 0))
    stat_spec = lambda cc: pl.BlockSpec((1, cc, 128), lambda n, j: (n, 0, 0))
    gram_spec = pl.BlockSpec((1, Ci, Ci), lambda n, j: (n, 0, 0))
    xg_spec = pl.BlockSpec((1, C, 1), lambda n, j: (n, 0, 0))

    act_shape = lambda cc: jax.ShapeDtypeStruct((N, cc, hw_pad), act_dtype)
    stat_shape = lambda cc: jax.ShapeDtypeStruct((N, cc, 128), jnp.float32)
    gram_shape = jax.ShapeDtypeStruct((N, Ci, Ci), jnp.float32)

    count = float(N * hw)            # masked tail columns never enter the stats

    def reduce_stat(a):              # (N, Cc, 128) -> (Cc,)
        return jnp.sum(a[:, :, 0], axis=0)

    def bn1_scale_shift(s_arr, ss_arr, gamma, beta):
        s, ss = reduce_stat(s_arr), reduce_stat(ss_arr)
        mean = s / count
        var = ss / count - mean * mean          # biased variance, as BN uses
        scale = f32(gamma) / jnp.sqrt(var + eps)
        shift = f32(beta) - mean * scale
        return scale.reshape(-1, 1), shift.reshape(-1, 1)

    def bn2_folded(sumh_arr, gram_arr, w2, b2, gamma, beta):
        # Analytic BN stats of y2 = W2 @ h + b2 from sum(h) and Gram(h):
        #   mean(y2) = W2 mean(h) + b2
        #   E[y2^2]  = diag(W2 E[h h^T] W2^T) + 2 b2 (W2 mean(h)) + b2^2
        mean_h = reduce_stat(sumh_arr) / count            # (Ci,)
        eh2 = jnp.sum(gram_arr, axis=0) / count           # (Ci, Ci)
        wm = w2 @ mean_h                                  # (C,)
        mean_y = wm + b2
        e_y2 = jnp.sum((w2 @ eh2) * w2, axis=1) + 2.0 * b2 * wm + b2 * b2
        var = e_y2 - mean_y * mean_y
        scale = f32(gamma) / jnp.sqrt(var + eps)
        shift = f32(beta) - mean_y * scale
        # Fold conv bias + BN affine into the conv:
        #   bn2(W2 @ h + b2) = (scale*W2) @ h + (b2*scale + shift)
        return scale[:, None] * w2, (b2 * scale + shift).reshape(-1, 1)

    def global_att(pool_arr):
        # AdaptiveAvgPool2d(1) -> 1x1 conv -> ReLU -> 1x1 conv (no BN).
        # TODO(synk): kept in plain JAX - (N, C) shapes are far below TPU tiles.
        pooled = pool_arr[:, :, 0] / hw                   # (N, C)
        g = jnp.maximum(pooled @ f32(params['ga_w1']).T + f32(params['ga_b1']), 0.0)
        g = g @ f32(params['ga_w2']).T + f32(params['ga_b2'])
        return g[:, :, None]                              # (N, C, 1)

    # ---- P1: xa = x+res ; y1 = conv1 (bf16) ; y1 stats + pooled(xa) ----
    y1, s1, ss1, pxa = pl.pallas_call(
        functools.partial(_conv1_kernel, hw=hw, ragged=ragged),
        out_shape=(act_shape(Ci), stat_shape(Ci), stat_shape(Ci), stat_shape(C)),
        grid_spec=pltpu.PrefetchScalarGridSpec(
            num_scalar_prefetch=0, grid=grid,
            in_specs=[io_spec(C), io_spec(C), mat_spec(Ci, C), colv_spec(Ci)],
            out_specs=(io_spec(Ci), stat_spec(Ci), stat_spec(Ci), stat_spec(C))),
        compiler_params=cp_red,
    )(xf, rf, w1a, b1a)

    sc1, sh1 = bn1_scale_shift(s1, ss1, params['la1_g1'], params['la1_be1'])
    xg = global_att(pxa)

    # ---- P2: sum(h) + Gram(h) for analytic BN2 of local_att (y2 stays in VMEM) ----
    sumh1, gram1 = pl.pallas_call(
        functools.partial(_gram_kernel, hw=hw, ragged=ragged),
        out_shape=(stat_shape(Ci), gram_shape),
        grid_spec=pltpu.PrefetchScalarGridSpec(
            num_scalar_prefetch=0, grid=grid,
            in_specs=[io_spec(Ci), colv_spec(Ci), colv_spec(Ci)],
            out_specs=(stat_spec(Ci), gram_spec)),
        compiler_params=cp_red,
    )(y1, sc1, sh1)

    w2a_eff, sh2a_eff = bn2_folded(sumh1, gram1, w2a, b2a,
                                   params['la1_g2'], params['la1_be2'])

    # ---- P3: recompute y2 on the fly, gate, blend, conv1 of local_att2 ----
    y1b, s1b, ss1b, pxi = pl.pallas_call(
        functools.partial(_fuse_conv1_kernel, hw=hw, ragged=ragged),
        out_shape=(act_shape(Ci), stat_shape(Ci), stat_shape(Ci), stat_shape(C)),
        grid_spec=pltpu.PrefetchScalarGridSpec(
            num_scalar_prefetch=0, grid=grid,
            in_specs=[io_spec(Ci), io_spec(C), io_spec(C), xg_spec,
                      colv_spec(Ci), colv_spec(Ci), mat_spec(C, Ci), colv_spec(C),
                      mat_spec(Ci, C), colv_spec(Ci)],
            out_specs=(io_spec(Ci), stat_spec(Ci), stat_spec(Ci), stat_spec(C))),
        compiler_params=cp_red,
    )(y1, xf, rf, xg, sc1, sh1, w2a_eff, sh2a_eff, w1b, b1b)

    sc1b, sh1b = bn1_scale_shift(s1b, ss1b, params['la2_g1'], params['la2_be1'])
    xg2 = global_att(pxi)   # NOTE: the PyTorch forward reuses self.global_att here.

    # ---- P4: sum(h') + Gram(h') for analytic BN2 of local_att2 ----
    sumh2, gram2 = pl.pallas_call(
        functools.partial(_gram_kernel, hw=hw, ragged=ragged),
        out_shape=(stat_shape(Ci), gram_shape),
        grid_spec=pltpu.PrefetchScalarGridSpec(
            num_scalar_prefetch=0, grid=grid,
            in_specs=[io_spec(Ci), colv_spec(Ci), colv_spec(Ci)],
            out_specs=(stat_spec(Ci), gram_spec)),
        compiler_params=cp_red,
    )(y1b, sc1b, sh1b)

    w2b_eff, sh2b_eff = bn2_folded(sumh2, gram2, w2b, b2b,
                                   params['la2_g2'], params['la2_be2'])

    # ---- P5: xo = x*wei2 + res*(1-wei2) ----
    xo = pl.pallas_call(
        _fuse_out_kernel,
        out_shape=jax.ShapeDtypeStruct((N, C, hw), jnp.float32),
        grid_spec=pltpu.PrefetchScalarGridSpec(
            num_scalar_prefetch=0, grid=grid,
            in_specs=[io_spec(Ci), io_spec(C), io_spec(C), xg_spec,
                      colv_spec(Ci), colv_spec(Ci), mat_spec(C, Ci), colv_spec(C)],
            out_specs=io_spec(C)),
        compiler_params=cp_par,
    )(y1b, xf, rf, xg2, sc1b, sh1b, w2b_eff, sh2b_eff)

    return xo.reshape(N, C, H, W)


# ----------------------------------------------------------------------------
# Parameter construction + pure-JAX reference
# ----------------------------------------------------------------------------

def init_iaff_params(key, channels=64, r=4):
    ci = channels // r
    ks = iter(jax.random.split(key, 24))
    w = lambda co, cin: jax.random.normal(next(ks), (co, cin), jnp.float32) * jnp.sqrt(2.0 / cin)
    b = lambda co: jax.random.normal(next(ks), (co,), jnp.float32) * 0.05
    g = lambda co: 1.0 + 0.1 * jax.random.normal(next(ks), (co,), jnp.float32)
    be = lambda co: 0.1 * jax.random.normal(next(ks), (co,), jnp.float32)
    p = {}
    for tag in ('la1', 'la2'):                       # local_att / local_att2
        p[f'{tag}_w1'], p[f'{tag}_b1'] = w(ci, channels), b(ci)
        p[f'{tag}_g1'], p[f'{tag}_be1'] = g(ci), be(ci)
        p[f'{tag}_w2'], p[f'{tag}_b2'] = w(channels, ci), b(channels)
        p[f'{tag}_g2'], p[f'{tag}_be2'] = g(channels), be(channels)
    p['ga_w1'], p['ga_b1'] = w(ci, channels), b(ci)  # global_att (no BN, reused twice)
    p['ga_w2'], p['ga_b2'] = w(channels, ci), b(channels)
    # NOTE: global_att2 exists in the PyTorch module but is never used in forward().
    return p


def iaff_reference(x, res, p, eps=1e-5):
    hi = lax.Precision.HIGHEST
    conv1x1 = lambda z, w, b: jnp.einsum('nchw,oc->nohw', z, w, precision=hi) \
        + b[None, :, None, None]

    def bn(z, g, b):
        m = z.mean(axis=(0, 2, 3), keepdims=True)
        v = z.var(axis=(0, 2, 3), keepdims=True)
        return g[None, :, None, None] * (z - m) / jnp.sqrt(v + eps) + b[None, :, None, None]

    def local_att(z, tag):
        h = conv1x1(z, p[f'{tag}_w1'], p[f'{tag}_b1'])
        h = jnp.maximum(bn(h, p[f'{tag}_g1'], p[f'{tag}_be1']), 0.0)
        h = conv1x1(h, p[f'{tag}_w2'], p[f'{tag}_b2'])
        return bn(h, p[f'{tag}_g2'], p[f'{tag}_be2'])

    def global_att(z):
        g = z.mean(axis=(2, 3), keepdims=True)
        g = jnp.maximum(conv1x1(g, p['ga_w1'], p['ga_b1']), 0.0)
        return conv1x1(g, p['ga_w2'], p['ga_b2'])

    xa = x + res
    wei = jax.nn.sigmoid(local_att(xa, 'la1') + global_att(xa))
    xi = x * wei + res * (1.0 - wei)
    wei2 = jax.nn.sigmoid(local_att(xi, 'la2') + global_att(xi))
    return x * wei2 + res * (1.0 - wei2)


if __name__ == "__main__":
    key = jax.random.PRNGKey(0)
    kx, kr, kp = jax.random.split(key, 3)

    # iAFF defaults: channels=64, r=4 -> inter_channels=16.
    N, C, H, W = 2, 64, 16, 16
    x = jax.random.normal(kx, (N, C, H, W), jnp.float32)
    residual = jax.random.normal(kr, (N, C, H, W), jnp.float32)
    params = init_iaff_params(kp, channels=C, r=4)

    fwd = jax.jit(iaff_forward)
    out = jax.block_until_ready(fwd(x, residual, params))
    ref = iaff_reference(x, residual, params)
    # Tolerance reflects bf16 HBM storage of the 16-channel intermediates
    # (+ approx reciprocal in the sigmoid); everything else is f32.
    np.testing.assert_allclose(np.asarray(out), np.asarray(ref), atol=4e-2, rtol=1e-2)

    # Ragged spatial extent (H*W = 169, tile = 128 -> 2 blocks, last one partial):
    # exercises the in-kernel mask path and multi-block stat accumulation.
    Hr, Wr = 13, 13
    xr = jax.random.normal(jax.random.PRNGKey(1), (N, C, Hr, Wr), jnp.float32)
    rr = jax.random.normal(jax.random.PRNGKey(2), (N, C, Hr, Wr), jnp.float32)
    fwd_r = jax.jit(functools.partial(iaff_forward, spatial_tile=128))
    out_r = jax.block_until_ready(fwd_r(xr, rr, params))
    ref_r = iaff_reference(xr, rr, params)
    np.testing.assert_allclose(np.asarray(out_r), np.asarray(ref_r), atol=4e-2, rtol=1e-2)

    print("KERNEL_OK")
</pallas_src>

<mosaic_0001>
module attributes {stable_mosaic.version = 11 : i64} {
  func.func @_conv1_kernel(%arg0: i32, %arg1: i32, %arg2: memref<1x64x256xf32, #tpu.memory_space<vmem>>, %arg3: memref<1x64x256xf32, #tpu.memory_space<vmem>>, %arg4: memref<16x64xf32, #tpu.memory_space<vmem>>, %arg5: memref<16x1xf32, #tpu.memory_space<vmem>>, %arg6: memref<1x16x256xbf16, #tpu.memory_space<vmem>>, %arg7: memref<1x16x128xf32, #tpu.memory_space<vmem>>, %arg8: memref<1x16x128xf32, #tpu.memory_space<vmem>>, %arg9: memref<1x64x128xf32, #tpu.memory_space<vmem>>) attributes {dimension_semantics = [#tpu.dimension_semantics<parallel>, #tpu.dimension_semantics<arbitrary>], iteration_bounds = array<i64: 2, 1>, scalar_prefetch = 0 : i64, scratch_operands = 0 : i64, tpu.core_type = #tpu.core_type<tc>, window_params = [{transform_indices = @transform_0, window_bounds = array<i64: 1, 64, 256>}, {transform_indices = @transform_1, window_bounds = array<i64: 1, 64, 256>}, {pipeline_mode = #tpu.pipeline_mode<synchronous>, transform_indices = @transform_2, window_bounds = array<i64: 16, 64>}, {pipeline_mode = #tpu.pipeline_mode<synchronous>, transform_indices = @transform_3, window_bounds = array<i64: 16, 1>}, {transform_indices = @transform_4, window_bounds = array<i64: 1, 16, 256>}, {transform_indices = @transform_5, window_bounds = array<i64: 1, 16, 128>}, {transform_indices = @transform_6, window_bounds = array<i64: 1, 16, 128>}, {transform_indices = @transform_7, window_bounds = array<i64: 1, 64, 128>}]} {
    %c0_i32 = arith.constant 0 : i32
    %0 = arith.cmpi eq, %arg1, %c0_i32 : i32
    %1 = arith.extui %0 : i1 to i32
    %c0_i32_0 = arith.constant 0 : i32
    %2 = arith.cmpi ne, %1, %c0_i32_0 : i32
    scf.if %2 {
      %cst_34 = arith.constant 0.000000e+00 : f32
      %42 = vector.broadcast %cst_34 : f32 to vector<1x16x128xf32>
      %c0_35 = arith.constant 0 : index
      %c0_36 = arith.constant 0 : index
      %c0_37 = arith.constant 0 : index
      %43 = vector.load %arg7[%c0_35, %c0_36, %c0_37] : memref<1x16x128xf32, #tpu.memory_space<vmem>>, vector<1x16x128xf32>
      tpu.vector_store %arg7[%c0_35, %c0_36, %c0_37], %42 {strides = array<i32>} : memref<1x16x128xf32, #tpu.memory_space<vmem>>, vector<1x16x128xf32>,
      %cst_38 = arith.constant 0.000000e+00 : f32
      %44 = vector.broadcast %cst_38 : f32 to vector<1x16x128xf32>
      %c0_39 = arith.constant 0 : index
      %c0_40 = arith.constant 0 : index
      %c0_41 = arith.constant 0 : index
      %45 = vector.load %arg8[%c0_39, %c0_40, %c0_41] : memref<1x16x128xf32, #tpu.memory_space<vmem>>, vector<1x16x128xf32>
      tpu.vector_store %arg8[%c0_39, %c0_40, %c0_41], %44 {strides = array<i32>} : memref<1x16x128xf32, #tpu.memory_space<vmem>>, vector<1x16x128xf32>,
      %cst_42 = arith.constant 0.000000e+00 : f32
      %46 = vector.broadcast %cst_42 : f32 to vector<1x64x128xf32>
      %c0_43 = arith.constant 0 : index
      %c0_44 = arith.constant 0 : index
      %c0_45 = arith.constant 0 : index
      %47 = vector.load %arg9[%c0_43, %c0_44, %c0_45] : memref<1x64x128xf32, #tpu.memory_space<vmem>>, vector<1x64x128xf32>
      tpu.vector_store %arg9[%c0_43, %c0_44, %c0_45], %46 {strides = array<i32>} : memref<1x64x128xf32, #tpu.memory_space<vmem>>, vector<1x64x128xf32>,
    } else {
    }
    %c0 = arith.constant 0 : index
    %c0_1 = arith.constant 0 : index
    %c0_2 = arith.constant 0 : index
    %3 = vector.load %arg2[%c0, %c0_1, %c0_2] : memref<1x64x256xf32, #tpu.memory_space<vmem>>, vector<1x64x256xf32>
    %4 = vector.shape_cast %3 : vector<1x64x256xf32> to vector<64x256xf32>
    %c0_3 = arith.constant 0 : index
    %c0_4 = arith.constant 0 : index
    %c0_5 = arith.constant 0 : index
    %5 = vector.load %arg3[%c0_3, %c0_4, %c0_5] : memref<1x64x256xf32, #tpu.memory_space<vmem>>, vector<1x64x256xf32>
    %6 = vector.shape_cast %5 : vector<1x64x256xf32> to vector<64x256xf32>
    %7 = arith.addf %4, %6 : vector<64x256xf32>
    %c0_6 = arith.constant 0 : index
    %c0_7 = arith.constant 0 : index
    %8 = vector.load %arg4[%c0_6, %c0_7] : memref<16x64xf32, #tpu.memory_space<vmem>>, vector<16x64xf32>
    %cst = arith.constant dense<0.000000e+00> : vector<16x256xf32>
    %9 = tpu.matmul %8, %7, %cst {dimension_numbers = #tpu.dot_dimension_numbers<[1], [0], [0], [1], [0, 0, 1, 1], [], []>} : vector<16x64xf32>, vector<64x256xf32>, vector<16x256xf32> -> vector<16x256xf32>
    %c0_8 = arith.constant 0 : index
    %c0_9 = arith.constant 0 : index
    %10 = vector.load %arg5[%c0_8, %c0_9] : memref<16x1xf32, #tpu.memory_space<vmem>>, vector<16x1xf32>
    %11 = vector.broadcast %10 : vector<16x1xf32> to vector<16x256xf32>
    %12 = arith.addf %9, %11 : vector<16x256xf32>
    %13 = arith.truncf %12 : vector<16x256xf32> to vector<16x256xbf16>
    %c0_10 = arith.constant 0 : index
    %c0_11 = arith.constant 0 : index
    %c0_12 = arith.constant 0 : index
    %14 = vector.load %arg6[%c0_10, %c0_11, %c0_12] : memref<1x16x256xbf16, #tpu.memory_space<vmem>>, vector<1x16x256xbf16>
    %15 = vector.shape_cast %14 : vector<1x16x256xbf16> to vector<16x256xbf16>
    %16 = vector.shape_cast %13 : vector<16x256xbf16> to vector<1x16x256xbf16>
    tpu.vector_store %arg6[%c0_10, %c0_11, %c0_12], %16 {strides = array<i32>} : memref<1x16x256xbf16, #tpu.memory_space<vmem>>, vector<1x16x256xbf16>,
    %cst_13 = arith.constant dense<0.000000e+00> : vector<16xf32>
    %17 = vector.multi_reduction <add>, %12, %cst_13 [1] : vector<16x256xf32> to vector<16xf32>
    %18 = vector.shape_cast %17 : vector<16xf32> to vector<16x1xf32>
    %c0_14 = arith.constant 0 : index
    %c0_15 = arith.constant 0 : index
    %c0_16 = arith.constant 0 : index
    %19 = vector.load %arg7[%c0_14, %c0_15, %c0_16] : memref<1x16x128xf32, #tpu.memory_space<vmem>>, vector<1x16x128xf32>
    %20 = vector.shape_cast %18 : vector<16x1xf32> to vector<1x16x1xf32>
    %21 = vector.shape_cast %20 : vector<1x16x1xf32> to vector<1x16x1xf32>
    %22 = vector.broadcast %21 : vector<1x16x1xf32> to vector<1x16x128xf32>
    %23 = arith.addf %19, %22 : vector<1x16x128xf32>
    %c0_17 = arith.constant 0 : index
    %c0_18 = arith.constant 0 : index
    %c0_19 = arith.constant 0 : index
    %24 = vector.load %arg7[%c0_17, %c0_18, %c0_19] : memref<1x16x128xf32, #tpu.memory_space<vmem>>, vector<1x16x128xf32>
    tpu.vector_store %arg7[%c0_17, %c0_18, %c0_19], %23 {strides = array<i32>} : memref<1x16x128xf32, #tpu.memory_space<vmem>>, vector<1x16x128xf32>,
    %25 = arith.mulf %12, %12 : vector<16x256xf32>
    %cst_20 = arith.constant dense<0.000000e+00> : vector<16xf32>
    %26 = vector.multi_reduction <add>, %25, %cst_20 [1] : vector<16x256xf32> to vector<16xf32>
    %27 = vector.shape_cast %26 : vector<16xf32> to vector<16x1xf32>
    %c0_21 = arith.constant 0 : index
    %c0_22 = arith.constant 0 : index
    %c0_23 = arith.constant 0 : index
    %28 = vector.load %arg8[%c0_21, %c0_22, %c0_23] : memref<1x16x128xf32, #tpu.memory_space<vmem>>, vector<1x16x128xf32>
    %29 = vector.shape_cast %27 : vector<16x1xf32> to vector<1x16x1xf32>
    %30 = vector.shape_cast %29 : vector<1x16x1xf32> to vector<1x16x1xf32>
    %31 = vector.broadcast %30 : vector<1x16x1xf32> to vector<1x16x128xf32>
    %32 = arith.addf %28, %31 : vector<1x16x128xf32>
    %c0_24 = arith.constant 0 : index
    %c0_25 = arith.constant 0 : index
    %c0_26 = arith.constant 0 : index
    %33 = vector.load %arg8[%c0_24, %c0_25, %c0_26] : memref<1x16x128xf32, #tpu.memory_space<vmem>>, vector<1x16x128xf32>
    tpu.vector_store %arg8[%c0_24, %c0_25, %c0_26], %32 {strides = array<i32>} : memref<1x16x128xf32, #tpu.memory_space<vmem>>, vector<1x16x128xf32>,
    %cst_27 = arith.constant dense<0.000000e+00> : vector<64xf32>
    %34 = vector.multi_reduction <add>, %7, %cst_27 [1] : vector<64x256xf32> to vector<64xf32>
    %35 = vector.shape_cast %34 : vector<64xf32> to vector<64x1xf32>
    %c0_28 = arith.constant 0 : index
    %c0_29 = arith.constant 0 : index
    %c0_30 = arith.constant 0 : index
    %36 = vector.load %arg9[%c0_28, %c0_29, %c0_30] : memref<1x64x128xf32, #tpu.memory_space<vmem>>, vector<1x64x128xf32>
    %37 = vector.shape_cast %35 : vector<64x1xf32> to vector<1x64x1xf32>
    %38 = vector.shape_cast %37 : vector<1x64x1xf32> to vector<1x64x1xf32>
    %39 = vector.broadcast %38 : vector<1x64x1xf32> to vector<1x64x128xf32>
    %40 = arith.addf %36, %39 : vector<1x64x128xf32>
    %c0_31 = arith.constant 0 : index
    %c0_32 = arith.constant 0 : index
    %c0_33 = arith.constant 0 : index
    %41 = vector.load %arg9[%c0_31, %c0_32, %c0_33] : memref<1x64x128xf32, #tpu.memory_space<vmem>>, vector<1x64x128xf32>
    tpu.vector_store %arg9[%c0_31, %c0_32, %c0_33], %40 {strides = array<i32>} : memref<1x64x128xf32, #tpu.memory_space<vmem>>, vector<1x64x128xf32>,
    return
  }
  func.func @transform_0(%arg0: i32, %arg1: i32) -> (i32, i32, i32) {
    %c0_i32 = arith.constant 0 : i32
    %c0_i32_0 = arith.constant 0 : i32
    return %arg0, %c0_i32, %arg1 : i32, i32, i32
  }
  func.func @transform_1(%arg0: i32, %arg1: i32) -> (i32, i32, i32) {
    %c0_i32 = arith.constant 0 : i32
    %c0_i32_0 = arith.constant 0 : i32
    return %arg0, %c0_i32, %arg1 : i32, i32, i32
  }
  func.func @transform_2(%arg0: i32, %arg1: i32) -> (i32, i32) {
    %c0_i32 = arith.constant 0 : i32
    %c0_i32_0 = arith.constant 0 : i32
    %c0_i32_1 = arith.constant 0 : i32
    return %c0_i32, %c0_i32_0 : i32, i32
  }
  func.func @transform_3(%arg0: i32, %arg1: i32) -> (i32, i32) {
    %c0_i32 = arith.constant 0 : i32
    %c0_i32_0 = arith.constant 0 : i32
    %c0_i32_1 = arith.constant 0 : i32
    return %c0_i32, %c0_i32_0 : i32, i32
  }
  func.func @transform_4(%arg0: i32, %arg1: i32) -> (i32, i32, i32) {
    %c0_i32 = arith.constant 0 : i32
    %c0_i32_0 = arith.constant 0 : i32
    return %arg0, %c0_i32, %arg1 : i32, i32, i32
  }
  func.func @transform_5(%arg0: i32, %arg1: i32) -> (i32, i32, i32) {
    %c0_i32 = arith.constant 0 : i32
    %c0_i32_0 = arith.constant 0 : i32
    %c0_i32_1 = arith.constant 0 : i32
    return %arg0, %c0_i32, %c0_i32_0 : i32, i32, i32
  }
  func.func @transform_6(%arg0: i32, %arg1: i32) -> (i32, i32, i32) {
    %c0_i32 = arith.constant 0 : i32
    %c0_i32_0 = arith.constant 0 : i32
    %c0_i32_1 = arith.constant 0 : i32
    return %arg0, %c0_i32, %c0_i32_0 : i32, i32, i32
  }
  func.func @transform_7(%arg0: i32, %arg1: i32) -> (i32, i32, i32) {
    %c0_i32 = arith.constant 0 : i32
    %c0_i32_0 = arith.constant 0 : i32
    %c0_i32_1 = arith.constant 0 : i32
    return %arg0, %c0_i32, %c0_i32_0 : i32, i32, i32
  }
}

module attributes {stable_mosaic.version = 11 : i64} {
  func.func @_gram_kernel(%arg0: i32, %arg1: i32, %arg2: memref<1x16x256xbf16, #tpu.memory_space<vmem>>, %arg3: memref<16x1xf32, #tpu.memory_space<vmem>>, %arg4: memref<16x1xf32, #tpu.memory_space<vmem>>, %arg5: memref<1x16x128xf32, #tpu.memory_space<vmem>>, %arg6: memref<1x16x16xf32, #tpu.memory_space<vmem>>) attributes {dimension_semantics = [#tpu.dimension_semantics<parallel>, #tpu.dimension_semantics<arbitrary>], iteration_bounds = array<i64: 2, 1>, scalar_prefetch = 0 : i64, scratch_operands = 0 : i64, tpu.core_type = #tpu.core_type<tc>, window_params = [{transform_indices = @transform_0, window_bounds = array<i64: 1, 16, 256>}, {pipeline_mode = #tpu.pipeline_mode<synchronous>, transform_indices = @transform_1, window_bounds = array<i64: 16, 1>}, {pipeline_mode = #tpu.pipeline_mode<synchronous>, transform_indices = @transform_2, window_bounds = array<i64: 16, 1>}, {transform_indices = @transform_3, window_bounds = array<i64: 1, 16, 128>}, {transform_indices = @transform_4, window_bounds = array<i64: 1, 16, 16>}]} {
    %c0_i32 = arith.constant 0 : i32
    %0 = arith.cmpi eq, %arg1, %c0_i32 : i32
    %1 = arith.extui %0 : i1 to i32
    %c0_i32_0 = arith.constant 0 : i32
    %2 = arith.cmpi ne, %1, %c0_i32_0 : i32
    scf.if %2 {
      %cst_21 = arith.constant 0.000000e+00 : f32
      %27 = vector.broadcast %cst_21 : f32 to vector<1x16x128xf32>
      %c0_22 = arith.constant 0 : index
      %c0_23 = arith.constant 0 : index
      %c0_24 = arith.constant 0 : index
      %28 = vector.load %arg5[%c0_22, %c0_23, %c0_24] : memref<1x16x128xf32, #tpu.memory_space<vmem>>, vector<1x16x128xf32>
      tpu.vector_store %arg5[%c0_22, %c0_23, %c0_24], %27 {strides = array<i32>} : memref<1x16x128xf32, #tpu.memory_space<vmem>>, vector<1x16x128xf32>,
      %cst_25 = arith.constant 0.000000e+00 : f32
      %29 = vector.broadcast %cst_25 : f32 to vector<1x16x16xf32>
      %c0_26 = arith.constant 0 : index
      %c0_27 = arith.constant 0 : index
      %c0_28 = arith.constant 0 : index
      %30 = vector.load %arg6[%c0_26, %c0_27, %c0_28] : memref<1x16x16xf32, #tpu.memory_space<vmem>>, vector<1x16x16xf32>
      tpu.vector_store %arg6[%c0_26, %c0_27, %c0_28], %29 {strides = array<i32>} : memref<1x16x16xf32, #tpu.memory_space<vmem>>, vector<1x16x16xf32>,
    } else {
    }
    %c0 = arith.constant 0 : index
    %c0_1 = arith.constant 0 : index
    %c0_2 = arith.constant 0 : index
    %3 = vector.load %arg2[%c0, %c0_1, %c0_2] : memref<1x16x256xbf16, #tpu.memory_space<vmem>>, vector<1x16x256xbf16>
    %4 = vector.shape_cast %3 : vector<1x16x256xbf16> to vector<16x256xbf16>
    %5 = arith.extf %4 : vector<16x256xbf16> to vector<16x256xf32>
    %c0_3 = arith.constant 0 : index
    %c0_4 = arith.constant 0 : index
    %6 = vector.load %arg3[%c0_3, %c0_4] : memref<16x1xf32, #tpu.memory_space<vmem>>, vector<16x1xf32>
    %7 = vector.broadcast %6 : vector<16x1xf32> to vector<16x256xf32>
    %8 = arith.mulf %5, %7 : vector<16x256xf32>
    %c0_5 = arith.constant 0 : index
    %c0_6 = arith.constant 0 : index
    %9 = vector.load %arg4[%c0_5, %c0_6] : memref<16x1xf32, #tpu.memory_space<vmem>>, vector<16x1xf32>
    %10 = vector.broadcast %9 : vector<16x1xf32> to vector<16x256xf32>
    %11 = arith.addf %8, %10 : vector<16x256xf32>
    %cst = arith.constant 0.000000e+00 : f32
    %12 = vector.broadcast %cst : f32 to vector<16x256xf32>
    %13 = arith.maximumf %11, %12 : vector<16x256xf32>
    %cst_7 = arith.constant dense<0.000000e+00> : vector<16xf32>
    %14 = vector.multi_reduction <add>, %13, %cst_7 [1] : vector<16x256xf32> to vector<16xf32>
    %15 = vector.shape_cast %14 : vector<16xf32> to vector<16x1xf32>
    %c0_8 = arith.constant 0 : index
    %c0_9 = arith.constant 0 : index
    %c0_10 = arith.constant 0 : index
    %16 = vector.load %arg5[%c0_8, %c0_9, %c0_10] : memref<1x16x128xf32, #tpu.memory_space<vmem>>, vector<1x16x128xf32>
    %17 = vector.shape_cast %15 : vector<16x1xf32> to vector<1x16x1xf32>
    %18 = vector.shape_cast %17 : vector<1x16x1xf32> to vector<1x16x1xf32>
    %19 = vector.broadcast %18 : vector<1x16x1xf32> to vector<1x16x128xf32>
    %20 = arith.addf %16, %19 : vector<1x16x128xf32>
    %c0_11 = arith.constant 0 : index
    %c0_12 = arith.constant 0 : index
    %c0_13 = arith.constant 0 : index
    %21 = vector.load %arg5[%c0_11, %c0_12, %c0_13] : memref<1x16x128xf32, #tpu.memory_space<vmem>>, vector<1x16x128xf32>
    tpu.vector_store %arg5[%c0_11, %c0_12, %c0_13], %20 {strides = array<i32>} : memref<1x16x128xf32, #tpu.memory_space<vmem>>, vector<1x16x128xf32>,
    %cst_14 = arith.constant dense<0.000000e+00> : vector<16x16xf32>
    %22 = tpu.matmul %13, %13, %cst_14 {dimension_numbers = #tpu.dot_dimension_numbers<[1], [1], [0], [0], [0, 0, 1, 0], [], []>} : vector<16x256xf32>, vector<16x256xf32>, vector<16x16xf32> -> vector<16x16xf32>
    %c0_15 = arith.constant 0 : index
    %c0_16 = arith.constant 0 : index
    %c0_17 = arith.constant 0 : index
    %23 = vector.load %arg6[%c0_15, %c0_16, %c0_17] : memref<1x16x16xf32, #tpu.memory_space<vmem>>, vector<1x16x16xf32>
    %24 = vector.shape_cast %22 : vector<16x16xf32> to vector<1x16x16xf32>
    %25 = arith.addf %23, %24 : vector<1x16x16xf32>
    %c0_18 = arith.constant 0 : index
    %c0_19 = arith.constant 0 : index
    %c0_20 = arith.constant 0 : index
    %26 = vector.load %arg6[%c0_18, %c0_19, %c0_20] : memref<1x16x16xf32, #tpu.memory_space<vmem>>, vector<1x16x16xf32>
    tpu.vector_store %arg6[%c0_18, %c0_19, %c0_20], %25 {strides = array<i32>} : memref<1x16x16xf32, #tpu.memory_space<vmem>>, vector<1x16x16xf32>,
    return
  }
  func.func @transform_0(%arg0: i32, %arg1: i32) -> (i32, i32, i32) {
    %c0_i32 = arith.constant 0 : i32
    %c0_i32_0 = arith.constant 0 : i32
    return %arg0, %c0_i32, %arg1 : i32, i32, i32
  }
  func.func @transform_1(%arg0: i32, %arg1: i32) -> (i32, i32) {
    %c0_i32 = arith.constant 0 : i32
    %c0_i32_0 = arith.constant 0 : i32
    %c0_i32_1 = arith.constant 0 : i32
    return %c0_i32, %c0_i32_0 : i32, i32
  }
  func.func @transform_2(%arg0: i32, %arg1: i32) -> (i32, i32) {
    %c0_i32 = arith.constant 0 : i32
    %c0_i32_0 = arith.constant 0 : i32
    %c0_i32_1 = arith.constant 0 : i32
    return %c0_i32, %c0_i32_0 : i32, i32
  }
  func.func @transform_3(%arg0: i32, %arg1: i32) -> (i32, i32, i32) {
    %c0_i32 = arith.constant 0 : i32
    %c0_i32_0 = arith.constant 0 : i32
    %c0_i32_1 = arith.constant 0 : i32
    return %arg0, %c0_i32, %c0_i32_0 : i32, i32, i32
  }
  func.func @transform_4(%arg0: i32, %arg1: i32) -> (i32, i32, i32) {
    %c0_i32 = arith.constant 0 : i32
    %c0_i32_0 = arith.constant 0 : i32
    %c0_i32_1 = arith.constant 0 : i32
    return %arg0, %c0_i32, %c0_i32_0 : i32, i32, i32
  }
}

module attributes {stable_mosaic.version = 11 : i64} {
  func.func @_fuse_conv1_kernel(%arg0: i32, %arg1: i32, %arg2: memref<1x16x256xbf16, #tpu.memory_space<vmem>>, %arg3: memref<1x64x256xf32, #tpu.memory_space<vmem>>, %arg4: memref<1x64x256xf32, #tpu.memory_space<vmem>>, %arg5: memref<1x64x1xf32, #tpu.memory_space<vmem>>, %arg6: memref<16x1xf32, #tpu.memory_space<vmem>>, %arg7: memref<16x1xf32, #tpu.memory_space<vmem>>, %arg8: memref<64x16xf32, #tpu.memory_space<vmem>>, %arg9: memref<64x1xf32, #tpu.memory_space<vmem>>, %arg10: memref<16x64xf32, #tpu.memory_space<vmem>>, %arg11: memref<16x1xf32, #tpu.memory_space<vmem>>, %arg12: memref<1x16x256xbf16, #tpu.memory_space<vmem>>, %arg13: memref<1x16x128xf32, #tpu.memory_space<vmem>>, %arg14: memref<1x16x128xf32, #tpu.memory_space<vmem>>, %arg15: memref<1x64x128xf32, #tpu.memory_space<vmem>>) attributes {dimension_semantics = [#tpu.dimension_semantics<parallel>, #tpu.dimension_semantics<arbitrary>], iteration_bounds = array<i64: 2, 1>, scalar_prefetch = 0 : i64, scratch_operands = 0 : i64, tpu.core_type = #tpu.core_type<tc>, window_params = [{transform_indices = @transform_0, window_bounds = array<i64: 1, 16, 256>}, {transform_indices = @transform_1, window_bounds = array<i64: 1, 64, 256>}, {transform_indices = @transform_2, window_bounds = array<i64: 1, 64, 256>}, {transform_indices = @transform_3, window_bounds = array<i64: 1, 64, 1>}, {pipeline_mode = #tpu.pipeline_mode<synchronous>, transform_indices = @transform_4, window_bounds = array<i64: 16, 1>}, {pipeline_mode = #tpu.pipeline_mode<synchronous>, transform_indices = @transform_5, window_bounds = array<i64: 16, 1>}, {pipeline_mode = #tpu.pipeline_mode<synchronous>, transform_indices = @transform_6, window_bounds = array<i64: 64, 16>}, {pipeline_mode = #tpu.pipeline_mode<synchronous>, transform_indices = @transform_7, window_bounds = array<i64: 64, 1>}, {pipeline_mode = #tpu.pipeline_mode<synchronous>, transform_indices = @transform_8, window_bounds = array<i64: 16, 64>}, {pipeline_mode = #tpu.pipeline_mode<synchronous>, transform_indices = @transform_9, window_bounds = array<i64: 16, 1>}, {transform_indices = @transform_10, window_bounds = array<i64: 1, 16, 256>}, {transform_indices = @transform_11, window_bounds = array<i64: 1, 16, 128>}, {transform_indices = @transform_12, window_bounds = array<i64: 1, 16, 128>}, {transform_indices = @transform_13, window_bounds = array<i64: 1, 64, 128>}]} {
    %c0_i32 = arith.constant 0 : i32
    %0 = arith.cmpi eq, %arg1, %c0_i32 : i32
    %1 = arith.extui %0 : i1 to i32
    %c0_i32_0 = arith.constant 0 : i32
    %2 = arith.cmpi ne, %1, %c0_i32_0 : i32
    scf.if %2 {
      %cst_53 = arith.constant 0.000000e+00 : f32
      %72 = vector.broadcast %cst_53 : f32 to vector<1x16x128xf32>
      %c0_54 = arith.constant 0 : index
      %c0_55 = arith.constant 0 : index
      %c0_56 = arith.constant 0 : index
      %73 = vector.load %arg13[%c0_54, %c0_55, %c0_56] : memref<1x16x128xf32, #tpu.memory_space<vmem>>, vector<1x16x128xf32>
      tpu.vector_store %arg13[%c0_54, %c0_55, %c0_56], %72 {strides = array<i32>} : memref<1x16x128xf32, #tpu.memory_space<vmem>>, vector<1x16x128xf32>,
      %cst_57 = arith.constant 0.000000e+00 : f32
      %74 = vector.broadcast %cst_57 : f32 to vector<1x16x128xf32>
      %c0_58 = arith.constant 0 : index
      %c0_59 = arith.constant 0 : index
      %c0_60 = arith.constant 0 : index
      %75 = vector.load %arg14[%c0_58, %c0_59, %c0_60] : memref<1x16x128xf32, #tpu.memory_space<vmem>>, vector<1x16x128xf32>
      tpu.vector_store %arg14[%c0_58, %c0_59, %c0_60], %74 {strides = array<i32>} : memref<1x16x128xf32, #tpu.memory_space<vmem>>, vector<1x16x128xf32>,
      %cst_61 = arith.constant 0.000000e+00 : f32
      %76 = vector.broadcast %cst_61 : f32 to vector<1x64x128xf32>
      %c0_62 = arith.constant 0 : index
      %c0_63 = arith.constant 0 : index
      %c0_64 = arith.constant 0 : index
      %77 = vector.load %arg15[%c0_62, %c0_63, %c0_64] : memref<1x64x128xf32, #tpu.memory_space<vmem>>, vector<1x64x128xf32>
      tpu.vector_store %arg15[%c0_62, %c0_63, %c0_64], %76 {strides = array<i32>} : memref<1x64x128xf32, #tpu.memory_space<vmem>>, vector<1x64x128xf32>,
    } else {
    }
    %c0 = arith.constant 0 : index
    %c0_1 = arith.constant 0 : index
    %c0_2 = arith.constant 0 : index
    %3 = vector.load %arg2[%c0, %c0_1, %c0_2] : memref<1x16x256xbf16, #tpu.memory_space<vmem>>, vector<1x16x256xbf16>
    %4 = vector.shape_cast %3 : vector<1x16x256xbf16> to vector<16x256xbf16>
    %5 = arith.extf %4 : vector<16x256xbf16> to vector<16x256xf32>
    %c0_3 = arith.constant 0 : index
    %c0_4 = arith.constant 0 : index
    %6 = vector.load %arg6[%c0_3, %c0_4] : memref<16x1xf32, #tpu.memory_space<vmem>>, vector<16x1xf32>
    %7 = vector.broadcast %6 : vector<16x1xf32> to vector<16x256xf32>
    %8 = arith.mulf %5, %7 : vector<16x256xf32>
    %c0_5 = arith.constant 0 : index
    %c0_6 = arith.constant 0 : index
    %9 = vector.load %arg7[%c0_5, %c0_6] : memref<16x1xf32, #tpu.memory_space<vmem>>, vector<16x1xf32>
    %10 = vector.broadcast %9 : vector<16x1xf32> to vector<16x256xf32>
    %11 = arith.addf %8, %10 : vector<16x256xf32>
    %cst = arith.constant 0.000000e+00 : f32
    %12 = vector.broadcast %cst : f32 to vector<16x256xf32>
    %13 = arith.maximumf %11, %12 : vector<16x256xf32>
    %c0_7 = arith.constant 0 : index
    %c0_8 = arith.constant 0 : index
    %14 = vector.load %arg8[%c0_7, %c0_8] : memref<64x16xf32, #tpu.memory_space<vmem>>, vector<64x16xf32>
    %cst_9 = arith.constant dense<0.000000e+00> : vector<64x256xf32>
    %15 = tpu.matmul %14, %13, %cst_9 {dimension_numbers = #tpu.dot_dimension_numbers<[1], [0], [0], [1], [0, 0, 1, 1], [], []>} : vector<64x16xf32>, vector<16x256xf32>, vector<64x256xf32> -> vector<64x256xf32>
    %c0_10 = arith.constant 0 : index
    %c0_11 = arith.constant 0 : index
    %16 = vector.load %arg9[%c0_10, %c0_11] : memref<64x1xf32, #tpu.memory_space<vmem>>, vector<64x1xf32>
    %17 = vector.broadcast %16 : vector<64x1xf32> to vector<64x256xf32>
    %18 = arith.addf %15, %17 : vector<64x256xf32>
    %c0_12 = arith.constant 0 : index
    %c0_13 = arith.constant 0 : index
    %c0_14 = arith.constant 0 : index
    %19 = vector.load %arg5[%c0_12, %c0_13, %c0_14] : memref<1x64x1xf32, #tpu.memory_space<vmem>>, vector<1x64x1xf32>
    %20 = vector.shape_cast %19 : vector<1x64x1xf32> to vector<64x1xf32>
    %21 = vector.broadcast %20 : vector<64x1xf32> to vector<64x256xf32>
    %22 = arith.addf %18, %21 : vector<64x256xf32>
    %cst_15 = arith.constant 0.000000e+00 : f32
    %23 = vector.broadcast %cst_15 : f32 to vector<64x256xf32>
    %24 = arith.subf %23, %22 : vector<64x256xf32>
    %25 = math.exp %24 : vector<64x256xf32>
    %cst_16 = arith.constant 1.000000e+00 : f32
    %26 = vector.broadcast %cst_16 : f32 to vector<64x256xf32>
    %27 = arith.addf %26, %25 : vector<64x256xf32>
    %28 = tpu.reciprocal %27 {approx = true} : vector<64x256xf32> -> vector<64x256xf32>
    %c0_17 = arith.constant 0 : index
    %c0_18 = arith.constant 0 : index
    %c0_19 = arith.constant 0 : index
    %29 = vector.load %arg3[%c0_17, %c0_18, %c0_19] : memref<1x64x256xf32, #tpu.memory_space<vmem>>, vector<1x64x256xf32>
    %30 = vector.shape_cast %29 : vector<1x64x256xf32> to vector<64x256xf32>
    %31 = arith.mulf %30, %28 : vector<64x256xf32>
    %c0_20 = arith.constant 0 : index
    %c0_21 = arith.constant 0 : index
    %c0_22 = arith.constant 0 : index
    %32 = vector.load %arg4[%c0_20, %c0_21, %c0_22] : memref<1x64x256xf32, #tpu.memory_space<vmem>>, vector<1x64x256xf32>
    %33 = vector.shape_cast %32 : vector<1x64x256xf32> to vector<64x256xf32>
    %cst_23 = arith.constant 1.000000e+00 : f32
    %34 = vector.broadcast %cst_23 : f32 to vector<64x256xf32>
    %35 = arith.subf %34, %28 : vector<64x256xf32>
    %36 = arith.mulf %33, %35 : vector<64x256xf32>
    %37 = arith.addf %31, %36 : vector<64x256xf32>
    %c0_24 = arith.constant 0 : index
    %c0_25 = arith.constant 0 : index
    %38 = vector.load %arg10[%c0_24, %c0_25] : memref<16x64xf32, #tpu.memory_space<vmem>>, vector<16x64xf32>
    %cst_26 = arith.constant dense<0.000000e+00> : vector<16x256xf32>
    %39 = tpu.matmul %38, %37, %cst_26 {dimension_numbers = #tpu.dot_dimension_numbers<[1], [0], [0], [1], [0, 0, 1, 1], [], []>} : vector<16x64xf32>, vector<64x256xf32>, vector<16x256xf32> -> vector<16x256xf32>
    %c0_27 = arith.constant 0 : index
    %c0_28 = arith.constant 0 : index
    %40 = vector.load %arg11[%c0_27, %c0_28] : memref<16x1xf32, #tpu.memory_space<vmem>>, vector<16x1xf32>
    %41 = vector.broadcast %40 : vector<16x1xf32> to vector<16x256xf32>
    %42 = arith.addf %39, %41 : vector<16x256xf32>
    %43 = arith.truncf %42 : vector<16x256xf32> to vector<16x256xbf16>
    %c0_29 = arith.constant 0 : index
    %c0_30 = arith.constant 0 : index
    %c0_31 = arith.constant 0 : index
    %44 = vector.load %arg12[%c0_29, %c0_30, %c0_31] : memref<1x16x256xbf16, #tpu.memory_space<vmem>>, vector<1x16x256xbf16>
    %45 = vector.shape_cast %44 : vector<1x16x256xbf16> to vector<16x256xbf16>
    %46 = vector.shape_cast %43 : vector<16x256xbf16> to vector<1x16x256xbf16>
    tpu.vector_store %arg12[%c0_29, %c0_30, %c0_31], %46 {strides = array<i32>} : memref<1x16x256xbf16, #tpu.memory_space<vmem>>, vector<1x16x256xbf16>,
    %cst_32 = arith.constant dense<0.000000e+00> : vector<16xf32>
    %47 = vector.multi_reduction <add>, %42, %cst_32 [1] : vector<16x256xf32> to vector<16xf32>
    %48 = vector.shape_cast %47 : vector<16xf32> to vector<16x1xf32>
    %c0_33 = arith.constant 0 : index
    %c0_34 = arith.constant 0 : index
    %c0_35 = arith.constant 0 : index
    %49 = vector.load %arg13[%c0_33, %c0_34, %c0_35] : memref<1x16x128xf32, #tpu.memory_space<vmem>>, vector<1x16x128xf32>
    %50 = vector.shape_cast %48 : vector<16x1xf32> to vector<1x16x1xf32>
    %51 = vector.shape_cast %50 : vector<1x16x1xf32> to vector<1x16x1xf32>
    %52 = vector.broadcast %51 : vector<1x16x1xf32> to vector<1x16x128xf32>
    %53 = arith.addf %49, %52 : vector<1x16x128xf32>
    %c0_36 = arith.constant 0 : index
    %c0_37 = arith.constant 0 : index
    %c0_38 = arith.constant 0 : index
    %54 = vector.load %arg13[%c0_36, %c0_37, %c0_38] : memref<1x16x128xf32, #tpu.memory_space<vmem>>, vector<1x16x128xf32>
    tpu.vector_store %arg13[%c0_36, %c0_37, %c0_38], %53 {strides = array<i32>} : memref<1x16x128xf32, #tpu.memory_space<vmem>>, vector<1x16x128xf32>,
    %55 = arith.mulf %42, %42 : vector<16x256xf32>
    %cst_39 = arith.constant dense<0.000000e+00> : vector<16xf32>
    %56 = vector.multi_reduction <add>, %55, %cst_39 [1] : vector<16x256xf32> to vector<16xf32>
    %57 = vector.shape_cast %56 : vector<16xf32> to vector<16x1xf32>
    %c0_40 = arith.constant 0 : index
    %c0_41 = arith.constant 0 : index
    %c0_42 = arith.constant 0 : index
    %58 = vector.load %arg14[%c0_40, %c0_41, %c0_42] : memref<1x16x128xf32, #tpu.memory_space<vmem>>, vector<1x16x128xf32>
    %59 = vector.shape_cast %57 : vector<16x1xf32> to vector<1x16x1xf32>
    %60 = vector.shape_cast %59 : vector<1x16x1xf32> to vector<1x16x1xf32>
    %61 = vector.broadcast %60 : vector<1x16x1xf32> to vector<1x16x128xf32>
    %62 = arith.addf %58, %61 : vector<1x16x128xf32>
    %c0_43 = arith.constant 0 : index
    %c0_44 = arith.constant 0 : index
    %c0_45 = arith.constant 0 : index
    %63 = vector.load %arg14[%c0_43, %c0_44, %c0_45] : memref<1x16x128xf32, #tpu.memory_space<vmem>>, vector<1x16x128xf32>
    tpu.vector_store %arg14[%c0_43, %c0_44, %c0_45], %62 {strides = array<i32>} : memref<1x16x128xf32, #tpu.memory_space<vmem>>, vector<1x16x128xf32>,
    %cst_46 = arith.constant dense<0.000000e+00> : vector<64xf32>
    %64 = vector.multi_reduction <add>, %37, %cst_46 [1] : vector<64x256xf32> to vector<64xf32>
    %65 = vector.shape_cast %64 : vector<64xf32> to vector<64x1xf32>
    %c0_47 = arith.constant 0 : index
    %c0_48 = arith.constant 0 : index
    %c0_49 = arith.constant 0 : index
    %66 = vector.load %arg15[%c0_47, %c0_48, %c0_49] : memref<1x64x128xf32, #tpu.memory_space<vmem>>, vector<1x64x128xf32>
    %67 = vector.shape_cast %65 : vector<64x1xf32> to vector<1x64x1xf32>
    %68 = vector.shape_cast %67 : vector<1x64x1xf32> to vector<1x64x1xf32>
    %69 = vector.broadcast %68 : vector<1x64x1xf32> to vector<1x64x128xf32>
    %70 = arith.addf %66, %69 : vector<1x64x128xf32>
    %c0_50 = arith.constant 0 : index
    %c0_51 = arith.constant 0 : index
    %c0_52 = arith.constant 0 : index
    %71 = vector.load %arg15[%c0_50, %c0_51, %c0_52] : memref<1x64x128xf32, #tpu.memory_space<vmem>>, vector<1x64x128xf32>
    tpu.vector_store %arg15[%c0_50, %c0_51, %c0_52], %70 {strides = array<i32>} : memref<1x64x128xf32, #tpu.memory_space<vmem>>, vector<1x64x128xf32>,
    return
  }
  func.func @transform_0(%arg0: i32, %arg1: i32) -> (i32, i32, i32) {
    %c0_i32 = arith.constant 0 : i32
    %c0_i32_0 = arith.constant 0 : i32
    return %arg0, %c0_i32, %arg1 : i32, i32, i32
  }
  func.func @transform_1(%arg0: i32, %arg1: i32) -> (i32, i32, i32) {
    %c0_i32 = arith.constant 0 : i32
    %c0_i32_0 = arith.constant 0 : i32
    return %arg0, %c0_i32, %arg1 : i32, i32, i32
  }
  func.func @transform_2(%arg0: i32, %arg1: i32) -> (i32, i32, i32) {
    %c0_i32 = arith.constant 0 : i32
    %c0_i32_0 = arith.constant 0 : i32
    return %arg0, %c0_i32, %arg1 : i32, i32, i32
  }
  func.func @transform_3(%arg0: i32, %arg1: i32) -> (i32, i32, i32) {
    %c0_i32 = arith.constant 0 : i32
    %c0_i32_0 = arith.constant 0 : i32
    %c0_i32_1 = arith.constant 0 : i32
    return %arg0, %c0_i32, %c0_i32_0 : i32, i32, i32
  }
  func.func @transform_4(%arg0: i32, %arg1: i32) -> (i32, i32) {
    %c0_i32 = arith.constant 0 : i32
    %c0_i32_0 = arith.constant 0 : i32
    %c0_i32_1 = arith.constant 0 : i32
    return %c0_i32, %c0_i32_0 : i32, i32
  }
  func.func @transform_5(%arg0: i32, %arg1: i32) -> (i32, i32) {
    %c0_i32 = arith.constant 0 : i32
    %c0_i32_0 = arith.constant 0 : i32
    %c0_i32_1 = arith.constant 0 : i32
    return %c0_i32, %c0_i32_0 : i32, i32
  }
  func.func @transform_6(%arg0: i32, %arg1: i32) -> (i32, i32) {
    %c0_i32 = arith.constant 0 : i32
    %c0_i32_0 = arith.constant 0 : i32
    %c0_i32_1 = arith.constant 0 : i32
    return %c0_i32, %c0_i32_0 : i32, i32
  }
  func.func @transform_7(%arg0: i32, %arg1: i32) -> (i32, i32) {
    %c0_i32 = arith.constant 0 : i32
    %c0_i32_0 = arith.constant 0 : i32
    %c0_i32_1 = arith.constant 0 : i32
    return %c0_i32, %c0_i32_0 : i32, i32
  }
  func.func @transform_8(%arg0: i32, %arg1: i32) -> (i32, i32) {
    %c0_i32 = arith.constant 0 : i32
    %c0_i32_0 = arith.constant 0 : i32
    %c0_i32_1 = arith.constant 0 : i32
    return %c0_i32, %c0_i32_0 : i32, i32
  }
  func.func @transform_9(%arg0: i32, %arg1: i32) -> (i32, i32) {
    %c0_i32 = arith.constant 0 : i32
    %c0_i32_0 = arith.constant 0 : i32
    %c0_i32_1 = arith.constant 0 : i32
    return %c0_i32, %c0_i32_0 : i32, i32
  }
  func.func @transform_10(%arg0: i32, %arg1: i32) -> (i32, i32, i32) {
    %c0_i32 = arith.constant 0 : i32
    %c0_i32_0 = arith.constant 0 : i32
    return %arg0, %c0_i32, %arg1 : i32, i32, i32
  }
  func.func @transform_11(%arg0: i32, %arg1: i32) -> (i32, i32, i32) {
    %c0_i32 = arith.constant 0 : i32
    %c0_i32_0 = arith.constant 0 : i32
    %c0_i32_1 = arith.constant 0 : i32
    return %arg0, %c0_i32, %c0_i32_0 : i32, i32, i32
  }
  func.func @transform_12(%arg0: i32, %arg1: i32) -> (i32, i32, i32) {
    %c0_i32 = arith.constant 0 : i32
    %c0_i32_0 = arith.constant 0 : i32
    %c0_i32_1 = arith.constant 0 : i32
    return %arg0, %c0_i32, %c0_i32_0 : i32, i32, i32
  }
  func.func @transform_13(%arg0: i32, %arg1: i32) -> (i32, i32, i32) {
    %c0_i32 = arith.constant 0 : i32
    %c0_i32_0 = arith.constant 0 : i32
    %c0_i32_1 = arith.constant 0 : i32
    return %arg0, %c0_i32, %c0_i32_0 : i32, i32, i32
  }
}

module attributes {stable_mosaic.version = 11 : i64} {
  func.func @_fuse_out_kernel(%arg0: i32, %arg1: i32, %arg2: memref<1x16x256xbf16, #tpu.memory_space<vmem>>, %arg3: memref<1x64x256xf32, #tpu.memory_space<vmem>>, %arg4: memref<1x64x256xf32, #tpu.memory_space<vmem>>, %arg5: memref<1x64x1xf32, #tpu.memory_space<vmem>>, %arg6: memref<16x1xf32, #tpu.memory_space<vmem>>, %arg7: memref<16x1xf32, #tpu.memory_space<vmem>>, %arg8: memref<64x16xf32, #tpu.memory_space<vmem>>, %arg9: memref<64x1xf32, #tpu.memory_space<vmem>>, %arg10: memref<1x64x256xf32, #tpu.memory_space<vmem>>) attributes {dimension_semantics = [#tpu.dimension_semantics<parallel>, #tpu.dimension_semantics<parallel>], iteration_bounds = array<i64: 2, 1>, scalar_prefetch = 0 : i64, scratch_operands = 0 : i64, tpu.core_type = #tpu.core_type<tc>, window_params = [{transform_indices = @transform_0, window_bounds = array<i64: 1, 16, 256>}, {transform_indices = @transform_1, window_bounds = array<i64: 1, 64, 256>}, {transform_indices = @transform_2, window_bounds = array<i64: 1, 64, 256>}, {transform_indices = @transform_3, window_bounds = array<i64: 1, 64, 1>}, {pipeline_mode = #tpu.pipeline_mode<synchronous>, transform_indices = @transform_4, window_bounds = array<i64: 16, 1>}, {pipeline_mode = #tpu.pipeline_mode<synchronous>, transform_indices = @transform_5, window_bounds = array<i64: 16, 1>}, {pipeline_mode = #tpu.pipeline_mode<synchronous>, transform_indices = @transform_6, window_bounds = array<i64: 64, 16>}, {pipeline_mode = #tpu.pipeline_mode<synchronous>, transform_indices = @transform_7, window_bounds = array<i64: 64, 1>}, {transform_indices = @transform_8, window_bounds = array<i64: 1, 64, 256>}]} {
    %c0 = arith.constant 0 : index
    %c0_0 = arith.constant 0 : index
    %c0_1 = arith.constant 0 : index
    %0 = vector.load %arg2[%c0, %c0_0, %c0_1] : memref<1x16x256xbf16, #tpu.memory_space<vmem>>, vector<1x16x256xbf16>
    %1 = vector.shape_cast %0 : vector<1x16x256xbf16> to vector<16x256xbf16>
    %2 = arith.extf %1 : vector<16x256xbf16> to vector<16x256xf32>
    %c0_2 = arith.constant 0 : index
    %c0_3 = arith.constant 0 : index
    %3 = vector.load %arg6[%c0_2, %c0_3] : memref<16x1xf32, #tpu.memory_space<vmem>>, vector<16x1xf32>
    %4 = vector.broadcast %3 : vector<16x1xf32> to vector<16x256xf32>
    %5 = arith.mulf %2, %4 : vector<16x256xf32>
    %c0_4 = arith.constant 0 : index
    %c0_5 = arith.constant 0 : index
    %6 = vector.load %arg7[%c0_4, %c0_5] : memref<16x1xf32, #tpu.memory_space<vmem>>, vector<16x1xf32>
    %7 = vector.broadcast %6 : vector<16x1xf32> to vector<16x256xf32>
    %8 = arith.addf %5, %7 : vector<16x256xf32>
    %cst = arith.constant 0.000000e+00 : f32
    %9 = vector.broadcast %cst : f32 to vector<16x256xf32>
    %10 = arith.maximumf %8, %9 : vector<16x256xf32>
    %c0_6 = arith.constant 0 : index
    %c0_7 = arith.constant 0 : index
    %11 = vector.load %arg8[%c0_6, %c0_7] : memref<64x16xf32, #tpu.memory_space<vmem>>, vector<64x16xf32>
    %cst_8 = arith.constant dense<0.000000e+00> : vector<64x256xf32>
    %12 = tpu.matmul %11, %10, %cst_8 {dimension_numbers = #tpu.dot_dimension_numbers<[1], [0], [0], [1], [0, 0, 1, 1], [], []>} : vector<64x16xf32>, vector<16x256xf32>, vector<64x256xf32> -> vector<64x256xf32>
    %c0_9 = arith.constant 0 : index
    %c0_10 = arith.constant 0 : index
    %13 = vector.load %arg9[%c0_9, %c0_10] : memref<64x1xf32, #tpu.memory_space<vmem>>, vector<64x1xf32>
    %14 = vector.broadcast %13 : vector<64x1xf32> to vector<64x256xf32>
    %15 = arith.addf %12, %14 : vector<64x256xf32>
    %c0_11 = arith.constant 0 : index
    %c0_12 = arith.constant 0 : index
    %c0_13 = arith.constant 0 : index
    %16 = vector.load %arg5[%c0_11, %c0_12, %c0_13] : memref<1x64x1xf32, #tpu.memory_space<vmem>>, vector<1x64x1xf32>
    %17 = vector.shape_cast %16 : vector<1x64x1xf32> to vector<64x1xf32>
    %18 = vector.broadcast %17 : vector<64x1xf32> to vector<64x256xf32>
    %19 = arith.addf %15, %18 : vector<64x256xf32>
    %cst_14 = arith.constant 0.000000e+00 : f32
    %20 = vector.broadcast %cst_14 : f32 to vector<64x256xf32>
    %21 = arith.subf %20, %19 : vector<64x256xf32>
    %22 = math.exp %21 : vector<64x256xf32>
    %cst_15 = arith.constant 1.000000e+00 : f32
    %23 = vector.broadcast %cst_15 : f32 to vector<64x256xf32>
    %24 = arith.addf %23, %22 : vector<64x256xf32>
    %25 = tpu.reciprocal %24 {approx = true} : vector<64x256xf32> -> vector<64x256xf32>
    %c0_16 = arith.constant 0 : index
    %c0_17 = arith.constant 0 : index
    %c0_18 = arith.constant 0 : index
    %26 = vector.load %arg3[%c0_16, %c0_17, %c0_18] : memref<1x64x256xf32, #tpu.memory_space<vmem>>, vector<1x64x256xf32>
    %27 = vector.shape_cast %26 : vector<1x64x256xf32> to vector<64x256xf32>
    %28 = arith.mulf %27, %25 : vector<64x256xf32>
    %c0_19 = arith.constant 0 : index
    %c0_20 = arith.constant 0 : index
    %c0_21 = arith.constant 0 : index
    %29 = vector.load %arg4[%c0_19, %c0_20, %c0_21] : memref<1x64x256xf32, #tpu.memory_space<vmem>>, vector<1x64x256xf32>
    %30 = vector.shape_cast %29 : vector<1x64x256xf32> to vector<64x256xf32>
    %cst_22 = arith.constant 1.000000e+00 : f32
    %31 = vector.broadcast %cst_22 : f32 to vector<64x256xf32>
    %32 = arith.subf %31, %25 : vector<64x256xf32>
    %33 = arith.mulf %30, %32 : vector<64x256xf32>
    %34 = arith.addf %28, %33 : vector<64x256xf32>
    %c0_23 = arith.constant 0 : index
    %c0_24 = arith.constant 0 : index
    %c0_25 = arith.constant 0 : index
    %35 = vector.load %arg10[%c0_23, %c0_24, %c0_25] : memref<1x64x256xf32, #tpu.memory_space<vmem>>, vector<1x64x256xf32>
    %36 = vector.shape_cast %35 : vector<1x64x256xf32> to vector<64x256xf32>
    %37 = vector.shape_cast %34 : vector<64x256xf32> to vector<1x64x256xf32>
    tpu.vector_store %arg10[%c0_23, %c0_24, %c0_25], %37 {strides = array<i32>} : memref<1x64x256xf32, #tpu.memory_space<vmem>>, vector<1x64x256xf32>,
    return
  }
  func.func @transform_0(%arg0: i32, %arg1: i32) -> (i32, i32, i32) {
    %c0_i32 = arith.constant 0 : i32
    %c0_i32_0 = arith.constant 0 : i32
    return %arg0, %c0_i32, %arg1 : i32, i32, i32
  }
  func.func @transform_1(%arg0: i32, %arg1: i32) -> (i32, i32, i32) {
    %c0_i32 = arith.constant 0 : i32
    %c0_i32_0 = arith.constant 0 : i32
    return %arg0, %c0_i32, %arg1 : i32, i32, i32
  }
  func.func @transform_2(%arg0: i32, %arg1: i32) -> (i32, i32, i32) {
    %c0_i32 = arith.constant 0 : i32
    %c0_i32_0 = arith.constant 0 : i32
    return %arg0, %c0_i32, %arg1 : i32, i32, i32
  }
  func.func @transform_3(%arg0: i32, %arg1: i32) -> (i32, i32, i32) {
    %c0_i32 = arith.constant 0 : i32
    %c0_i32_0 = arith.constant 0 : i32
    %c0_i32_1 = arith.constant 0 : i32
    return %arg0, %c0_i32, %c0_i32_0 : i32, i32, i32
  }
  func.func @transform_4(%arg0: i32, %arg1: i32) -> (i32, i32) {
    %c0_i32 = arith.constant 0 : i32
    %c0_i32_0 = arith.constant 0 : i32
    %c0_i32_1 = arith.constant 0 : i32
    return %c0_i32, %c0_i32_0 : i32, i32
  }
  func.func @transform_5(%arg0: i32, %arg1: i32) -> (i32, i32) {
    %c0_i32 = arith.constant 0 : i32
    %c0_i32_0 = arith.constant 0 : i32
    %c0_i32_1 = arith.constant 0 : i32
    return %c0_i32, %c0_i32_0 : i32, i32
  }
  func.func @transform_6(%arg0: i32, %arg1: i32) -> (i32, i32) {
    %c0_i32 = arith.constant 0 : i32
    %c0_i32_0 = arith.constant 0 : i32
    %c0_i32_1 = arith.constant 0 : i32
    return %c0_i32, %c0_i32_0 : i32, i32
  }
  func.func @transform_7(%arg0: i32, %arg1: i32) -> (i32, i32) {
    %c0_i32 = arith.constant 0 : i32
    %c0_i32_0 = arith.constant 0 : i32
    %c0_i32_1 = arith.constant 0 : i32
    return %c0_i32, %c0_i32_0 : i32, i32
  }
  func.func @transform_8(%arg0: i32, %arg1: i32) -> (i32, i32, i32) {
    %c0_i32 = arith.constant 0 : i32
    %c0_i32_0 = arith.constant 0 : i32
    return %arg0, %c0_i32, %arg1 : i32, i32, i32
  }
}

</mosaic_0001>

<llo_original>
// kernel: iaff_forward.5
$region0: #{iaff_forward.5}
  #allocation0 [shape = 'u32[]', space=smem, size = 0x4, offset = 0x4, fixed_abs, tag = 'smem constant byte address 0x4 - core index']
  #allocation1 [shape = 'u32[144,128]{1,0:T(1,128)}', space=vmem, size = 0x12000, scoped, tag = 'internal scratch']
  %s0 = inlined_call_operand.vmem [shape: f32[2,64,256], index: 0, kind: input, shape index: {}]
  %s1 = inlined_call_operand.vmem [shape: f32[2,64,256], index: 1, kind: input, shape index: {}]
  %s2 = inlined_call_operand.vmem [shape: f32[16,64], index: 2, kind: input, shape index: {}]
  %s3 = inlined_call_operand.vmem [shape: f32[16,1], index: 3, kind: input, shape index: {}]
  %s4 = inlined_call_operand.vmem [shape: bf16[2,16,256], index: 4, kind: output, shape index: {0}]
  %s5 = inlined_call_operand.vmem [shape: f32[2,16,128], index: 5, kind: output, shape index: {1}]
  %s6 = inlined_call_operand.vmem [shape: f32[2,16,128], index: 6, kind: output, shape index: {2}]
  %s7 = inlined_call_operand.vmem [shape: f32[2,64,128], index: 7, kind: output, shape index: {3}]
  %8 = xla_tuple %s4, %s5, %s6, %s7
  %s9 = sld [smem:[#allocation0]]
  $region77: #{iaff_forward.5} parent=0
    _
  %s11 = ssub.s32 1, %s9
  %s12 = scalar_select 0, %s11, %s9
  loop: start=0, step=1, limit=4
  $region2: #{iaff_forward.5} parent=0 // loop_pre_header
    _
  $region3: #{iaff_forward.5} parent=0 // loop_header
    %s14 = sphi 0, %s18
    %p15 = scmp.ge.s32.totalorder %s14, 4
    %s21 = sphi 0, %s33
    %s22 = sphi 0, %s29
    %s23 = sphi 0, %s21
    %s24 = sphi 0, %s22
    %s25 = sphi 0, %s23
    %s26 = sphi 0, %s24
    %s38 = sphi 0, %s40
    %s41 = sphi 0, %s38
    %s42 = sphi 0, %s41
    %s58 = sphi 0, %s42
    %s66 = sphi 0, %s68
    %s69 = sphi 0, %s66
    %s70 = sphi 0, %s69
    %s86 = sphi 0, %s70
    %s90 = sphi 0, %s90
    %s92 = sphi 0, %s90
    %s93 = sphi 0, %s92
    %s107 = sphi 0, %s93
    %s111 = sphi 0, %s111
    %s113 = sphi 0, %s111
    %s114 = sphi 0, %s113
    %s128 = sphi 0, %s114
    %s136 = sphi 0, %s138
    %s139 = sphi 0, %s136
    %s140 = sphi 0, %s139
    %s156 = sphi 0, %s140
    %s162 = sphi 0, %s164
    %s165 = sphi 0, %s162
    %s166 = sphi 0, %s165
    %s182 = sphi 0, %s166
    %s188 = sphi 0, %s190
    %s191 = sphi 0, %s188
    %s192 = sphi 0, %s191
    %s208 = sphi 0, %s192
    %s214 = sphi 0, %s216
    %s217 = sphi 0, %s214
    %s218 = sphi 0, %s217
    %s234 = sphi 0, %s218
  $region4: #{iaff_forward.5} parent=0 // loop_header_branch
    %17 = sbr.rel (%p15) target = $region8
  $region5: #{iaff_forward.5} parent=0 // loop_body
    %s19 = ssub.s32 %s14, 1
    %s20 = ssub.s32 %s14, 2
    %s27 = sadd.s32 1, %s22
    %p28 = scmp.ge.s32.totalorder %s27, 1
    %s29 = scalar_select %p28, 0, %s27
    %s30 = sadd.s32 1, %s21
    %s31 = scalar_select %p28, %s30, %s21
    %p32 = scmp.ge.s32.totalorder %s31, 2
    %s33 = scalar_select %p32, 0, %s31
    %s34 = ssub.s32 %s21, %s33
    %s35 = ssub.s32 %s22, %s29
    %s36 = sor.u32 %s34, %s35
    %p37 = scmp.eq.s32.totalorder %s36, 0
    %s39 = sadd.s32 %s38, 1
    %s40 = scalar_select %p37, %s38, %s39
    %p43 = pneg %p37
    %p44 = scmp.eq.s32.totalorder %s14, 1
    %p45 = por %p43, %p44
    %p46 = scmp.ne.s32.totalorder %s38, %s41
    %p47 = scmp.eq.s32.totalorder %s14, 0
    %p48 = por %p46, %p47
    %p49 = scmp.ne.s32.totalorder %s38, %s41
    %p50 = scmp.eq.s32.totalorder %s19, 1
    %p51 = por %p49, %p50
    %p52 = scmp.ne.s32.totalorder %s41, %s42
    %p53 = scmp.eq.s32.totalorder %s19, 0
    %p54 = por %p52, %p53
    %p55 = scmp.ne.s32.totalorder %s41, %s42
    %p56 = scmp.eq.s32.totalorder %s20, 1
    %p57 = por %p55, %p56
    %p59 = scmp.ne.s32.totalorder %s42, %s58
    %p60 = scmp.eq.s32.totalorder %s20, 0
    %p61 = por %p59, %p60
    %s62 = ssub.s32 %s21, %s33
    %s63 = ssub.s32 %s22, %s29
    %s64 = sor.u32 %s62, %s63
    %p65 = scmp.eq.s32.totalorder %s64, 0
    %s67 = sadd.s32 %s66, 1
    %s68 = scalar_select %p65, %s66, %s67
    %p71 = pneg %p65
    %p72 = scmp.eq.s32.totalorder %s14, 1
    %p73 = por %p71, %p72
    %p74 = scmp.ne.s32.totalorder %s66, %s69
    %p75 = scmp.eq.s32.totalorder %s14, 0
    %p76 = por %p74, %p75
    %p77 = scmp.ne.s32.totalorder %s66, %s69
    %p78 = scmp.eq.s32.totalorder %s19, 1
    %p79 = por %p77, %p78
    %p80 = scmp.ne.s32.totalorder %s69, %s70
    %p81 = scmp.eq.s32.totalorder %s19, 0
    %p82 = por %p80, %p81
    %p83 = scmp.ne.s32.totalorder %s69, %s70
    %p84 = scmp.eq.s32.totalorder %s20, 1
    %p85 = por %p83, %p84
    %p87 = scmp.ne.s32.totalorder %s70, %s86
    %p88 = scmp.eq.s32.totalorder %s20, 0
    %p89 = por %p87, %p88
    %s91 = sadd.s32 %s90, 1
    %p94 = scmp.eq.s32.totalorder %s14, 1
    %p95 = scmp.ne.s32.totalorder %s90, %s92
    %p96 = scmp.eq.s32.totalorder %s14, 0
    %p97 = por %p95, %p96
    %p98 = scmp.ne.s32.totalorder %s90, %s92
    %p99 = scmp.eq.s32.totalorder %s19, 1
    %p100 = por %p98, %p99
    %p101 = scmp.ne.s32.totalorder %s92, %s93
    %p102 = scmp.eq.s32.totalorder %s19, 0
    %p103 = por %p101, %p102
    %p104 = scmp.ne.s32.totalorder %s92, %s93
    %p105 = scmp.eq.s32.totalorder %s20, 1
    %p106 = por %p104, %p105
    %p108 = scmp.ne.s32.totalorder %s93, %s107
    %p109 = scmp.eq.s32.totalorder %s20, 0
    %p110 = por %p108, %p109
    %s112 = sadd.s32 %s111, 1
    %p115 = scmp.eq.s32.totalorder %s14, 1
    %p116 = scmp.ne.s32.totalorder %s111, %s113
    %p117 = scmp.eq.s32.totalorder %s14, 0
    %p118 = por %p116, %p117
    %p119 = scmp.ne.s32.totalorder %s111, %s113
    %p120 = scmp.eq.s32.totalorder %s19, 1
    %p121 = por %p119, %p120
    %p122 = scmp.ne.s32.totalorder %s113, %s114
    %p123 = scmp.eq.s32.totalorder %s19, 0
    %p124 = por %p122, %p123
    %p125 = scmp.ne.s32.totalorder %s113, %s114
    %p126 = scmp.eq.s32.totalorder %s20, 1
    %p127 = por %p125, %p126
    %p129 = scmp.ne.s32.totalorder %s114, %s128
    %p130 = scmp.eq.s32.totalorder %s20, 0
    %p131 = por %p129, %p130
    %s132 = ssub.s32 %s21, %s33
    %s133 = ssub.s32 %s22, %s29
    %s134 = sor.u32 %s132, %s133
    %p135 = scmp.eq.s32.totalorder %s134, 0
    %s137 = sadd.s32 %s136, 1
    %s138 = scalar_select %p135, %s136, %s137
    %p141 = pneg %p135
    %p142 = scmp.eq.s32.totalorder %s14, 1
    %p143 = por %p141, %p142
    %p144 = scmp.ne.s32.totalorder %s136, %s139
    %p145 = scmp.eq.s32.totalorder %s14, 0
    %p146 = por %p144, %p145
    %p147 = scmp.ne.s32.totalorder %s136, %s139
    %p148 = scmp.eq.s32.totalorder %s19, 1
    %p149 = por %p147, %p148
    %p150 = scmp.ne.s32.totalorder %s139, %s140
    %p151 = scmp.eq.s32.totalorder %s19, 0
    %p152 = por %p150, %p151
    %p153 = scmp.ne.s32.totalorder %s139, %s140
    %p154 = scmp.eq.s32.totalorder %s20, 1
    %p155 = por %p153, %p154
    %p157 = scmp.ne.s32.totalorder %s140, %s156
    %p158 = scmp.eq.s32.totalorder %s20, 0
    %p159 = por %p157, %p158
    %s160 = ssub.s32 %s21, %s33
    %p161 = scmp.eq.s32.totalorder %s160, 0
    %s163 = sadd.s32 %s162, 1
    %s164 = scalar_select %p161, %s162, %s163
    %p167 = pneg %p161
    %p168 = scmp.eq.s32.totalorder %s14, 1
    %p169 = por %p167, %p168
    %p170 = scmp.ne.s32.totalorder %s162, %s165
    %p171 = scmp.eq.s32.totalorder %s14, 0
    %p172 = por %p170, %p171
    %p173 = scmp.ne.s32.totalorder %s162, %s165
    %p174 = scmp.eq.s32.totalorder %s19, 1
    %p175 = por %p173, %p174
    %p176 = scmp.ne.s32.totalorder %s165, %s166
    %p177 = scmp.eq.s32.totalorder %s19, 0
    %p178 = por %p176, %p177
    %p179 = scmp.ne.s32.totalorder %s165, %s166
    %p180 = scmp.eq.s32.totalorder %s20, 1
    %p181 = por %p179, %p180
    %p183 = scmp.ne.s32.totalorder %s166, %s182
    %p184 = scmp.eq.s32.totalorder %s20, 0
    %p185 = por %p183, %p184
    %s186 = ssub.s32 %s21, %s33
    %p187 = scmp.eq.s32.totalorder %s186, 0
    %s189 = sadd.s32 %s188, 1
    %s190 = scalar_select %p187, %s188, %s189
    %p193 = pneg %p187
    %p194 = scmp.eq.s32.totalorder %s14, 1
    %p195 = por %p193, %p194
    %p196 = scmp.ne.s32.totalorder %s188, %s191
    %p197 = scmp.eq.s32.totalorder %s14, 0
    %p198 = por %p196, %p197
    %p199 = scmp.ne.s32.totalorder %s188, %s191
    %p200 = scmp.eq.s32.totalorder %s19, 1
    %p201 = por %p199, %p200
    %p202 = scmp.ne.s32.totalorder %s191, %s192
    %p203 = scmp.eq.s32.totalorder %s19, 0
    %p204 = por %p202, %p203
    %p205 = scmp.ne.s32.totalorder %s191, %s192
    %p206 = scmp.eq.s32.totalorder %s20, 1
    %p207 = por %p205, %p206
    %p209 = scmp.ne.s32.totalorder %s192, %s208
    %p210 = scmp.eq.s32.totalorder %s20, 0
    %p211 = por %p209, %p210
    %s212 = ssub.s32 %s21, %s33
    %p213 = scmp.eq.s32.totalorder %s212, 0
    %s215 = sadd.s32 %s214, 1
    %s216 = scalar_select %p213, %s214, %s215
    %p219 = pneg %p213
    %p220 = scmp.eq.s32.totalorder %s14, 1
    %p221 = por %p219, %p220
    %p222 = scmp.ne.s32.totalorder %s214, %s217
    %p223 = scmp.eq.s32.totalorder %s14, 0
    %p224 = por %p222, %p223
    %p225 = scmp.ne.s32.totalorder %s214, %s217
    %p226 = scmp.eq.s32.totalorder %s19, 1
    %p227 = por %p225, %p226
    %p228 = scmp.ne.s32.totalorder %s217, %s218
    %p229 = scmp.eq.s32.totalorder %s19, 0
    %p230 = por %p228, %p229
    %p231 = scmp.ne.s32.totalorder %s217, %s218
    %p232 = scmp.eq.s32.totalorder %s20, 1
    %p233 = por %p231, %p232
    %p235 = scmp.ne.s32.totalorder %s218, %s234
    %p236 = scmp.eq.s32.totalorder %s20, 0
    %p237 = por %p235, %p236
    %p238 = scmp.le.s32.totalorder 1, %s14
    %p239 = scmp.lt.s32.totalorder %s14, 3
    %p240 = pnand %p238, %p239
    %p241 = pneg %p240
    // Predicated region
    $region9: #{iaff_forward.5} parent=5 // pred_check
      _
    $region10: #{iaff_forward.5} parent=5 // pred_check_branch
      %243 = sbr.rel (%p240) target = $region12
    $region11: #{iaff_forward.5} parent=5 // pred_region
      %s244 = ssub.s32 %s14, 1
      // Predicated region
      $region13: #{iaff_forward.5} parent=11 // pred_check
        %p245 = pneg %p103
      $region14: #{iaff_forward.5} parent=11 // pred_check_branch
        %247 = sbr.rel (%p245) target = $region16
      $region15: #{iaff_forward.5} parent=11 // pred_region
        _
      $region16: #{iaff_forward.5} parent=11 // pred_fallthru
        _
      // Predicated region
      $region17: #{iaff_forward.5} parent=11 // pred_check
        %p248 = pneg %p124
      $region18: #{iaff_forward.5} parent=11 // pred_check_branch
        %250 = sbr.rel (%p248) target = $region20
      $region19: #{iaff_forward.5} parent=11 // pred_region
        _
      $region20: #{iaff_forward.5} parent=11 // pred_fallthru
        _
    $region12: #{iaff_forward.5} parent=5 // pred_fallthru
      _
    %p251 = scmp.lt.s32.totalorder %s14, 2
    // Predicated region
    $region21: #{iaff_forward.5} parent=5 // pred_check
      %p252 = pneg %p251
    $region22: #{iaff_forward.5} parent=5 // pred_check_branch
      %254 = sbr.rel (%p252) target = $region24
    $region23: #{iaff_forward.5} parent=5 // pred_region
      // Predicated region
      $region25: #{iaff_forward.5} parent=23 // pred_check
        %p255 = pneg %p48
      $region26: #{iaff_forward.5} parent=23 // pred_check_branch
        %257 = sbr.rel (%p255) target = $region28
      $region27: #{iaff_forward.5} parent=23 // pred_region
        %s258 = smul.u32 2, %s22
        %p259 = scmp.lt.s32.totalorder %s21, 1
        %s260 = scalar_select %p259, %s21, 1
        %p261 = scmp.lt.s32.totalorder %s258, 1
        %s262 = scalar_select %p261, %s258, 1
        %s263 = smul.addr %s260, 16
        %s264 = sadd.s32 %s262, %s263
        %s265 = smul.addr %s264, 8
        %s266 = scalar_lea.vmem %s0, %s265
        %s267 = smul.u32 2, %s22
      $region28: #{iaff_forward.5} parent=23 // pred_fallthru
        _
      // Predicated region
      $region29: #{iaff_forward.5} parent=23 // pred_check
        %p268 = pneg %p76
      $region30: #{iaff_forward.5} parent=23 // pred_check_branch
        %270 = sbr.rel (%p268) target = $region32
      $region31: #{iaff_forward.5} parent=23 // pred_region
        %s271 = smul.u32 2, %s22
        %p272 = scmp.lt.s32.totalorder %s21, 1
        %s273 = scalar_select %p272, %s21, 1
        %p274 = scmp.lt.s32.totalorder %s271, 1
        %s275 = scalar_select %p274, %s271, 1
        %s276 = smul.addr %s273, 16
        %s277 = sadd.s32 %s275, %s276
        %s278 = smul.addr %s277, 8
        %s279 = scalar_lea.vmem %s1, %s278
        %s280 = smul.u32 2, %s22
      $region32: #{iaff_forward.5} parent=23 // pred_fallthru
        _
    $region24: #{iaff_forward.5} parent=5 // pred_fallthru
      _
    %p281 = scmp.le.s32.totalorder 1, %s14
    %p282 = scmp.lt.s32.totalorder %s14, 3
    %p283 = pnand %p281, %p282
    %p284 = pneg %p283
    // Predicated region
    $region33: #{iaff_forward.5} parent=5 // pred_check
      _
    $region34: #{iaff_forward.5} parent=5 // pred_check_branch
      %286 = sbr.rel (%p283) target = $region36
    $region35: #{iaff_forward.5} parent=5 // pred_region
      %s287 = ssub.s32 %s14, 1
      %s288 = smul.u32 2, %s24
      %p289 = scmp.lt.s32.totalorder %s23, 1
      %s290 = scalar_select %p289, %s23, 1
      %p291 = scmp.lt.s32.totalorder %s288, 1
      %s292 = scalar_select %p291, %s288, 1
      %s293 = smul.addr %s290, 16
      %s294 = sadd.s32 %s292, %s293
      %s295 = smul.addr %s294, 8
      %s296 = scalar_lea.vmem %s0, %s295
      %p297 = pneg %p54
      %p298 = pneg %p51
      %s299 = smul.u32 2, %s24
      %p300 = scmp.lt.s32.totalorder %s23, 1
      %s301 = scalar_select %p300, %s23, 1
      %p302 = scmp.lt.s32.totalorder %s299, 1
      %s303 = scalar_select %p302, %s299, 1
      %s304 = smul.addr %s301, 16
      %s305 = sadd.s32 %s303, %s304
      %s306 = smul.addr %s305, 8
      %s307 = scalar_lea.vmem %s1, %s306
      %p308 = pneg %p82
      %p309 = pneg %p79
      %p310 = pneg %p103
      %p311 = pneg %p100
      %p312 = pneg %p124
      %p313 = pneg %p121
      %p314 = pneg %p152
      %p315 = pneg %p149
      %s316 = smul.u32 2, %s24
      %p317 = scmp.lt.s32.totalorder %s23, 1
      %s318 = scalar_select %p317, %s23, 1
      %p319 = scmp.lt.s32.totalorder %s316, 1
      %s320 = scalar_select %p319, %s316, 1
      %s321 = smul.addr %s318, 4
      %s322 = sadd.s32 %s320, %s321
      %s323 = smul.addr %s322, 4
      %s324 = scalar_lea.vmem %s4, %s323
      %p325 = pneg %p178
      %p326 = pneg %p175
      %p327 = scmp.lt.s32.totalorder %s23, 1
      %s328 = scalar_select %p327, %s23, 1
      %s329 = smul.addr %s328, 2
      %s330 = smul.addr %s329, 8
      %s331 = scalar_lea.vmem %s5, %s330
      %p332 = pneg %p204
      %p333 = pneg %p201
      %p334 = scmp.lt.s32.totalorder %s23, 1
      %s335 = scalar_select %p334, %s23, 1
      %s336 = smul.addr %s335, 2
      %s337 = smul.addr %s336, 8
      %s338 = scalar_lea.vmem %s6, %s337
      %p339 = pneg %p230
      %p340 = pneg %p227
      %p341 = scmp.lt.s32.totalorder %s23, 1
      %s342 = scalar_select %p341, %s23, 1
      %s343 = smul.addr %s342, 8
      %s344 = smul.addr %s343, 8
      %s345 = scalar_lea.vmem %s7, %s344
      %s346 = smul.u32 2, %s24
      %p347 = scmp.lt.s32.totalorder %s23, 1
      %s348 = scalar_select %p347, %s23, 1
      %p349 = scmp.lt.s32.totalorder %s346, 1
      %s350 = scalar_select %p349, %s346, 1
      %s351 = smul.addr %s348, 16
      %s352 = sadd.s32 %s350, %s351
      %s353 = smul.addr %s352, 8
      %s354 = scalar_lea.vmem %s0, %s353
      %s355 = smul.u32 2, %s24
      %s356 = smul.u32 2, %s24
      %p357 = scmp.lt.s32.totalorder %s23, 1
      %s358 = scalar_select %p357, %s23, 1
      %p359 = scmp.lt.s32.totalorder %s356, 1
      %s360 = scalar_select %p359, %s356, 1
      %s361 = smul.addr %s358, 16
      %s362 = sadd.s32 %s360, %s361
      %s363 = smul.addr %s362, 8
      %s364 = scalar_lea.vmem %s1, %s363
      %s365 = smul.u32 2, %s24
      %s366 = smul.u32 2, %s24
      %p367 = scmp.lt.s32.totalorder %s23, 1
      %s368 = scalar_select %p367, %s23, 1
      %p369 = scmp.lt.s32.totalorder %s366, 1
      %s370 = scalar_select %p369, %s366, 1
      %s371 = smul.addr %s368, 4
      %s372 = sadd.s32 %s370, %s371
      %s373 = smul.addr %s372, 4
      %s374 = scalar_lea.vmem %s4, %s373
      %s375 = smul.u32 2, %s24
      %p376 = scmp.lt.s32.totalorder %s23, 1
      %s377 = scalar_select %p376, %s23, 1
      %s378 = smul.addr %s377, 2
      %s379 = smul.addr %s378, 8
      %s380 = scalar_lea.vmem %s5, %s379
      %p381 = scmp.lt.s32.totalorder %s23, 1
      %s382 = scalar_select %p381, %s23, 1
      %s383 = smul.addr %s382, 2
      %s384 = smul.addr %s383, 8
      %s385 = scalar_lea.vmem %s6, %s384
      %p386 = scmp.lt.s32.totalorder %s23, 1
      %s387 = scalar_select %p386, %s23, 1
      %s388 = smul.addr %s387, 8
      %s389 = smul.addr %s388, 8
      %s390 = scalar_lea.vmem %s7, %s389
      %p391 = scmp.eq.s32.totalorder %s24, 0
      // Predicated region
      $region37: #{iaff_forward.5} parent=35 // pred_check
        %p392 = pneg %p391
      $region38: #{iaff_forward.5} parent=35 // pred_check_branch
        %394 = sbr.rel (%p392) target = $region40
      $region39: #{iaff_forward.5} parent=35 // pred_region
        %395 = vst [vmem:[%s380] sm:$0xff] 0.0
        %396 = vst [vmem:[%s380 + $0x8] sm:$0xff] 0.0
        %397 = vst [vmem:[%s385] sm:$0xff] 0.0
        %398 = vst [vmem:[%s385 + $0x8] sm:$0xff] 0.0
        %399 = vst [vmem:[%s390] sm:$0xff] 0.0
        %400 = vst [vmem:[%s390 + $0x8] sm:$0xff] 0.0
        %401 = vst [vmem:[%s390 + $0x10] sm:$0xff] 0.0
        %402 = vst [vmem:[%s390 + $0x18] sm:$0xff] 0.0
        %403 = vst [vmem:[%s390 + $0x20] sm:$0xff] 0.0
        %404 = vst [vmem:[%s390 + $0x28] sm:$0xff] 0.0
        %405 = vst [vmem:[%s390 + $0x30] sm:$0xff] 0.0
        %406 = vst [vmem:[%s390 + $0x38] sm:$0xff] 0.0
      $region40: #{iaff_forward.5} parent=35 // pred_fallthru
        _
      %v407 = vld [vmem:[%s354] sm:$0xff]
      %v408 = vld [vmem:[%s354 + $0x8] sm:$0xff]
      %v409 = vld [vmem:[%s354 + $0x10] sm:$0xff]
      %v410 = vld [vmem:[%s354 + $0x18] sm:$0xff]
      %v411 = vld [vmem:[%s354 + $0x20] sm:$0xff]
      %v412 = vld [vmem:[%s354 + $0x28] sm:$0xff]
      %v413 = vld [vmem:[%s354 + $0x30] sm:$0xff]
      %v414 = vld [vmem:[%s354 + $0x38] sm:$0xff]
      %v415 = vld [vmem:[%s354 + $0x40] sm:$0xff]
      %v416 = vld [vmem:[%s354 + $0x48] sm:$0xff]
      %v417 = vld [vmem:[%s354 + $0x50] sm:$0xff]
      %v418 = vld [vmem:[%s354 + $0x58] sm:$0xff]
      %v419 = vld [vmem:[%s354 + $0x60] sm:$0xff]
      %v420 = vld [vmem:[%s354 + $0x68] sm:$0xff]
      %v421 = vld [vmem:[%s354 + $0x70] sm:$0xff]
      %v422 = vld [vmem:[%s354 + $0x78] sm:$0xff]
      %v423 = vld [vmem:[%s364] sm:$0xff]
      %v424 = vld [vmem:[%s364 + $0x8] sm:$0xff]
      %v425 = vld [vmem:[%s364 + $0x10] sm:$0xff]
      %v426 = vld [vmem:[%s364 + $0x18] sm:$0xff]
      %v427 = vld [vmem:[%s364 + $0x20] sm:$0xff]
      %v428 = vld [vmem:[%s364 + $0x28] sm:$0xff]
      %v429 = vld [vmem:[%s364 + $0x30] sm:$0xff]
      %v430 = vld [vmem:[%s364 + $0x38] sm:$0xff]
      %v431 = vld [vmem:[%s364 + $0x40] sm:$0xff]
      %v432 = vld [vmem:[%s364 + $0x48] sm:$0xff]
      %v433 = vld [vmem:[%s364 + $0x50] sm:$0xff]
      %v434 = vld [vmem:[%s364 + $0x58] sm:$0xff]
      %v435 = vld [vmem:[%s364 + $0x60] sm:$0xff]
      %v436 = vld [vmem:[%s364 + $0x68] sm:$0xff]
      %v437 = vld [vmem:[%s364 + $0x70] sm:$0xff]
      %v438 = vld [vmem:[%s364 + $0x78] sm:$0xff]
      %v439 = vadd.f32 %v407, %v423
      %v440 = vadd.f32 %v408, %v424
      %v441 = vadd.f32 %v409, %v425
      %v442 = vadd.f32 %v410, %v426
      %v443 = vadd.f32 %v411, %v427
      %v444 = vadd.f32 %v412, %v428
      %v445 = vadd.f32 %v413, %v429
      %v446 = vadd.f32 %v414, %v430
      %v447 = vadd.f32 %v415, %v431
      %v448 = vadd.f32 %v416, %v432
      %v449 = vadd.f32 %v417, %v433
      %v450 = vadd.f32 %v418, %v434
      %v451 = vadd.f32 %v419, %v435
      %v452 = vadd.f32 %v420, %v436
      %v453 = vadd.f32 %v421, %v437
      %v454 = vadd.f32 %v422, %v438
      %v455 = vld [vmem:[%s2] sm:$0xff]
      %v456 = vld [vmem:[%s2 + $0x8] sm:$0xff]
      %v457 = vld [vmem:[%s3] sm:$0xff]
      %v458 = vld [vmem:[%s3 + $0x8] sm:$0xff]
      %460 = vset.pattern.permute.xlu0 0
      %461 = vperm.xlu0 %460, %v457
      %v462 = vpop.permute.xlu0 %461
      %465 = vset.pattern.permute.xlu0 0
      %466 = vperm.xlu0 %465, %v458
      %v467 = vpop.permute.xlu0 %466
      %vm469 = vcmask 523264
      %v471 = vsel %vm469, %v455, 0
      %v474 = vsel %vm469, %v456, 0
      %476 = vmatprep.subr.mxu0 0.0
      %477 = vmatpush1.msra.mxu0 0.0
      %478 = vmatprep.subr.mxu0 0.0
      %479 = vmatpush1.msra.mxu0 0.0
      %480 = vmatprep.subr.mxu0 0.0
      %481 = vmatpush1.msra.mxu0 0.0
      %482 = vmatprep.subr.mxu0 0.0
      %483 = vmatpush1.msra.mxu0 0.0
      %484 = vmatprep.subr.mxu0 0.0
      %485 = vmatpush1.msra.mxu0 0.0
      %486 = vmatprep.subr.mxu0 0.0
      %487 = vmatpush1.msra.mxu0 0.0
      %488 = vmatprep.subr.mxu0 0.0
      %489 = vmatpush1.msra.mxu0 0.0
      %490 = vmatprep.subr.mxu0 0.0
      %491 = vmatpush1.msra.mxu0 0.0
      %492 = vmatprep.subr.mxu0 %v454
      %493 = vmatpush1.msra.mxu0 %v453
      %494 = vmatprep.subr.mxu0 %v452
      %495 = vmatpush1.msra.mxu0 %v451
      %496 = vmatprep.subr.mxu0 %v450
      %497 = vmatpush1.msra.mxu0 %v449
      %498 = vmatprep.subr.mxu0 %v448
      %499 = vmatpush1.msra.mxu0 %v447
      %500 = vmatprep.subr.mxu0 %v446
      %501 = vmatpush1.msra.mxu0 %v445
      %502 = vmatprep.subr.mxu0 %v444
      %503 = vmatpush1.msra.mxu0 %v443
      %504 = vmatprep.subr.mxu0 %v442
      %505 = vmatpush1.msra.mxu0 %v441
      %506 = vmatprep.subr.mxu0 %v440
      %507 = vmatpush1.msra.mxu0 %v439
      %508 = vmatprep.subr.mxu0 0.0
      %509 = vmatpush2.msra.mxu0 0.0
      %510 = vmatprep.subr.mxu0 0.0
      %511 = vmatpush2.msra.mxu0 0.0
      %512 = vmatprep.subr.mxu0 0.0
      %513 = vmatpush2.msra.mxu0 0.0
      %514 = vmatprep.subr.mxu0 0.0
      %515 = vmatpush2.msra.mxu0 0.0
      %516 = vmatprep.subr.mxu0 0.0
      %517 = vmatpush2.msra.mxu0 0.0
      %518 = vmatprep.subr.mxu0 0.0
      %519 = vmatpush2.msra.mxu0 0.0
      %520 = vmatprep.subr.mxu0 0.0
      %521 = vmatpush2.msra.mxu0 0.0
      %522 = vmatprep.subr.mxu0 0.0
      %523 = vmatpush2.msra.mxu0 0.0
      %524 = vmatprep.subr.mxu0 0.0
      %525 = vmatpush2.msra.mxu0 0.0
      %526 = vmatprep.subr.mxu0 0.0
      %527 = vmatpush2.msra.mxu0 0.0
      %528 = vmatprep.subr.mxu0 0.0
      %529 = vmatpush2.msra.mxu0 0.0
      %530 = vmatprep.subr.mxu0 0.0
      %531 = vmatpush2.msra.mxu0 0.0
      %532 = vmatprep.subr.mxu0 0.0
      %533 = vmatpush2.msra.mxu0 0.0
      %534 = vmatprep.subr.mxu0 0.0
      %535 = vmatpush2.msra.mxu0 0.0
      %536 = vmatprep.subr.mxu0 0.0
      %537 = vmatpush2.msra.mxu0 0.0
      %538 = vmatprep.subr.mxu0 0.0
      %539 = vmatpush2.msra.mxu0 0.0
      %540 = vmatprep.mubr.f32.mxu0 0.0
      %541 = vmatmul.mubr.f32.gmra.mxu0 %v471
      %v542 = vpop.f32.mrf.mxu0
      %v543 = vadd.f32 %v462, %v542
      %v544 = vpop.f32.mrf.mxu0
      %v545 = vadd.f32 %v462, %v544
      %546 = vmatprep.mubr.f32.mxu0 0.0
      %547 = vmatmul.mubr.f32.gmra.mxu0 %v474
      %v548 = vpop.f32.mrf.mxu0
      %v549 = vadd.f32 %v467, %v548
      %v550 = vpop.f32.mrf.mxu0
      %v551 = vadd.f32 %v467, %v550
      %552 = vdwg.mxu0
      %v553 = vpack.c.bf16 %v549, %v543
      %v554 = vpack.c.bf16 %v551, %v545
      %v557 = vunpack.c.l.b16 %v553
      %v558 = vunpack.c.l.b16 %v554
      %v559 = vunpack.c.h.b16 %v553
      %v560 = vunpack.c.h.b16 %v554
      %v561 = vpack.c.b16 %v558, %v557
      %v562 = vpack.c.b16 %v560, %v559
      %565 = vst [vmem:[%s374] sm:$0xff] %v561
      %566 = vst [vmem:[%s374 + $0x8] sm:$0xff] %v562
      %v567 = vadd.f32 %v543, %v545
      %568 = vadd.xlane.f32.xlu0 %v567
      %v569 = vpop.xlane.xlu0 %568
      %v570 = vadd.f32 %v549, %v551
      %571 = vadd.xlane.f32.xlu0 %v570
      %v572 = vpop.xlane.xlu0 %571
      %v573 = vld [vmem:[%s380] sm:$0xff]
      %v574 = vld [vmem:[%s380 + $0x8] sm:$0xff]
      %v575 = vadd.f32 %v573, %v569
      %v576 = vadd.f32 %v574, %v572
      %577 = vst [vmem:[%s380] sm:$0xff] %v575
      %578 = vst [vmem:[%s380 + $0x8] sm:$0xff] %v576
      %v579 = vmul.f32 %v543, %v543
      %v580 = vmul.f32 %v545, %v545
      %v581 = vmul.f32 %v549, %v549
      %v582 = vmul.f32 %v551, %v551
      %v583 = vadd.f32 %v579, %v580
      %584 = vadd.xlane.f32.xlu0 %v583
      %v585 = vpop.xlane.xlu0 %584
      %v586 = vadd.f32 %v581, %v582
      %587 = vadd.xlane.f32.xlu0 %v586
      %v588 = vpop.xlane.xlu0 %587
      %v589 = vld [vmem:[%s385] sm:$0xff]
      %v590 = vld [vmem:[%s385 + $0x8] sm:$0xff]
      %v591 = vadd.f32 %v589, %v585
      %v592 = vadd.f32 %v590, %v588
      %593 = vst [vmem:[%s385] sm:$0xff] %v591
      %594 = vst [vmem:[%s385 + $0x8] sm:$0xff] %v592
      %v595 = vadd.f32 %v439, %v440
      %596 = vadd.xlane.f32.xlu0 %v595
      %v597 = vpop.xlane.xlu0 %596
      %v598 = vadd.f32 %v441, %v442
      %599 = vadd.xlane.f32.xlu0 %v598
      %v600 = vpop.xlane.xlu0 %599
      %v601 = vadd.f32 %v443, %v444
      %602 = vadd.xlane.f32.xlu0 %v601
      %v603 = vpop.xlane.xlu0 %602
      %v604 = vadd.f32 %v445, %v446
      %605 = vadd.xlane.f32.xlu0 %v604
      %v606 = vpop.xlane.xlu0 %605
      %v607 = vadd.f32 %v447, %v448
      %608 = vadd.xlane.f32.xlu0 %v607
      %v609 = vpop.xlane.xlu0 %608
      %v610 = vadd.f32 %v449, %v450
      %611 = vadd.xlane.f32.xlu0 %v610
      %v612 = vpop.xlane.xlu0 %611
      %v613 = vadd.f32 %v451, %v452
      %614 = vadd.xlane.f32.xlu0 %v613
      %v615 = vpop.xlane.xlu0 %614
      %v616 = vadd.f32 %v453, %v454
      %617 = vadd.xlane.f32.xlu0 %v616
      %v618 = vpop.xlane.xlu0 %617
      %v619 = vld [vmem:[%s390] sm:$0xff]
      %v620 = vld [vmem:[%s390 + $0x8] sm:$0xff]
      %v621 = vld [vmem:[%s390 + $0x10] sm:$0xff]
      %v622 = vld [vmem:[%s390 + $0x18] sm:$0xff]
      %v623 = vld [vmem:[%s390 + $0x20] sm:$0xff]
      %v624 = vld [vmem:[%s390 + $0x28] sm:$0xff]
      %v625 = vld [vmem:[%s390 + $0x30] sm:$0xff]
      %v626 = vld [vmem:[%s390 + $0x38] sm:$0xff]
      %v627 = vadd.f32 %v619, %v597
      %v628 = vadd.f32 %v620, %v600
      %v629 = vadd.f32 %v621, %v603
      %v630 = vadd.f32 %v622, %v606
      %v631 = vadd.f32 %v623, %v609
      %v632 = vadd.f32 %v624, %v612
      %v633 = vadd.f32 %v625, %v615
      %v634 = vadd.f32 %v626, %v618
      %635 = vst [vmem:[%s390] sm:$0xff] %v627
      %636 = vst [vmem:[%s390 + $0x8] sm:$0xff] %v628
      %637 = vst [vmem:[%s390 + $0x10] sm:$0xff] %v629
      %638 = vst [vmem:[%s390 + $0x18] sm:$0xff] %v630
      %639 = vst [vmem:[%s390 + $0x20] sm:$0xff] %v631
      %640 = vst [vmem:[%s390 + $0x28] sm:$0xff] %v632
      %641 = vst [vmem:[%s390 + $0x30] sm:$0xff] %v633
      %642 = vst [vmem:[%s390 + $0x38] sm:$0xff] %v634
      %s643 = smul.u32 2, %s24
      %p644 = scmp.lt.s32.totalorder %s23, 1
      %s645 = scalar_select %p644, %s23, 1
      %p646 = scmp.lt.s32.totalorder %s643, 1
      %s647 = scalar_select %p646, %s643, 1
      %s648 = smul.addr %s645, 4
      %s649 = sadd.s32 %s647, %s648
      %s650 = smul.addr %s649, 4
      %s651 = scalar_lea.vmem %s4, %s650
      %p652 = scmp.lt.s32.totalorder %s23, 1
      %s653 = scalar_select %p652, %s23, 1
      %s654 = smul.addr %s653, 2
      %s655 = smul.addr %s654, 8
      %s656 = scalar_lea.vmem %s5, %s655
      %p657 = scmp.lt.s32.totalorder %s23, 1
      %s658 = scalar_select %p657, %s23, 1
      %s659 = smul.addr %s658, 2
      %s660 = smul.addr %s659, 8
      %s661 = scalar_lea.vmem %s6, %s660
      %p662 = scmp.lt.s32.totalorder %s23, 1
      %s663 = scalar_select %p662, %s23, 1
      %s664 = smul.addr %s663, 8
      %s665 = smul.addr %s664, 8
      %s666 = scalar_lea.vmem %s7, %s665
      // Predicated region
      $region41: #{iaff_forward.5} parent=35 // pred_check
        %p667 = pneg %p149
      $region42: #{iaff_forward.5} parent=35 // pred_check_branch
        %669 = sbr.rel (%p667) target = $region44
      $region43: #{iaff_forward.5} parent=35 // pred_region
        %s670 = smul.u32 2, %s24
      $region44: #{iaff_forward.5} parent=35 // pred_fallthru
        _
      // Predicated region
      $region45: #{iaff_forward.5} parent=35 // pred_check
        %p671 = pneg %p175
      $region46: #{iaff_forward.5} parent=35 // pred_check_branch
        %673 = sbr.rel (%p671) target = $region48
      $region47: #{iaff_forward.5} parent=35 // pred_region
        _
      $region48: #{iaff_forward.5} parent=35 // pred_fallthru
        _
      // Predicated region
      $region49: #{iaff_forward.5} parent=35 // pred_check
        %p674 = pneg %p201
      $region50: #{iaff_forward.5} parent=35 // pred_check_branch
        %676 = sbr.rel (%p674) target = $region52
      $region51: #{iaff_forward.5} parent=35 // pred_region
        _
      $region52: #{iaff_forward.5} parent=35 // pred_fallthru
        _
      // Predicated region
      $region53: #{iaff_forward.5} parent=35 // pred_check
        %p677 = pneg %p227
      $region54: #{iaff_forward.5} parent=35 // pred_check_branch
        %679 = sbr.rel (%p677) target = $region56
      $region55: #{iaff_forward.5} parent=35 // pred_region
        _
      $region56: #{iaff_forward.5} parent=35 // pred_fallthru
        _
    $region36: #{iaff_forward.5} parent=5 // pred_fallthru
      _
    %p680 = scmp.le.s32.totalorder 2, %s14
    // Predicated region
    $region57: #{iaff_forward.5} parent=5 // pred_check
      %p681 = pneg %p680
    $region58: #{iaff_forward.5} parent=5 // pred_check_branch
      %683 = sbr.rel (%p681) target = $region60
    $region59: #{iaff_forward.5} parent=5 // pred_region
      %s684 = ssub.s32 %s14, 2
      // Predicated region
      $region61: #{iaff_forward.5} parent=59 // pred_check
        %p685 = pneg %p155
      $region62: #{iaff_forward.5} parent=59 // pred_check_branch
        %687 = sbr.rel (%p685) target = $region64
      $region63: #{iaff_forward.5} parent=59 // pred_region
        %s688 = smul.u32 2, %s26
        %p689 = scmp.lt.s32.totalorder %s25, 1
        %s690 = scalar_select %p689, %s25, 1
        %p691 = scmp.lt.s32.totalorder %s688, 1
        %s692 = scalar_select %p691, %s688, 1
        %s693 = smul.addr %s690, 4
        %s694 = sadd.s32 %s692, %s693
        %s695 = smul.addr %s694, 4
        %s696 = scalar_lea.vmem %s4, %s695
      $region64: #{iaff_forward.5} parent=59 // pred_fallthru
        _
      // Predicated region
      $region65: #{iaff_forward.5} parent=59 // pred_check
        %p697 = pneg %p181
      $region66: #{iaff_forward.5} parent=59 // pred_check_branch
        %699 = sbr.rel (%p697) target = $region68
      $region67: #{iaff_forward.5} parent=59 // pred_region
        %p700 = scmp.lt.s32.totalorder %s25, 1
        %s701 = scalar_select %p700, %s25, 1
        %s702 = smul.addr %s701, 2
        %s703 = smul.addr %s702, 8
        %s704 = scalar_lea.vmem %s5, %s703
      $region68: #{iaff_forward.5} parent=59 // pred_fallthru
        _
      // Predicated region
      $region69: #{iaff_forward.5} parent=59 // pred_check
        %p705 = pneg %p207
      $region70: #{iaff_forward.5} parent=59 // pred_check_branch
        %707 = sbr.rel (%p705) target = $region72
      $region71: #{iaff_forward.5} parent=59 // pred_region
        %p708 = scmp.lt.s32.totalorder %s25, 1
        %s709 = scalar_select %p708, %s25, 1
        %s710 = smul.addr %s709, 2
        %s711 = smul.addr %s710, 8
        %s712 = scalar_lea.vmem %s6, %s711
      $region72: #{iaff_forward.5} parent=59 // pred_fallthru
        _
      // Predicated region
      $region73: #{iaff_forward.5} parent=59 // pred_check
        %p713 = pneg %p233
      $region74: #{iaff_forward.5} parent=59 // pred_check_branch
        %715 = sbr.rel (%p713) target = $region76
      $region75: #{iaff_forward.5} parent=59 // pred_region
        %p716 = scmp.lt.s32.totalorder %s25, 1
        %s717 = scalar_select %p716, %s25, 1
        %s718 = smul.addr %s717, 8
        %s719 = smul.addr %s718, 8
        %s720 = scalar_lea.vmem %s7, %s719
      $region76: #{iaff_forward.5} parent=59 // pred_fallthru
        _
    $region60: #{iaff_forward.5} parent=5 // pred_fallthru
      _
  $region6: #{iaff_forward.5} parent=0 // loop_footer
    %s18 = sadd.s32 1, %s14
  $region7: #{iaff_forward.5} parent=0 // loop_footer_branch
    %13 = sbr.rel target = $region3
  $region8: #{iaff_forward.5} parent=0 // loop_exit
    _

// kernel: iaff_forward.6
$region0: #{iaff_forward.6}
  #allocation0 [shape = 'u32[]', space=smem, size = 0x4, offset = 0x4, fixed_abs, tag = 'smem constant byte address 0x4 - core index']
  #allocation1 [shape = 'u32[144,128]{1,0:T(1,128)}', space=vmem, size = 0x12000, scoped, tag = 'internal scratch']
  %s0 = inlined_call_operand.vmem [shape: bf16[2,16,256], index: 0, kind: input, shape index: {}]
  %s1 = inlined_call_operand.vmem [shape: f32[16,1], index: 1, kind: input, shape index: {}]
  %s2 = inlined_call_operand.vmem [shape: f32[16,1], index: 2, kind: input, shape index: {}]
  %s3 = inlined_call_operand.vmem [shape: f32[2,16,128], index: 3, kind: output, shape index: {0}]
  %s4 = inlined_call_operand.vmem [shape: f32[2,16,16], index: 4, kind: output, shape index: {1}]
  %5 = xla_tuple %s3, %s4
  %s6 = sld [smem:[#allocation0]]
  $region57: #{iaff_forward.6} parent=0
    _
  %s8 = ssub.s32 1, %s6
  %s9 = scalar_select 0, %s8, %s6
  loop: start=0, step=1, limit=4
  $region2: #{iaff_forward.6} parent=0 // loop_pre_header
    _
  $region3: #{iaff_forward.6} parent=0 // loop_header
    %s11 = sphi 0, %s15
    %p12 = scmp.ge.s32.totalorder %s11, 4
    %s18 = sphi 0, %s30
    %s19 = sphi 0, %s26
    %s20 = sphi 0, %s18
    %s21 = sphi 0, %s19
    %s22 = sphi 0, %s20
    %s23 = sphi 0, %s21
    %s35 = sphi 0, %s37
    %s38 = sphi 0, %s35
    %s39 = sphi 0, %s38
    %s55 = sphi 0, %s39
    %s59 = sphi 0, %s59
    %s61 = sphi 0, %s59
    %s62 = sphi 0, %s61
    %s76 = sphi 0, %s62
    %s80 = sphi 0, %s80
    %s82 = sphi 0, %s80
    %s83 = sphi 0, %s82
    %s97 = sphi 0, %s83
    %s103 = sphi 0, %s105
    %s106 = sphi 0, %s103
    %s107 = sphi 0, %s106
    %s123 = sphi 0, %s107
    %s129 = sphi 0, %s131
    %s132 = sphi 0, %s129
    %s133 = sphi 0, %s132
    %s149 = sphi 0, %s133
  $region4: #{iaff_forward.6} parent=0 // loop_header_branch
    %14 = sbr.rel (%p12) target = $region8
  $region5: #{iaff_forward.6} parent=0 // loop_body
    %s16 = ssub.s32 %s11, 1
    %s17 = ssub.s32 %s11, 2
    %s24 = sadd.s32 1, %s19
    %p25 = scmp.ge.s32.totalorder %s24, 1
    %s26 = scalar_select %p25, 0, %s24
    %s27 = sadd.s32 1, %s18
    %s28 = scalar_select %p25, %s27, %s18
    %p29 = scmp.ge.s32.totalorder %s28, 2
    %s30 = scalar_select %p29, 0, %s28
    %s31 = ssub.s32 %s18, %s30
    %s32 = ssub.s32 %s19, %s26
    %s33 = sor.u32 %s31, %s32
    %p34 = scmp.eq.s32.totalorder %s33, 0
    %s36 = sadd.s32 %s35, 1
    %s37 = scalar_select %p34, %s35, %s36
    %p40 = pneg %p34
    %p41 = scmp.eq.s32.totalorder %s11, 1
    %p42 = por %p40, %p41
    %p43 = scmp.ne.s32.totalorder %s35, %s38
    %p44 = scmp.eq.s32.totalorder %s11, 0
    %p45 = por %p43, %p44
    %p46 = scmp.ne.s32.totalorder %s35, %s38
    %p47 = scmp.eq.s32.totalorder %s16, 1
    %p48 = por %p46, %p47
    %p49 = scmp.ne.s32.totalorder %s38, %s39
    %p50 = scmp.eq.s32.totalorder %s16, 0
    %p51 = por %p49, %p50
    %p52 = scmp.ne.s32.totalorder %s38, %s39
    %p53 = scmp.eq.s32.totalorder %s17, 1
    %p54 = por %p52, %p53
    %p56 = scmp.ne.s32.totalorder %s39, %s55
    %p57 = scmp.eq.s32.totalorder %s17, 0
    %p58 = por %p56, %p57
    %s60 = sadd.s32 %s59, 1
    %p63 = scmp.eq.s32.totalorder %s11, 1
    %p64 = scmp.ne.s32.totalorder %s59, %s61
    %p65 = scmp.eq.s32.totalorder %s11, 0
    %p66 = por %p64, %p65
    %p67 = scmp.ne.s32.totalorder %s59, %s61
    %p68 = scmp.eq.s32.totalorder %s16, 1
    %p69 = por %p67, %p68
    %p70 = scmp.ne.s32.totalorder %s61, %s62
    %p71 = scmp.eq.s32.totalorder %s16, 0
    %p72 = por %p70, %p71
    %p73 = scmp.ne.s32.totalorder %s61, %s62
    %p74 = scmp.eq.s32.totalorder %s17, 1
    %p75 = por %p73, %p74
    %p77 = scmp.ne.s32.totalorder %s62, %s76
    %p78 = scmp.eq.s32.totalorder %s17, 0
    %p79 = por %p77, %p78
    %s81 = sadd.s32 %s80, 1
    %p84 = scmp.eq.s32.totalorder %s11, 1
    %p85 = scmp.ne.s32.totalorder %s80, %s82
    %p86 = scmp.eq.s32.totalorder %s11, 0
    %p87 = por %p85, %p86
    %p88 = scmp.ne.s32.totalorder %s80, %s82
    %p89 = scmp.eq.s32.totalorder %s16, 1
    %p90 = por %p88, %p89
    %p91 = scmp.ne.s32.totalorder %s82, %s83
    %p92 = scmp.eq.s32.totalorder %s16, 0
    %p93 = por %p91, %p92
    %p94 = scmp.ne.s32.totalorder %s82, %s83
    %p95 = scmp.eq.s32.totalorder %s17, 1
    %p96 = por %p94, %p95
    %p98 = scmp.ne.s32.totalorder %s83, %s97
    %p99 = scmp.eq.s32.totalorder %s17, 0
    %p100 = por %p98, %p99
    %s101 = ssub.s32 %s18, %s30
    %p102 = scmp.eq.s32.totalorder %s101, 0
    %s104 = sadd.s32 %s103, 1
    %s105 = scalar_select %p102, %s103, %s104
    %p108 = pneg %p102
    %p109 = scmp.eq.s32.totalorder %s11, 1
    %p110 = por %p108, %p109
    %p111 = scmp.ne.s32.totalorder %s103, %s106
    %p112 = scmp.eq.s32.totalorder %s11, 0
    %p113 = por %p111, %p112
    %p114 = scmp.ne.s32.totalorder %s103, %s106
    %p115 = scmp.eq.s32.totalorder %s16, 1
    %p116 = por %p114, %p115
    %p117 = scmp.ne.s32.totalorder %s106, %s107
    %p118 = scmp.eq.s32.totalorder %s16, 0
    %p119 = por %p117, %p118
    %p120 = scmp.ne.s32.totalorder %s106, %s107
    %p121 = scmp.eq.s32.totalorder %s17, 1
    %p122 = por %p120, %p121
    %p124 = scmp.ne.s32.totalorder %s107, %s123
    %p125 = scmp.eq.s32.totalorder %s17, 0
    %p126 = por %p124, %p125
    %s127 = ssub.s32 %s18, %s30
    %p128 = scmp.eq.s32.totalorder %s127, 0
    %s130 = sadd.s32 %s129, 1
    %s131 = scalar_select %p128, %s129, %s130
    %p134 = pneg %p128
    %p135 = scmp.eq.s32.totalorder %s11, 1
    %p136 = por %p134, %p135
    %p137 = scmp.ne.s32.totalorder %s129, %s132
    %p138 = scmp.eq.s32.totalorder %s11, 0
    %p139 = por %p137, %p138
    %p140 = scmp.ne.s32.totalorder %s129, %s132
    %p141 = scmp.eq.s32.totalorder %s16, 1
    %p142 = por %p140, %p141
    %p143 = scmp.ne.s32.totalorder %s132, %s133
    %p144 = scmp.eq.s32.totalorder %s16, 0
    %p145 = por %p143, %p144
    %p146 = scmp.ne.s32.totalorder %s132, %s133
    %p147 = scmp.eq.s32.totalorder %s17, 1
    %p148 = por %p146, %p147
    %p150 = scmp.ne.s32.totalorder %s133, %s149
    %p151 = scmp.eq.s32.totalorder %s17, 0
    %p152 = por %p150, %p151
    %p153 = scmp.le.s32.totalorder 1, %s11
    %p154 = scmp.lt.s32.totalorder %s11, 3
    %p155 = pnand %p153, %p154
    %p156 = pneg %p155
    // Predicated region
    $region9: #{iaff_forward.6} parent=5 // pred_check
      _
    $region10: #{iaff_forward.6} parent=5 // pred_check_branch
      %158 = sbr.rel (%p155) target = $region12
    $region11: #{iaff_forward.6} parent=5 // pred_region
      %s159 = ssub.s32 %s11, 1
      // Predicated region
      $region13: #{iaff_forward.6} parent=11 // pred_check
        %p160 = pneg %p72
      $region14: #{iaff_forward.6} parent=11 // pred_check_branch
        %162 = sbr.rel (%p160) target = $region16
      $region15: #{iaff_forward.6} parent=11 // pred_region
        _
      $region16: #{iaff_forward.6} parent=11 // pred_fallthru
        _
      // Predicated region
      $region17: #{iaff_forward.6} parent=11 // pred_check
        %p163 = pneg %p93
      $region18: #{iaff_forward.6} parent=11 // pred_check_branch
        %165 = sbr.rel (%p163) target = $region20
      $region19: #{iaff_forward.6} parent=11 // pred_region
        _
      $region20: #{iaff_forward.6} parent=11 // pred_fallthru
        _
    $region12: #{iaff_forward.6} parent=5 // pred_fallthru
      _
    %p166 = scmp.lt.s32.totalorder %s11, 2
    // Predicated region
    $region21: #{iaff_forward.6} parent=5 // pred_check
      %p167 = pneg %p166
    $region22: #{iaff_forward.6} parent=5 // pred_check_branch
      %169 = sbr.rel (%p167) target = $region24
    $region23: #{iaff_forward.6} parent=5 // pred_region
      // Predicated region
      $region25: #{iaff_forward.6} parent=23 // pred_check
        %p170 = pneg %p45
      $region26: #{iaff_forward.6} parent=23 // pred_check_branch
        %172 = sbr.rel (%p170) target = $region28
      $region27: #{iaff_forward.6} parent=23 // pred_region
        %s173 = smul.u32 2, %s19
        %p174 = scmp.lt.s32.totalorder %s18, 1
        %s175 = scalar_select %p174, %s18, 1
        %p176 = scmp.lt.s32.totalorder %s173, 1
        %s177 = scalar_select %p176, %s173, 1
        %s178 = smul.addr %s175, 4
        %s179 = sadd.s32 %s177, %s178
        %s180 = smul.addr %s179, 4
        %s181 = scalar_lea.vmem %s0, %s180
        %s182 = smul.u32 2, %s19
      $region28: #{iaff_forward.6} parent=23 // pred_fallthru
        _
    $region24: #{iaff_forward.6} parent=5 // pred_fallthru
      _
    %p183 = scmp.le.s32.totalorder 1, %s11
    %p184 = scmp.lt.s32.totalorder %s11, 3
    %p185 = pnand %p183, %p184
    %p186 = pneg %p185
    // Predicated region
    $region29: #{iaff_forward.6} parent=5 // pred_check
      _
    $region30: #{iaff_forward.6} parent=5 // pred_check_branch
      %188 = sbr.rel (%p185) target = $region32
    $region31: #{iaff_forward.6} parent=5 // pred_region
      %s189 = ssub.s32 %s11, 1
      %s190 = smul.u32 2, %s21
      %p191 = scmp.lt.s32.totalorder %s20, 1
      %s192 = scalar_select %p191, %s20, 1
      %p193 = scmp.lt.s32.totalorder %s190, 1
      %s194 = scalar_select %p193, %s190, 1
      %s195 = smul.addr %s192, 4
      %s196 = sadd.s32 %s194, %s195
      %s197 = smul.addr %s196, 4
      %s198 = scalar_lea.vmem %s0, %s197
      %p199 = pneg %p51
      %p200 = pneg %p48
      %p201 = pneg %p72
      %p202 = pneg %p69
      %p203 = pneg %p93
      %p204 = pneg %p90
      %p205 = pneg %p119
      %p206 = pneg %p116
      %p207 = scmp.lt.s32.totalorder %s20, 1
      %s208 = scalar_select %p207, %s20, 1
      %s209 = smul.addr %s208, 2
      %s210 = smul.addr %s209, 8
      %s211 = scalar_lea.vmem %s3, %s210
      %p212 = pneg %p145
      %p213 = pneg %p142
      %p214 = scmp.lt.s32.totalorder %s20, 1
      %s215 = scalar_select %p214, %s20, 1
      %s216 = smul.addr %s215, 2
      %s217 = smul.addr %s216, 8
      %s218 = scalar_lea.vmem %s4, %s217
      %s219 = smul.u32 2, %s21
      %p220 = scmp.lt.s32.totalorder %s20, 1
      %s221 = scalar_select %p220, %s20, 1
      %p222 = scmp.lt.s32.totalorder %s219, 1
      %s223 = scalar_select %p222, %s219, 1
      %s224 = smul.addr %s221, 4
      %s225 = sadd.s32 %s223, %s224
      %s226 = smul.addr %s225, 4
      %s227 = scalar_lea.vmem %s0, %s226
      %s228 = smul.u32 2, %s21
      %p229 = scmp.lt.s32.totalorder %s20, 1
      %s230 = scalar_select %p229, %s20, 1
      %s231 = smul.addr %s230, 2
      %s232 = smul.addr %s231, 8
      %s233 = scalar_lea.vmem %s3, %s232
      %p234 = scmp.lt.s32.totalorder %s20, 1
      %s235 = scalar_select %p234, %s20, 1
      %s236 = smul.addr %s235, 2
      %s237 = smul.addr %s236, 8
      %s238 = scalar_lea.vmem %s4, %s237
      %p239 = scmp.eq.s32.totalorder %s21, 0
      // Predicated region
      $region33: #{iaff_forward.6} parent=31 // pred_check
        %p240 = pneg %p239
      $region34: #{iaff_forward.6} parent=31 // pred_check_branch
        %242 = sbr.rel (%p240) target = $region36
      $region35: #{iaff_forward.6} parent=31 // pred_region
        %243 = vst [vmem:[%s233] sm:$0xff] 0.0
        %244 = vst [vmem:[%s233 + $0x8] sm:$0xff] 0.0
        %vm245 = vcmask 130048
        %246 = vst.msk [vmem:[%s238] sm:$0xff] %vm245, 0.0
        %247 = vst.msk [vmem:[%s238 + $0x8] sm:$0xff] %vm245, 0.0
      $region36: #{iaff_forward.6} parent=31 // pred_fallthru
        _
      %v248 = vld [vmem:[%s227] sm:$0xff]
      %v249 = vld [vmem:[%s227 + $0x8] sm:$0xff]
      %v250 = vunpack.c.l.bf16 %v248
      %v251 = vunpack.c.h.bf16 %v248
      %v252 = vunpack.c.l.bf16 %v249
      %v253 = vunpack.c.h.bf16 %v249
      %v254 = vld [vmem:[%s1] sm:$0xff]
      %v255 = vld [vmem:[%s1 + $0x8] sm:$0xff]
      %257 = vset.pattern.permute.xlu0 0
      %258 = vperm.xlu0 %257, %v254
      %v259 = vpop.permute.xlu0 %258
      %262 = vset.pattern.permute.xlu0 0
      %263 = vperm.xlu0 %262, %v255
      %v264 = vpop.permute.xlu0 %263
      %v266 = vmul.f32 %v250, %v259
      %v267 = vmul.f32 %v251, %v259
      %v268 = vmul.f32 %v252, %v264
      %v269 = vmul.f32 %v253, %v264
      %v270 = vld [vmem:[%s2] sm:$0xff]
      %v271 = vld [vmem:[%s2 + $0x8] sm:$0xff]
      %273 = vset.pattern.permute.xlu0 0
      %274 = vperm.xlu0 %273, %v270
      %v275 = vpop.permute.xlu0 %274
      %278 = vset.pattern.permute.xlu0 0
      %279 = vperm.xlu0 %278, %v271
      %v280 = vpop.permute.xlu0 %279
      %v282 = vadd.f32 %v266, %v275
      %v283 = vadd.f32 %v267, %v275
      %v284 = vadd.f32 %v268, %v280
      %v285 = vadd.f32 %v269, %v280
      %v286 = vmax.f32 %v282, 0.0
      %v287 = vmax.f32 %v283, 0.0
      %v288 = vmax.f32 %v284, 0.0
      %v289 = vmax.f32 %v285, 0.0
      %v290 = vadd.f32 %v286, %v287
      %291 = vadd.xlane.f32.xlu0 %v290
      %v292 = vpop.xlane.xlu0 %291
      %v293 = vadd.f32 %v288, %v289
      %294 = vadd.xlane.f32.xlu0 %v293
      %v295 = vpop.xlane.xlu0 %294
      %v296 = vld [vmem:[%s233] sm:$0xff]
      %v297 = vld [vmem:[%s233 + $0x8] sm:$0xff]
      %v298 = vadd.f32 %v296, %v292
      %v299 = vadd.f32 %v297, %v295
      %300 = vst [vmem:[%s233] sm:$0xff] %v298
      %301 = vst [vmem:[%s233 + $0x8] sm:$0xff] %v299
      %302 = vmatprep.subr.mxu0 0.0
      %303 = vmatpush1.xpose.msra.mxu0 0.0
      %304 = vmatprep.subr.mxu0 0.0
      %305 = vmatpush1.xpose.msra.mxu0 0.0
      %306 = vmatprep.subr.mxu0 0.0
      %307 = vmatpush1.xpose.msra.mxu0 0.0
      %308 = vmatprep.subr.mxu0 0.0
      %309 = vmatpush1.xpose.msra.mxu0 0.0
      %310 = vmatprep.subr.mxu0 0.0
      %311 = vmatpush1.xpose.msra.mxu0 0.0
      %312 = vmatprep.subr.mxu0 0.0
      %313 = vmatpush1.xpose.msra.mxu0 0.0
      %314 = vmatprep.subr.mxu0 0.0
      %315 = vmatpush1.xpose.msra.mxu0 0.0
      %316 = vmatprep.subr.mxu0 0.0
      %317 = vmatpush1.xpose.msra.mxu0 0.0
      %318 = vmatprep.subr.mxu0 0.0
      %319 = vmatpush1.xpose.msra.mxu0 0.0
      %320 = vmatprep.subr.mxu0 0.0
      %321 = vmatpush1.xpose.msra.mxu0 0.0
      %322 = vmatprep.subr.mxu0 0.0
      %323 = vmatpush1.xpose.msra.mxu0 0.0
      %324 = vmatprep.subr.mxu0 0.0
      %325 = vmatpush1.xpose.msra.mxu0 0.0
      %326 = vmatprep.subr.mxu0 0.0
      %327 = vmatpush1.xpose.msra.mxu0 0.0
      %328 = vmatprep.subr.mxu0 0.0
      %329 = vmatpush1.xpose.msra.mxu0 0.0
      %330 = vmatprep.subr.mxu0 %v289
      %331 = vmatpush1.xpose.msra.mxu0 %v288
      %332 = vmatprep.subr.mxu0 %v287
      %333 = vmatpush1.xpose.msra.mxu0 %v286
      %334 = vmatprep.subr.mxu0 0.0
      %335 = vmatpush2.xpose.msra.mxu0 0.0
      %336 = vmatprep.subr.mxu0 0.0
      %337 = vmatpush2.xpose.msra.mxu0 0.0
      %338 = vmatprep.subr.mxu0 0.0
      %339 = vmatpush2.xpose.msra.mxu0 0.0
      %340 = vmatprep.subr.mxu0 0.0
      %341 = vmatpush2.xpose.msra.mxu0 0.0
      %342 = vmatprep.subr.mxu0 0.0
      %343 = vmatpush2.xpose.msra.mxu0 0.0
      %344 = vmatprep.subr.mxu0 0.0
      %345 = vmatpush2.xpose.msra.mxu0 0.0
      %346 = vmatprep.subr.mxu0 0.0
      %347 = vmatpush2.xpose.msra.mxu0 0.0
      %348 = vmatprep.subr.mxu0 0.0
      %349 = vmatpush2.xpose.msra.mxu0 0.0
      %350 = vmatprep.subr.mxu0 0.0
      %351 = vmatpush2.xpose.msra.mxu0 0.0
      %352 = vmatprep.subr.mxu0 0.0
      %353 = vmatpush2.xpose.msra.mxu0 0.0
      %354 = vmatprep.subr.mxu0 0.0
      %355 = vmatpush2.xpose.msra.mxu0 0.0
      %356 = vmatprep.subr.mxu0 0.0
      %357 = vmatpush2.xpose.msra.mxu0 0.0
      %358 = vmatprep.subr.mxu0 0.0
      %359 = vmatpush2.xpose.msra.mxu0 0.0
      %360 = vmatprep.subr.mxu0 0.0
      %361 = vmatpush2.xpose.msra.mxu0 0.0
      %362 = vmatprep.subr.mxu0 0.0
      %363 = vmatpush2.xpose.msra.mxu0 0.0
      %364 = vmatprep.subr.mxu0 0.0
      %365 = vmatpush2.xpose.msra.mxu0 0.0
      %366 = vmatprep.mubr.f32.mxu0 %v287
      %367 = vmatmul.mubr.f32.gmra.mxu0 %v286
      %v368 = vpop.f32.mrf.mxu0
      %v369 = vadd.f32 0.0, %v368
      %v370 = vpop.f32.mrf.mxu0
      %371 = vmatprep.mubr.f32.mxu0 %v289
      %372 = vmatmul.mubr.f32.gmra.mxu0 %v288
      %v373 = vpop.f32.mrf.mxu0
      %v374 = vadd.f32 0.0, %v373
      %v375 = vpop.f32.mrf.mxu0
      %376 = vdwg.mxu0
      %v377 = vld [vmem:[%s238] sm:$0xff]
      %v378 = vld [vmem:[%s238 + $0x8] sm:$0xff]
      %v379 = vadd.f32 %v377, %v369
      %v380 = vadd.f32 %v378, %v374
      %vm381 = vcmask 130048
      %382 = vst.msk [vmem:[%s238] sm:$0xff] %vm381, %v379
      %383 = vst.msk [vmem:[%s238 + $0x8] sm:$0xff] %vm381, %v380
      %p384 = scmp.lt.s32.totalorder %s20, 1
      %s385 = scalar_select %p384, %s20, 1
      %s386 = smul.addr %s385, 2
      %s387 = smul.addr %s386, 8
      %s388 = scalar_lea.vmem %s3, %s387
      %p389 = scmp.lt.s32.totalorder %s20, 1
      %s390 = scalar_select %p389, %s20, 1
      %s391 = smul.addr %s390, 2
      %s392 = smul.addr %s391, 8
      %s393 = scalar_lea.vmem %s4, %s392
      // Predicated region
      $region37: #{iaff_forward.6} parent=31 // pred_check
        %p394 = pneg %p116
      $region38: #{iaff_forward.6} parent=31 // pred_check_branch
        %396 = sbr.rel (%p394) target = $region40
      $region39: #{iaff_forward.6} parent=31 // pred_region
        _
      $region40: #{iaff_forward.6} parent=31 // pred_fallthru
        _
      // Predicated region
      $region41: #{iaff_forward.6} parent=31 // pred_check
        %p397 = pneg %p142
      $region42: #{iaff_forward.6} parent=31 // pred_check_branch
        %399 = sbr.rel (%p397) target = $region44
      $region43: #{iaff_forward.6} parent=31 // pred_region
        _
      $region44: #{iaff_forward.6} parent=31 // pred_fallthru
        _
    $region32: #{iaff_forward.6} parent=5 // pred_fallthru
      _
    %p400 = scmp.le.s32.totalorder 2, %s11
    // Predicated region
    $region45: #{iaff_forward.6} parent=5 // pred_check
      %p401 = pneg %p400
    $region46: #{iaff_forward.6} parent=5 // pred_check_branch
      %403 = sbr.rel (%p401) target = $region48
    $region47: #{iaff_forward.6} parent=5 // pred_region
      %s404 = ssub.s32 %s11, 2
      // Predicated region
      $region49: #{iaff_forward.6} parent=47 // pred_check
        %p405 = pneg %p122
      $region50: #{iaff_forward.6} parent=47 // pred_check_branch
        %407 = sbr.rel (%p405) target = $region52
      $region51: #{iaff_forward.6} parent=47 // pred_region
        %p408 = scmp.lt.s32.totalorder %s22, 1
        %s409 = scalar_select %p408, %s22, 1
        %s410 = smul.addr %s409, 2
        %s411 = smul.addr %s410, 8
        %s412 = scalar_lea.vmem %s3, %s411
      $region52: #{iaff_forward.6} parent=47 // pred_fallthru
        _
      // Predicated region
      $region53: #{iaff_forward.6} parent=47 // pred_check
        %p413 = pneg %p148
      $region54: #{iaff_forward.6} parent=47 // pred_check_branch
        %415 = sbr.rel (%p413) target = $region56
      $region55: #{iaff_forward.6} parent=47 // pred_region
        %p416 = scmp.lt.s32.totalorder %s22, 1
        %s417 = scalar_select %p416, %s22, 1
        %s418 = smul.addr %s417, 2
        %s419 = smul.addr %s418, 8
        %s420 = scalar_lea.vmem %s4, %s419
      $region56: #{iaff_forward.6} parent=47 // pred_fallthru
        _
    $region48: #{iaff_forward.6} parent=5 // pred_fallthru
      _
  $region6: #{iaff_forward.6} parent=0 // loop_footer
    %s15 = sadd.s32 1, %s11
  $region7: #{iaff_forward.6} parent=0 // loop_footer_branch
    %10 = sbr.rel target = $region3
  $region8: #{iaff_forward.6} parent=0 // loop_exit
    _

// kernel: iaff_forward.9
$region0: #{iaff_forward.9}
  #allocation0 [shape = 'u32[]', space=smem, size = 0x4, offset = 0x4, fixed_abs, tag = 'smem constant byte address 0x4 - core index']
  #allocation1 [shape = 'u32[144,128]{1,0:T(1,128)}', space=vmem, size = 0x12000, scoped, tag = 'internal scratch']
  %s0 = inlined_call_operand.vmem [shape: bf16[2,16,256], index: 0, kind: input, shape index: {}]
  %s1 = inlined_call_operand.vmem [shape: f32[2,64,256], index: 1, kind: input, shape index: {}]
  %s2 = inlined_call_operand.vmem [shape: f32[2,64,256], index: 2, kind: input, shape index: {}]
  %s3 = inlined_call_operand.vmem [shape: f32[2,64,1], index: 3, kind: input, shape index: {}]
  %s4 = inlined_call_operand.vmem [shape: f32[16,1], index: 4, kind: input, shape index: {}]
  %s5 = inlined_call_operand.vmem [shape: f32[16,1], index: 5, kind: input, shape index: {}]
  %s6 = inlined_call_operand.vmem [shape: f32[64,16], index: 6, kind: input, shape index: {}]
  %s7 = inlined_call_operand.vmem [shape: f32[64,1], index: 7, kind: input, shape index: {}]
  %s8 = inlined_call_operand.vmem [shape: f32[2,64,256], index: 8, kind: output, shape index: {}]
  %s9 = sld [smem:[#allocation0]]
  $region65: #{iaff_forward.9} parent=0
    _
  %s11 = ssub.s32 1, %s9
  %s12 = scalar_select 0, %s11, %s9
  loop: start=0, step=1, limit=4
  $region2: #{iaff_forward.9} parent=0 // loop_pre_header
    _
  $region3: #{iaff_forward.9} parent=0 // loop_header
    %s14 = sphi 0, %s18
    %p15 = scmp.ge.s32.totalorder %s14, 4
    %s21 = sphi 0, %s33
    %s22 = sphi 0, %s29
    %s23 = sphi 0, %s21
    %s24 = sphi 0, %s22
    %s25 = sphi 0, %s23
    %s26 = sphi 0, %s24
    %s38 = sphi 0, %s40
    %s41 = sphi 0, %s38
    %s42 = sphi 0, %s41
    %s58 = sphi 0, %s42
    %s66 = sphi 0, %s68
    %s69 = sphi 0, %s66
    %s70 = sphi 0, %s69
    %s86 = sphi 0, %s70
    %s94 = sphi 0, %s96
    %s97 = sphi 0, %s94
    %s98 = sphi 0, %s97
    %s114 = sphi 0, %s98
    %s120 = sphi 0, %s122
    %s123 = sphi 0, %s120
    %s124 = sphi 0, %s123
    %s140 = sphi 0, %s124
    %s144 = sphi 0, %s144
    %s146 = sphi 0, %s144
    %s147 = sphi 0, %s146
    %s161 = sphi 0, %s147
    %s165 = sphi 0, %s165
    %s167 = sphi 0, %s165
    %s168 = sphi 0, %s167
    %s182 = sphi 0, %s168
    %s186 = sphi 0, %s186
    %s188 = sphi 0, %s186
    %s189 = sphi 0, %s188
    %s203 = sphi 0, %s189
    %s207 = sphi 0, %s207
    %s209 = sphi 0, %s207
    %s210 = sphi 0, %s209
    %s224 = sphi 0, %s210
    %s232 = sphi 0, %s234
    %s235 = sphi 0, %s232
    %s236 = sphi 0, %s235
    %s252 = sphi 0, %s236
  $region4: #{iaff_forward.9} parent=0 // loop_header_branch
    %17 = sbr.rel (%p15) target = $region8
  $region5: #{iaff_forward.9} parent=0 // loop_body
    %s19 = ssub.s32 %s14, 1
    %s20 = ssub.s32 %s14, 2
    %s27 = sadd.s32 1, %s22
    %p28 = scmp.ge.s32.totalorder %s27, 1
    %s29 = scalar_select %p28, 0, %s27
    %s30 = sadd.s32 1, %s21
    %s31 = scalar_select %p28, %s30, %s21
    %p32 = scmp.ge.s32.totalorder %s31, 2
    %s33 = scalar_select %p32, 0, %s31
    %s34 = ssub.s32 %s21, %s33
    %s35 = ssub.s32 %s22, %s29
    %s36 = sor.u32 %s34, %s35
    %p37 = scmp.eq.s32.totalorder %s36, 0
    %s39 = sadd.s32 %s38, 1
    %s40 = scalar_select %p37, %s38, %s39
    %p43 = pneg %p37
    %p44 = scmp.eq.s32.totalorder %s14, 1
    %p45 = por %p43, %p44
    %p46 = scmp.ne.s32.totalorder %s38, %s41
    %p47 = scmp.eq.s32.totalorder %s14, 0
    %p48 = por %p46, %p47
    %p49 = scmp.ne.s32.totalorder %s38, %s41
    %p50 = scmp.eq.s32.totalorder %s19, 1
    %p51 = por %p49, %p50
    %p52 = scmp.ne.s32.totalorder %s41, %s42
    %p53 = scmp.eq.s32.totalorder %s19, 0
    %p54 = por %p52, %p53
    %p55 = scmp.ne.s32.totalorder %s41, %s42
    %p56 = scmp.eq.s32.totalorder %s20, 1
    %p57 = por %p55, %p56
    %p59 = scmp.ne.s32.totalorder %s42, %s58
    %p60 = scmp.eq.s32.totalorder %s20, 0
    %p61 = por %p59, %p60
    %s62 = ssub.s32 %s21, %s33
    %s63 = ssub.s32 %s22, %s29
    %s64 = sor.u32 %s62, %s63
    %p65 = scmp.eq.s32.totalorder %s64, 0
    %s67 = sadd.s32 %s66, 1
    %s68 = scalar_select %p65, %s66, %s67
    %p71 = pneg %p65
    %p72 = scmp.eq.s32.totalorder %s14, 1
    %p73 = por %p71, %p72
    %p74 = scmp.ne.s32.totalorder %s66, %s69
    %p75 = scmp.eq.s32.totalorder %s14, 0
    %p76 = por %p74, %p75
    %p77 = scmp.ne.s32.totalorder %s66, %s69
    %p78 = scmp.eq.s32.totalorder %s19, 1
    %p79 = por %p77, %p78
    %p80 = scmp.ne.s32.totalorder %s69, %s70
    %p81 = scmp.eq.s32.totalorder %s19, 0
    %p82 = por %p80, %p81
    %p83 = scmp.ne.s32.totalorder %s69, %s70
    %p84 = scmp.eq.s32.totalorder %s20, 1
    %p85 = por %p83, %p84
    %p87 = scmp.ne.s32.totalorder %s70, %s86
    %p88 = scmp.eq.s32.totalorder %s20, 0
    %p89 = por %p87, %p88
    %s90 = ssub.s32 %s21, %s33
    %s91 = ssub.s32 %s22, %s29
    %s92 = sor.u32 %s90, %s91
    %p93 = scmp.eq.s32.totalorder %s92, 0
    %s95 = sadd.s32 %s94, 1
    %s96 = scalar_select %p93, %s94, %s95
    %p99 = pneg %p93
    %p100 = scmp.eq.s32.totalorder %s14, 1
    %p101 = por %p99, %p100
    %p102 = scmp.ne.s32.totalorder %s94, %s97
    %p103 = scmp.eq.s32.totalorder %s14, 0
    %p104 = por %p102, %p103
    %p105 = scmp.ne.s32.totalorder %s94, %s97
    %p106 = scmp.eq.s32.totalorder %s19, 1
    %p107 = por %p105, %p106
    %p108 = scmp.ne.s32.totalorder %s97, %s98
    %p109 = scmp.eq.s32.totalorder %s19, 0
    %p110 = por %p108, %p109
    %p111 = scmp.ne.s32.totalorder %s97, %s98
    %p112 = scmp.eq.s32.totalorder %s20, 1
    %p113 = por %p111, %p112
    %p115 = scmp.ne.s32.totalorder %s98, %s114
    %p116 = scmp.eq.s32.totalorder %s20, 0
    %p117 = por %p115, %p116
    %s118 = ssub.s32 %s21, %s33
    %p119 = scmp.eq.s32.totalorder %s118, 0
    %s121 = sadd.s32 %s120, 1
    %s122 = scalar_select %p119, %s120, %s121
    %p125 = pneg %p119
    %p126 = scmp.eq.s32.totalorder %s14, 1
    %p127 = por %p125, %p126
    %p128 = scmp.ne.s32.totalorder %s120, %s123
    %p129 = scmp.eq.s32.totalorder %s14, 0
    %p130 = por %p128, %p129
    %p131 = scmp.ne.s32.totalorder %s120, %s123
    %p132 = scmp.eq.s32.totalorder %s19, 1
    %p133 = por %p131, %p132
    %p134 = scmp.ne.s32.totalorder %s123, %s124
    %p135 = scmp.eq.s32.totalorder %s19, 0
    %p136 = por %p134, %p135
    %p137 = scmp.ne.s32.totalorder %s123, %s124
    %p138 = scmp.eq.s32.totalorder %s20, 1
    %p139 = por %p137, %p138
    %p141 = scmp.ne.s32.totalorder %s124, %s140
    %p142 = scmp.eq.s32.totalorder %s20, 0
    %p143 = por %p141, %p142
    %s145 = sadd.s32 %s144, 1
    %p148 = scmp.eq.s32.totalorder %s14, 1
    %p149 = scmp.ne.s32.totalorder %s144, %s146
    %p150 = scmp.eq.s32.totalorder %s14, 0
    %p151 = por %p149, %p150
    %p152 = scmp.ne.s32.totalorder %s144, %s146
    %p153 = scmp.eq.s32.totalorder %s19, 1
    %p154 = por %p152, %p153
    %p155 = scmp.ne.s32.totalorder %s146, %s147
    %p156 = scmp.eq.s32.totalorder %s19, 0
    %p157 = por %p155, %p156
    %p158 = scmp.ne.s32.totalorder %s146, %s147
    %p159 = scmp.eq.s32.totalorder %s20, 1
    %p160 = por %p158, %p159
    %p162 = scmp.ne.s32.totalorder %s147, %s161
    %p163 = scmp.eq.s32.totalorder %s20, 0
    %p164 = por %p162, %p163
    %s166 = sadd.s32 %s165, 1
    %p169 = scmp.eq.s32.totalorder %s14, 1
    %p170 = scmp.ne.s32.totalorder %s165, %s167
    %p171 = scmp.eq.s32.totalorder %s14, 0
    %p172 = por %p170, %p171
    %p173 = scmp.ne.s32.totalorder %s165, %s167
    %p174 = scmp.eq.s32.totalorder %s19, 1
    %p175 = por %p173, %p174
    %p176 = scmp.ne.s32.totalorder %s167, %s168
    %p177 = scmp.eq.s32.totalorder %s19, 0
    %p178 = por %p176, %p177
    %p179 = scmp.ne.s32.totalorder %s167, %s168
    %p180 = scmp.eq.s32.totalorder %s20, 1
    %p181 = por %p179, %p180
    %p183 = scmp.ne.s32.totalorder %s168, %s182
    %p184 = scmp.eq.s32.totalorder %s20, 0
    %p185 = por %p183, %p184
    %s187 = sadd.s32 %s186, 1
    %p190 = scmp.eq.s32.totalorder %s14, 1
    %p191 = scmp.ne.s32.totalorder %s186, %s188
    %p192 = scmp.eq.s32.totalorder %s14, 0
    %p193 = por %p191, %p192
    %p194 = scmp.ne.s32.totalorder %s186, %s188
    %p195 = scmp.eq.s32.totalorder %s19, 1
    %p196 = por %p194, %p195
    %p197 = scmp.ne.s32.totalorder %s188, %s189
    %p198 = scmp.eq.s32.totalorder %s19, 0
    %p199 = por %p197, %p198
    %p200 = scmp.ne.s32.totalorder %s188, %s189
    %p201 = scmp.eq.s32.totalorder %s20, 1
    %p202 = por %p200, %p201
    %p204 = scmp.ne.s32.totalorder %s189, %s203
    %p205 = scmp.eq.s32.totalorder %s20, 0
    %p206 = por %p204, %p205
    %s208 = sadd.s32 %s207, 1
    %p211 = scmp.eq.s32.totalorder %s14, 1
    %p212 = scmp.ne.s32.totalorder %s207, %s209
    %p213 = scmp.eq.s32.totalorder %s14, 0
    %p214 = por %p212, %p213
    %p215 = scmp.ne.s32.totalorder %s207, %s209
    %p216 = scmp.eq.s32.totalorder %s19, 1
    %p217 = por %p215, %p216
    %p218 = scmp.ne.s32.totalorder %s209, %s210
    %p219 = scmp.eq.s32.totalorder %s19, 0
    %p220 = por %p218, %p219
    %p221 = scmp.ne.s32.totalorder %s209, %s210
    %p222 = scmp.eq.s32.totalorder %s20, 1
    %p223 = por %p221, %p222
    %p225 = scmp.ne.s32.totalorder %s210, %s224
    %p226 = scmp.eq.s32.totalorder %s20, 0
    %p227 = por %p225, %p226
    %s228 = ssub.s32 %s21, %s33
    %s229 = ssub.s32 %s22, %s29
    %s230 = sor.u32 %s228, %s229
    %p231 = scmp.eq.s32.totalorder %s230, 0
    %s233 = sadd.s32 %s232, 1
    %s234 = scalar_select %p231, %s232, %s233
    %p237 = pneg %p231
    %p238 = scmp.eq.s32.totalorder %s14, 1
    %p239 = por %p237, %p238
    %p240 = scmp.ne.s32.totalorder %s232, %s235
    %p241 = scmp.eq.s32.totalorder %s14, 0
    %p242 = por %p240, %p241
    %p243 = scmp.ne.s32.totalorder %s232, %s235
    %p244 = scmp.eq.s32.totalorder %s19, 1
    %p245 = por %p243, %p244
    %p246 = scmp.ne.s32.totalorder %s235, %s236
    %p247 = scmp.eq.s32.totalorder %s19, 0
    %p248 = por %p246, %p247
    %p249 = scmp.ne.s32.totalorder %s235, %s236
    %p250 = scmp.eq.s32.totalorder %s20, 1
    %p251 = por %p249, %p250
    %p253 = scmp.ne.s32.totalorder %s236, %s252
    %p254 = scmp.eq.s32.totalorder %s20, 0
    %p255 = por %p253, %p254
    %p256 = scmp.le.s32.totalorder 1, %s14
    %p257 = scmp.lt.s32.totalorder %s14, 3
    %p258 = pnand %p256, %p257
    %p259 = pneg %p258
    // Predicated region
    $region9: #{iaff_forward.9} parent=5 // pred_check
      _
    $region10: #{iaff_forward.9} parent=5 // pred_check_branch
      %261 = sbr.rel (%p258) target = $region12
    $region11: #{iaff_forward.9} parent=5 // pred_region
      %s262 = ssub.s32 %s14, 1
      // Predicated region
      $region13: #{iaff_forward.9} parent=11 // pred_check
        %p263 = pneg %p157
      $region14: #{iaff_forward.9} parent=11 // pred_check_branch
        %265 = sbr.rel (%p263) target = $region16
      $region15: #{iaff_forward.9} parent=11 // pred_region
        _
      $region16: #{iaff_forward.9} parent=11 // pred_fallthru
        _
      // Predicated region
      $region17: #{iaff_forward.9} parent=11 // pred_check
        %p266 = pneg %p178
      $region18: #{iaff_forward.9} parent=11 // pred_check_branch
        %268 = sbr.rel (%p266) target = $region20
      $region19: #{iaff_forward.9} parent=11 // pred_region
        _
      $region20: #{iaff_forward.9} parent=11 // pred_fallthru
        _
      // Predicated region
      $region21: #{iaff_forward.9} parent=11 // pred_check
        %p269 = pneg %p199
      $region22: #{iaff_forward.9} parent=11 // pred_check_branch
        %271 = sbr.rel (%p269) target = $region24
      $region23: #{iaff_forward.9} parent=11 // pred_region
        _
      $region24: #{iaff_forward.9} parent=11 // pred_fallthru
        _
      // Predicated region
      $region25: #{iaff_forward.9} parent=11 // pred_check
        %p272 = pneg %p220
      $region26: #{iaff_forward.9} parent=11 // pred_check_branch
        %274 = sbr.rel (%p272) target = $region28
      $region27: #{iaff_forward.9} parent=11 // pred_region
        _
      $region28: #{iaff_forward.9} parent=11 // pred_fallthru
        _
    $region12: #{iaff_forward.9} parent=5 // pred_fallthru
      _
    %p275 = scmp.lt.s32.totalorder %s14, 2
    // Predicated region
    $region29: #{iaff_forward.9} parent=5 // pred_check
      %p276 = pneg %p275
    $region30: #{iaff_forward.9} parent=5 // pred_check_branch
      %278 = sbr.rel (%p276) target = $region32
    $region31: #{iaff_forward.9} parent=5 // pred_region
      // Predicated region
      $region33: #{iaff_forward.9} parent=31 // pred_check
        %p279 = pneg %p48
      $region34: #{iaff_forward.9} parent=31 // pred_check_branch
        %281 = sbr.rel (%p279) target = $region36
      $region35: #{iaff_forward.9} parent=31 // pred_region
        %s282 = smul.u32 2, %s22
        %p283 = scmp.lt.s32.totalorder %s21, 1
        %s284 = scalar_select %p283, %s21, 1
        %p285 = scmp.lt.s32.totalorder %s282, 1
        %s286 = scalar_select %p285, %s282, 1
        %s287 = smul.addr %s284, 4
        %s288 = sadd.s32 %s286, %s287
        %s289 = smul.addr %s288, 4
        %s290 = scalar_lea.vmem %s0, %s289
        %s291 = smul.u32 2, %s22
      $region36: #{iaff_forward.9} parent=31 // pred_fallthru
        _
      // Predicated region
      $region37: #{iaff_forward.9} parent=31 // pred_check
        %p292 = pneg %p76
      $region38: #{iaff_forward.9} parent=31 // pred_check_branch
        %294 = sbr.rel (%p292) target = $region40
      $region39: #{iaff_forward.9} parent=31 // pred_region
        %s295 = smul.u32 2, %s22
        %p296 = scmp.lt.s32.totalorder %s21, 1
        %s297 = scalar_select %p296, %s21, 1
        %p298 = scmp.lt.s32.totalorder %s295, 1
        %s299 = scalar_select %p298, %s295, 1
        %s300 = smul.addr %s297, 16
        %s301 = sadd.s32 %s299, %s300
        %s302 = smul.addr %s301, 8
        %s303 = scalar_lea.vmem %s1, %s302
        %s304 = smul.u32 2, %s22
      $region40: #{iaff_forward.9} parent=31 // pred_fallthru
        _
      // Predicated region
      $region41: #{iaff_forward.9} parent=31 // pred_check
        %p305 = pneg %p104
      $region42: #{iaff_forward.9} parent=31 // pred_check_branch
        %307 = sbr.rel (%p305) target = $region44
      $region43: #{iaff_forward.9} parent=31 // pred_region
        %s308 = smul.u32 2, %s22
        %p309 = scmp.lt.s32.totalorder %s21, 1
        %s310 = scalar_select %p309, %s21, 1
        %p311 = scmp.lt.s32.totalorder %s308, 1
        %s312 = scalar_select %p311, %s308, 1
        %s313 = smul.addr %s310, 16
        %s314 = sadd.s32 %s312, %s313
        %s315 = smul.addr %s314, 8
        %s316 = scalar_lea.vmem %s2, %s315
        %s317 = smul.u32 2, %s22
      $region44: #{iaff_forward.9} parent=31 // pred_fallthru
        _
      // Predicated region
      $region45: #{iaff_forward.9} parent=31 // pred_check
        %p318 = pneg %p130
      $region46: #{iaff_forward.9} parent=31 // pred_check_branch
        %320 = sbr.rel (%p318) target = $region48
      $region47: #{iaff_forward.9} parent=31 // pred_region
        %p321 = scmp.lt.s32.totalorder %s21, 1
        %s322 = scalar_select %p321, %s21, 1
        %s323 = smul.addr %s322, 8
        %s324 = smul.addr %s323, 8
        %s325 = scalar_lea.vmem %s3, %s324
      $region48: #{iaff_forward.9} parent=31 // pred_fallthru
        _
    $region32: #{iaff_forward.9} parent=5 // pred_fallthru
      _
    %p326 = scmp.le.s32.totalorder 1, %s14
    %p327 = scmp.lt.s32.totalorder %s14, 3
    %p328 = pnand %p326, %p327
    %p329 = pneg %p328
    // Predicated region
    $region49: #{iaff_forward.9} parent=5 // pred_check
      _
    $region50: #{iaff_forward.9} parent=5 // pred_check_branch
      %331 = sbr.rel (%p328) target = $region52
    $region51: #{iaff_forward.9} parent=5 // pred_region
      %s332 = ssub.s32 %s14, 1
      %s333 = smul.u32 2, %s24
      %p334 = scmp.lt.s32.totalorder %s23, 1
      %s335 = scalar_select %p334, %s23, 1
      %p336 = scmp.lt.s32.totalorder %s333, 1
      %s337 = scalar_select %p336, %s333, 1
      %s338 = smul.addr %s335, 4
      %s339 = sadd.s32 %s337, %s338
      %s340 = smul.addr %s339, 4
      %s341 = scalar_lea.vmem %s0, %s340
      %p342 = pneg %p54
      %p343 = pneg %p51
      %s344 = smul.u32 2, %s24
      %p345 = scmp.lt.s32.totalorder %s23, 1
      %s346 = scalar_select %p345, %s23, 1
      %p347 = scmp.lt.s32.totalorder %s344, 1
      %s348 = scalar_select %p347, %s344, 1
      %s349 = smul.addr %s346, 16
      %s350 = sadd.s32 %s348, %s349
      %s351 = smul.addr %s350, 8
      %s352 = scalar_lea.vmem %s1, %s351
      %p353 = pneg %p82
      %p354 = pneg %p79
      %s355 = smul.u32 2, %s24
      %p356 = scmp.lt.s32.totalorder %s23, 1
      %s357 = scalar_select %p356, %s23, 1
      %p358 = scmp.lt.s32.totalorder %s355, 1
      %s359 = scalar_select %p358, %s355, 1
      %s360 = smul.addr %s357, 16
      %s361 = sadd.s32 %s359, %s360
      %s362 = smul.addr %s361, 8
      %s363 = scalar_lea.vmem %s2, %s362
      %p364 = pneg %p110
      %p365 = pneg %p107
      %p366 = scmp.lt.s32.totalorder %s23, 1
      %s367 = scalar_select %p366, %s23, 1
      %s368 = smul.addr %s367, 8
      %s369 = smul.addr %s368, 8
      %s370 = scalar_lea.vmem %s3, %s369
      %p371 = pneg %p136
      %p372 = pneg %p133
      %p373 = pneg %p157
      %p374 = pneg %p154
      %p375 = pneg %p178
      %p376 = pneg %p175
      %p377 = pneg %p199
      %p378 = pneg %p196
      %p379 = pneg %p220
      %p380 = pneg %p217
      %p381 = pneg %p248
      %p382 = pneg %p245
      %s383 = smul.u32 2, %s24
      %p384 = scmp.lt.s32.totalorder %s23, 1
      %s385 = scalar_select %p384, %s23, 1
      %p386 = scmp.lt.s32.totalorder %s383, 1
      %s387 = scalar_select %p386, %s383, 1
      %s388 = smul.addr %s385, 16
      %s389 = sadd.s32 %s387, %s388
      %s390 = smul.addr %s389, 8
      %s391 = scalar_lea.vmem %s8, %s390
      %s392 = smul.u32 2, %s24
      %p393 = scmp.lt.s32.totalorder %s23, 1
      %s394 = scalar_select %p393, %s23, 1
      %p395 = scmp.lt.s32.totalorder %s392, 1
      %s396 = scalar_select %p395, %s392, 1
      %s397 = smul.addr %s394, 4
      %s398 = sadd.s32 %s396, %s397
      %s399 = smul.addr %s398, 4
      %s400 = scalar_lea.vmem %s0, %s399
      %s401 = smul.u32 2, %s24
      %s402 = smul.u32 2, %s24
      %p403 = scmp.lt.s32.totalorder %s23, 1
      %s404 = scalar_select %p403, %s23, 1
      %p405 = scmp.lt.s32.totalorder %s402, 1
      %s406 = scalar_select %p405, %s402, 1
      %s407 = smul.addr %s404, 16
      %s408 = sadd.s32 %s406, %s407
      %s409 = smul.addr %s408, 8
      %s410 = scalar_lea.vmem %s1, %s409
      %s411 = smul.u32 2, %s24
      %s412 = smul.u32 2, %s24
      %p413 = scmp.lt.s32.totalorder %s23, 1
      %s414 = scalar_select %p413, %s23, 1
      %p415 = scmp.lt.s32.totalorder %s412, 1
      %s416 = scalar_select %p415, %s412, 1
      %s417 = smul.addr %s414, 16
      %s418 = sadd.s32 %s416, %s417
      %s419 = smul.addr %s418, 8
      %s420 = scalar_lea.vmem %s2, %s419
      %s421 = smul.u32 2, %s24
      %p422 = scmp.lt.s32.totalorder %s23, 1
      %s423 = scalar_select %p422, %s23, 1
      %s424 = smul.addr %s423, 8
      %s425 = smul.addr %s424, 8
      %s426 = scalar_lea.vmem %s3, %s425
      %s427 = smul.u32 2, %s24
      %p428 = scmp.lt.s32.totalorder %s23, 1
      %s429 = scalar_select %p428, %s23, 1
      %p430 = scmp.lt.s32.totalorder %s427, 1
      %s431 = scalar_select %p430, %s427, 1
      %s432 = smul.addr %s429, 16
      %s433 = sadd.s32 %s431, %s432
      %s434 = smul.addr %s433, 8
      %s435 = scalar_lea.vmem %s8, %s434
      %s436 = smul.u32 2, %s24
      %v437 = vld [vmem:[%s400] sm:$0xff]
      %v438 = vld [vmem:[%s400 + $0x8] sm:$0xff]
      %v439 = vunpack.c.l.bf16 %v437
      %v440 = vunpack.c.h.bf16 %v437
      %v441 = vunpack.c.l.bf16 %v438
      %v442 = vunpack.c.h.bf16 %v438
      %v443 = vld [vmem:[%s4] sm:$0xff]
      %v444 = vld [vmem:[%s4 + $0x8] sm:$0xff]
      %446 = vset.pattern.permute.xlu0 0
      %447 = vperm.xlu0 %446, %v443
      %v448 = vpop.permute.xlu0 %447
      %451 = vset.pattern.permute.xlu0 0
      %452 = vperm.xlu0 %451, %v444
      %v453 = vpop.permute.xlu0 %452
      %v455 = vmul.f32 %v439, %v448
      %v456 = vmul.f32 %v440, %v448
      %v457 = vmul.f32 %v441, %v453
      %v458 = vmul.f32 %v442, %v453
      %v459 = vld [vmem:[%s5] sm:$0xff]
      %v460 = vld [vmem:[%s5 + $0x8] sm:$0xff]
      %462 = vset.pattern.permute.xlu0 0
      %463 = vperm.xlu0 %462, %v459
      %v464 = vpop.permute.xlu0 %463
      %467 = vset.pattern.permute.xlu0 0
      %468 = vperm.xlu0 %467, %v460
      %v469 = vpop.permute.xlu0 %468
      %v471 = vadd.f32 %v455, %v464
      %v472 = vadd.f32 %v456, %v464
      %v473 = vadd.f32 %v457, %v469
      %v474 = vadd.f32 %v458, %v469
      %v475 = vmax.f32 %v471, 0.0
      %v476 = vmax.f32 %v472, 0.0
      %v477 = vmax.f32 %v473, 0.0
      %v478 = vmax.f32 %v474, 0.0
      %v479 = vld [vmem:[%s6] sm:$0xff]
      %v480 = vld [vmem:[%s6 + $0x8] sm:$0xff]
      %v481 = vld [vmem:[%s6 + $0x10] sm:$0xff]
      %v482 = vld [vmem:[%s6 + $0x18] sm:$0xff]
      %v483 = vld [vmem:[%s6 + $0x20] sm:$0xff]
      %v484 = vld [vmem:[%s6 + $0x28] sm:$0xff]
      %v485 = vld [vmem:[%s6 + $0x30] sm:$0xff]
      %v486 = vld [vmem:[%s6 + $0x38] sm:$0xff]
      %v487 = vld [vmem:[%s7] sm:$0xff]
      %v488 = vld [vmem:[%s7 + $0x8] sm:$0xff]
      %v489 = vld [vmem:[%s7 + $0x10] sm:$0xff]
      %v490 = vld [vmem:[%s7 + $0x18] sm:$0xff]
      %v491 = vld [vmem:[%s7 + $0x20] sm:$0xff]
      %v492 = vld [vmem:[%s7 + $0x28] sm:$0xff]
      %v493 = vld [vmem:[%s7 + $0x30] sm:$0xff]
      %v494 = vld [vmem:[%s7 + $0x38] sm:$0xff]
      %496 = vset.pattern.permute.xlu0 0
      %497 = vperm.xlu0 %496, %v487
      %v498 = vpop.permute.xlu0 %497
      %501 = vset.pattern.permute.xlu0 0
      %502 = vperm.xlu0 %501, %v488
      %v503 = vpop.permute.xlu0 %502
      %506 = vset.pattern.permute.xlu0 0
      %507 = vperm.xlu0 %506, %v489
      %v508 = vpop.permute.xlu0 %507
      %511 = vset.pattern.permute.xlu0 0
      %512 = vperm.xlu0 %511, %v490
      %v513 = vpop.permute.xlu0 %512
      %516 = vset.pattern.permute.xlu0 0
      %517 = vperm.xlu0 %516, %v491
      %v518 = vpop.permute.xlu0 %517
      %521 = vset.pattern.permute.xlu0 0
      %522 = vperm.xlu0 %521, %v492
      %v523 = vpop.permute.xlu0 %522
      %526 = vset.pattern.permute.xlu0 0
      %527 = vperm.xlu0 %526, %v493
      %v528 = vpop.permute.xlu0 %527
      %531 = vset.pattern.permute.xlu0 0
      %532 = vperm.xlu0 %531, %v494
      %v533 = vpop.permute.xlu0 %532
      %vm535 = vcmask 130048
      %v537 = vsel %vm535, %v479, 0
      %v540 = vsel %vm535, %v480, 0
      %v543 = vsel %vm535, %v481, 0
      %v546 = vsel %vm535, %v482, 0
      %v549 = vsel %vm535, %v483, 0
      %v552 = vsel %vm535, %v484, 0
      %v555 = vsel %vm535, %v485, 0
      %v558 = vsel %vm535, %v486, 0
      %560 = vmatprep.subr.mxu0 0.0
      %561 = vmatpush1.msra.mxu0 0.0
      %562 = vmatprep.subr.mxu0 0.0
      %563 = vmatpush1.msra.mxu0 0.0
      %564 = vmatprep.subr.mxu0 0.0
      %565 = vmatpush1.msra.mxu0 0.0
      %566 = vmatprep.subr.mxu0 0.0
      %567 = vmatpush1.msra.mxu0 0.0
      %568 = vmatprep.subr.mxu0 0.0
      %569 = vmatpush1.msra.mxu0 0.0
      %570 = vmatprep.subr.mxu0 0.0
      %571 = vmatpush1.msra.mxu0 0.0
      %572 = vmatprep.subr.mxu0 0.0
      %573 = vmatpush1.msra.mxu0 0.0
      %574 = vmatprep.subr.mxu0 0.0
      %575 = vmatpush1.msra.mxu0 0.0
      %576 = vmatprep.subr.mxu0 0.0
      %577 = vmatpush1.msra.mxu0 0.0
      %578 = vmatprep.subr.mxu0 0.0
      %579 = vmatpush1.msra.mxu0 0.0
      %580 = vmatprep.subr.mxu0 0.0
      %581 = vmatpush1.msra.mxu0 0.0
      %582 = vmatprep.subr.mxu0 0.0
      %583 = vmatpush1.msra.mxu0 0.0
      %584 = vmatprep.subr.mxu0 0.0
      %585 = vmatpush1.msra.mxu0 0.0
      %586 = vmatprep.subr.mxu0 0.0
      %587 = vmatpush1.msra.mxu0 0.0
      %588 = vmatprep.subr.mxu0 %v478
      %589 = vmatpush1.msra.mxu0 %v477
      %590 = vmatprep.subr.mxu0 %v476
      %591 = vmatpush1.msra.mxu0 %v475
      %592 = vmatprep.subr.mxu0 0.0
      %593 = vmatpush2.msra.mxu0 0.0
      %594 = vmatprep.subr.mxu0 0.0
      %595 = vmatpush2.msra.mxu0 0.0
      %596 = vmatprep.subr.mxu0 0.0
      %597 = vmatpush2.msra.mxu0 0.0
      %598 = vmatprep.subr.mxu0 0.0
      %599 = vmatpush2.msra.mxu0 0.0
      %600 = vmatprep.subr.mxu0 0.0
      %601 = vmatpush2.msra.mxu0 0.0
      %602 = vmatprep.subr.mxu0 0.0
      %603 = vmatpush2.msra.mxu0 0.0
      %604 = vmatprep.subr.mxu0 0.0
      %605 = vmatpush2.msra.mxu0 0.0
      %606 = vmatprep.subr.mxu0 0.0
      %607 = vmatpush2.msra.mxu0 0.0
      %608 = vmatprep.subr.mxu0 0.0
      %609 = vmatpush2.msra.mxu0 0.0
      %610 = vmatprep.subr.mxu0 0.0
      %611 = vmatpush2.msra.mxu0 0.0
      %612 = vmatprep.subr.mxu0 0.0
      %613 = vmatpush2.msra.mxu0 0.0
      %614 = vmatprep.subr.mxu0 0.0
      %615 = vmatpush2.msra.mxu0 0.0
      %616 = vmatprep.subr.mxu0 0.0
      %617 = vmatpush2.msra.mxu0 0.0
      %618 = vmatprep.subr.mxu0 0.0
      %619 = vmatpush2.msra.mxu0 0.0
      %620 = vmatprep.subr.mxu0 0.0
      %621 = vmatpush2.msra.mxu0 0.0
      %622 = vmatprep.subr.mxu0 0.0
      %623 = vmatpush2.msra.mxu0 0.0
      %624 = vmatprep.mubr.f32.mxu0 0.0
      %625 = vmatmul.mubr.f32.gmra.mxu0 %v537
      %v626 = vpop.f32.mrf.mxu0
      %v627 = vadd.f32 %v498, %v626
      %v628 = vpop.f32.mrf.mxu0
      %v629 = vadd.f32 %v498, %v628
      %630 = vmatprep.mubr.f32.mxu0 0.0
      %631 = vmatmul.mubr.f32.gmra.mxu0 %v540
      %v632 = vpop.f32.mrf.mxu0
      %v633 = vadd.f32 %v503, %v632
      %v634 = vpop.f32.mrf.mxu0
      %v635 = vadd.f32 %v503, %v634
      %636 = vmatprep.mubr.f32.mxu0 0.0
      %637 = vmatmul.mubr.f32.gmra.mxu0 %v543
      %v638 = vpop.f32.mrf.mxu0
      %v639 = vadd.f32 %v508, %v638
      %v640 = vpop.f32.mrf.mxu0
      %v641 = vadd.f32 %v508, %v640
      %642 = vmatprep.mubr.f32.mxu0 0.0
      %643 = vmatmul.mubr.f32.gmra.mxu0 %v546
      %v644 = vpop.f32.mrf.mxu0
      %v645 = vadd.f32 %v513, %v644
      %v646 = vpop.f32.mrf.mxu0
      %v647 = vadd.f32 %v513, %v646
      %648 = vmatprep.mubr.f32.mxu0 0.0
      %649 = vmatmul.mubr.f32.gmra.mxu0 %v549
      %v650 = vpop.f32.mrf.mxu0
      %v651 = vadd.f32 %v518, %v650
      %v652 = vpop.f32.mrf.mxu0
      %v653 = vadd.f32 %v518, %v652
      %654 = vmatprep.mubr.f32.mxu0 0.0
      %655 = vmatmul.mubr.f32.gmra.mxu0 %v552
      %v656 = vpop.f32.mrf.mxu0
      %v657 = vadd.f32 %v523, %v656
      %v658 = vpop.f32.mrf.mxu0
      %v659 = vadd.f32 %v523, %v658
      %660 = vmatprep.mubr.f32.mxu0 0.0
      %661 = vmatmul.mubr.f32.gmra.mxu0 %v555
      %v662 = vpop.f32.mrf.mxu0
      %v663 = vadd.f32 %v528, %v662
      %v664 = vpop.f32.mrf.mxu0
      %v665 = vadd.f32 %v528, %v664
      %666 = vmatprep.mubr.f32.mxu0 0.0
      %667 = vmatmul.mubr.f32.gmra.mxu0 %v558
      %v668 = vpop.f32.mrf.mxu0
      %v669 = vadd.f32 %v533, %v668
      %v670 = vpop.f32.mrf.mxu0
      %v671 = vadd.f32 %v533, %v670
      %672 = vdwg.mxu0
      %v673 = vld [vmem:[%s426] sm:$0xff]
      %v674 = vld [vmem:[%s426 + $0x8] sm:$0xff]
      %v675 = vld [vmem:[%s426 + $0x10] sm:$0xff]
      %v676 = vld [vmem:[%s426 + $0x18] sm:$0xff]
      %v677 = vld [vmem:[%s426 + $0x20] sm:$0xff]
      %v678 = vld [vmem:[%s426 + $0x28] sm:$0xff]
      %v679 = vld [vmem:[%s426 + $0x30] sm:$0xff]
      %v680 = vld [vmem:[%s426 + $0x38] sm:$0xff]
      %682 = vset.pattern.permute.xlu0 0
      %683 = vperm.xlu0 %682, %v673
      %v684 = vpop.permute.xlu0 %683
      %687 = vset.pattern.permute.xlu0 0
      %688 = vperm.xlu0 %687, %v674
      %v689 = vpop.permute.xlu0 %688
      %692 = vset.pattern.permute.xlu0 0
      %693 = vperm.xlu0 %692, %v675
      %v694 = vpop.permute.xlu0 %693
      %697 = vset.pattern.permute.xlu0 0
      %698 = vperm.xlu0 %697, %v676
      %v699 = vpop.permute.xlu0 %698
      %702 = vset.pattern.permute.xlu0 0
      %703 = vperm.xlu0 %702, %v677
      %v704 = vpop.permute.xlu0 %703
      %707 = vset.pattern.permute.xlu0 0
      %708 = vperm.xlu0 %707, %v678
      %v709 = vpop.permute.xlu0 %708
      %712 = vset.pattern.permute.xlu0 0
      %713 = vperm.xlu0 %712, %v679
      %v714 = vpop.permute.xlu0 %713
      %717 = vset.pattern.permute.xlu0 0
      %718 = vperm.xlu0 %717, %v680
      %v719 = vpop.permute.xlu0 %718
      %v721 = vadd.f32 %v627, %v684
      %v722 = vadd.f32 %v629, %v684
      %v723 = vadd.f32 %v633, %v689
      %v724 = vadd.f32 %v635, %v689
      %v725 = vadd.f32 %v639, %v694
      %v726 = vadd.f32 %v641, %v694
      %v727 = vadd.f32 %v645, %v699
      %v728 = vadd.f32 %v647, %v699
      %v729 = vadd.f32 %v651, %v704
      %v730 = vadd.f32 %v653, %v704
      %v731 = vadd.f32 %v657, %v709
      %v732 = vadd.f32 %v659, %v709
      %v733 = vadd.f32 %v663, %v714
      %v734 = vadd.f32 %v665, %v714
      %v735 = vadd.f32 %v669, %v719
      %v736 = vadd.f32 %v671, %v719
      %v737 = vsub.f32 0.0, %v721
      %v738 = vsub.f32 0.0, %v722
      %v739 = vsub.f32 0.0, %v723
      %v740 = vsub.f32 0.0, %v724
      %v741 = vsub.f32 0.0, %v725
      %v742 = vsub.f32 0.0, %v726
      %v743 = vsub.f32 0.0, %v727
      %v744 = vsub.f32 0.0, %v728
      %v745 = vsub.f32 0.0, %v729
      %v746 = vsub.f32 0.0, %v730
      %v747 = vsub.f32 0.0, %v731
      %v748 = vsub.f32 0.0, %v732
      %v749 = vsub.f32 0.0, %v733
      %v750 = vsub.f32 0.0, %v734
      %v751 = vsub.f32 0.0, %v735
      %v752 = vsub.f32 0.0, %v736
      %v753 = vmul.f32 %v737, 1.442695
      %v754 = vpow.pop %v753
      %v755 = vmul.f32 %v738, 1.442695
      %v756 = vpow.pop %v755
      %v757 = vmul.f32 %v739, 1.442695
      %v758 = vpow.pop %v757
      %v759 = vmul.f32 %v740, 1.442695
      %v760 = vpow.pop %v759
      %v761 = vmul.f32 %v741, 1.442695
      %v762 = vpow.pop %v761
      %v763 = vmul.f32 %v742, 1.442695
      %v764 = vpow.pop %v763
      %v765 = vmul.f32 %v743, 1.442695
      %v766 = vpow.pop %v765
      %v767 = vmul.f32 %v744, 1.442695
      %v768 = vpow.pop %v767
      %v769 = vmul.f32 %v745, 1.442695
      %v770 = vpow.pop %v769
      %v771 = vmul.f32 %v746, 1.442695
      %v772 = vpow.pop %v771
      %v773 = vmul.f32 %v747, 1.442695
      %v774 = vpow.pop %v773
      %v775 = vmul.f32 %v748, 1.442695
      %v776 = vpow.pop %v775
      %v777 = vmul.f32 %v749, 1.442695
      %v778 = vpow.pop %v777
      %v779 = vmul.f32 %v750, 1.442695
      %v780 = vpow.pop %v779
      %v781 = vmul.f32 %v751, 1.442695
      %v782 = vpow.pop %v781
      %v783 = vmul.f32 %v752, 1.442695
      %v784 = vpow.pop %v783
      %v785 = vadd.f32 %v754, 1.0
      %v786 = vadd.f32 %v756, 1.0
      %v787 = vadd.f32 %v758, 1.0
      %v788 = vadd.f32 %v760, 1.0
      %v789 = vadd.f32 %v762, 1.0
      %v790 = vadd.f32 %v764, 1.0
      %v791 = vadd.f32 %v766, 1.0
      %v792 = vadd.f32 %v768, 1.0
      %v793 = vadd.f32 %v770, 1.0
      %v794 = vadd.f32 %v772, 1.0
      %v795 = vadd.f32 %v774, 1.0
      %v796 = vadd.f32 %v776, 1.0
      %v797 = vadd.f32 %v778, 1.0
      %v798 = vadd.f32 %v780, 1.0
      %v799 = vadd.f32 %v782, 1.0
      %v800 = vadd.f32 %v784, 1.0
      %v801 = vrcp.pop %v785
      %v802 = vrcp.pop %v786
      %v803 = vrcp.pop %v787
      %v804 = vrcp.pop %v788
      %v805 = vrcp.pop %v789
      %v806 = vrcp.pop %v790
      %v807 = vrcp.pop %v791
      %v808 = vrcp.pop %v792
      %v809 = vrcp.pop %v793
      %v810 = vrcp.pop %v794
      %v811 = vrcp.pop %v795
      %v812 = vrcp.pop %v796
      %v813 = vrcp.pop %v797
      %v814 = vrcp.pop %v798
      %v815 = vrcp.pop %v799
      %v816 = vrcp.pop %v800
      %v817 = vld [vmem:[%s410] sm:$0xff]
      %v818 = vld [vmem:[%s410 + $0x8] sm:$0xff]
      %v819 = vld [vmem:[%s410 + $0x10] sm:$0xff]
      %v820 = vld [vmem:[%s410 + $0x18] sm:$0xff]
      %v821 = vld [vmem:[%s410 + $0x20] sm:$0xff]
      %v822 = vld [vmem:[%s410 + $0x28] sm:$0xff]
      %v823 = vld [vmem:[%s410 + $0x30] sm:$0xff]
      %v824 = vld [vmem:[%s410 + $0x38] sm:$0xff]
      %v825 = vld [vmem:[%s410 + $0x40] sm:$0xff]
      %v826 = vld [vmem:[%s410 + $0x48] sm:$0xff]
      %v827 = vld [vmem:[%s410 + $0x50] sm:$0xff]
      %v828 = vld [vmem:[%s410 + $0x58] sm:$0xff]
      %v829 = vld [vmem:[%s410 + $0x60] sm:$0xff]
      %v830 = vld [vmem:[%s410 + $0x68] sm:$0xff]
      %v831 = vld [vmem:[%s410 + $0x70] sm:$0xff]
      %v832 = vld [vmem:[%s410 + $0x78] sm:$0xff]
      %v833 = vmul.f32 %v817, %v801
      %v834 = vmul.f32 %v818, %v802
      %v835 = vmul.f32 %v819, %v803
      %v836 = vmul.f32 %v820, %v804
      %v837 = vmul.f32 %v821, %v805
      %v838 = vmul.f32 %v822, %v806
      %v839 = vmul.f32 %v823, %v807
      %v840 = vmul.f32 %v824, %v808
      %v841 = vmul.f32 %v825, %v809
      %v842 = vmul.f32 %v826, %v810
      %v843 = vmul.f32 %v827, %v811
      %v844 = vmul.f32 %v828, %v812
      %v845 = vmul.f32 %v829, %v813
      %v846 = vmul.f32 %v830, %v814
      %v847 = vmul.f32 %v831, %v815
      %v848 = vmul.f32 %v832, %v816
      %v849 = vld [vmem:[%s420] sm:$0xff]
      %v850 = vld [vmem:[%s420 + $0x8] sm:$0xff]
      %v851 = vld [vmem:[%s420 + $0x10] sm:$0xff]
      %v852 = vld [vmem:[%s420 + $0x18] sm:$0xff]
      %v853 = vld [vmem:[%s420 + $0x20] sm:$0xff]
      %v854 = vld [vmem:[%s420 + $0x28] sm:$0xff]
      %v855 = vld [vmem:[%s420 + $0x30] sm:$0xff]
      %v856 = vld [vmem:[%s420 + $0x38] sm:$0xff]
      %v857 = vld [vmem:[%s420 + $0x40] sm:$0xff]
      %v858 = vld [vmem:[%s420 + $0x48] sm:$0xff]
      %v859 = vld [vmem:[%s420 + $0x50] sm:$0xff]
      %v860 = vld [vmem:[%s420 + $0x58] sm:$0xff]
      %v861 = vld [vmem:[%s420 + $0x60] sm:$0xff]
      %v862 = vld [vmem:[%s420 + $0x68] sm:$0xff]
      %v863 = vld [vmem:[%s420 + $0x70] sm:$0xff]
      %v864 = vld [vmem:[%s420 + $0x78] sm:$0xff]
      %v865 = vsub.f32 1.0, %v801
      %v866 = vsub.f32 1.0, %v802
      %v867 = vsub.f32 1.0, %v803
      %v868 = vsub.f32 1.0, %v804
      %v869 = vsub.f32 1.0, %v805
      %v870 = vsub.f32 1.0, %v806
      %v871 = vsub.f32 1.0, %v807
      %v872 = vsub.f32 1.0, %v808
      %v873 = vsub.f32 1.0, %v809
      %v874 = vsub.f32 1.0, %v810
      %v875 = vsub.f32 1.0, %v811
      %v876 = vsub.f32 1.0, %v812
      %v877 = vsub.f32 1.0, %v813
      %v878 = vsub.f32 1.0, %v814
      %v879 = vsub.f32 1.0, %v815
      %v880 = vsub.f32 1.0, %v816
      %v881 = vmul.f32 %v849, %v865
      %v882 = vmul.f32 %v850, %v866
      %v883 = vmul.f32 %v851, %v867
      %v884 = vmul.f32 %v852, %v868
      %v885 = vmul.f32 %v853, %v869
      %v886 = vmul.f32 %v854, %v870
      %v887 = vmul.f32 %v855, %v871
      %v888 = vmul.f32 %v856, %v872
      %v889 = vmul.f32 %v857, %v873
      %v890 = vmul.f32 %v858, %v874
      %v891 = vmul.f32 %v859, %v875
      %v892 = vmul.f32 %v860, %v876
      %v893 = vmul.f32 %v861, %v877
      %v894 = vmul.f32 %v862, %v878
      %v895 = vmul.f32 %v863, %v879
      %v896 = vmul.f32 %v864, %v880
      %v897 = vadd.f32 %v833, %v881
      %v898 = vadd.f32 %v834, %v882
      %v899 = vadd.f32 %v835, %v883
      %v900 = vadd.f32 %v836, %v884
      %v901 = vadd.f32 %v837, %v885
      %v902 = vadd.f32 %v838, %v886
      %v903 = vadd.f32 %v839, %v887
      %v904 = vadd.f32 %v840, %v888
      %v905 = vadd.f32 %v841, %v889
      %v906 = vadd.f32 %v842, %v890
      %v907 = vadd.f32 %v843, %v891
      %v908 = vadd.f32 %v844, %v892
      %v909 = vadd.f32 %v845, %v893
      %v910 = vadd.f32 %v846, %v894
      %v911 = vadd.f32 %v847, %v895
      %v912 = vadd.f32 %v848, %v896
      %913 = vst [vmem:[%s435] sm:$0xff] %v897
      %914 = vst [vmem:[%s435 + $0x8] sm:$0xff] %v898
      %915 = vst [vmem:[%s435 + $0x10] sm:$0xff] %v899
      %916 = vst [vmem:[%s435 + $0x18] sm:$0xff] %v900
      %917 = vst [vmem:[%s435 + $0x20] sm:$0xff] %v901
      %918 = vst [vmem:[%s435 + $0x28] sm:$0xff] %v902
      %919 = vst [vmem:[%s435 + $0x30] sm:$0xff] %v903
      %920 = vst [vmem:[%s435 + $0x38] sm:$0xff] %v904
      %921 = vst [vmem:[%s435 + $0x40] sm:$0xff] %v905
      %922 = vst [vmem:[%s435 + $0x48] sm:$0xff] %v906
      %923 = vst [vmem:[%s435 + $0x50] sm:$0xff] %v907
      %924 = vst [vmem:[%s435 + $0x58] sm:$0xff] %v908
      %925 = vst [vmem:[%s435 + $0x60] sm:$0xff] %v909
      %926 = vst [vmem:[%s435 + $0x68] sm:$0xff] %v910
      %927 = vst [vmem:[%s435 + $0x70] sm:$0xff] %v911
      %928 = vst [vmem:[%s435 + $0x78] sm:$0xff] %v912
      %s929 = smul.u32 2, %s24
      %p930 = scmp.lt.s32.totalorder %s23, 1
      %s931 = scalar_select %p930, %s23, 1
      %p932 = scmp.lt.s32.totalorder %s929, 1
      %s933 = scalar_select %p932, %s929, 1
      %s934 = smul.addr %s931, 16
      %s935 = sadd.s32 %s933, %s934
      %s936 = smul.addr %s935, 8
      %s937 = scalar_lea.vmem %s8, %s936
      // Predicated region
      $region53: #{iaff_forward.9} parent=51 // pred_check
        %p938 = pneg %p245
      $region54: #{iaff_forward.9} parent=51 // pred_check_branch
        %940 = sbr.rel (%p938) target = $region56
      $region55: #{iaff_forward.9} parent=51 // pred_region
        %s941 = smul.u32 2, %s24
      $region56: #{iaff_forward.9} parent=51 // pred_fallthru
        _
    $region52: #{iaff_forward.9} parent=5 // pred_fallthru
      _
    %p942 = scmp.le.s32.totalorder 2, %s14
    // Predicated region
    $region57: #{iaff_forward.9} parent=5 // pred_check
      %p943 = pneg %p942
    $region58: #{iaff_forward.9} parent=5 // pred_check_branch
      %945 = sbr.rel (%p943) target = $region60
    $region59: #{iaff_forward.9} parent=5 // pred_region
      %s946 = ssub.s32 %s14, 2
      // Predicated region
      $region61: #{iaff_forward.9} parent=59 // pred_check
        %p947 = pneg %p251
      $region62: #{iaff_forward.9} parent=59 // pred_check_branch
        %949 = sbr.rel (%p947) target = $region64
      $region63: #{iaff_forward.9} parent=59 // pred_region
        %s950 = smul.u32 2, %s26
        %p951 = scmp.lt.s32.totalorder %s25, 1
        %s952 = scalar_select %p951, %s25, 1
        %p953 = scmp.lt.s32.totalorder %s950, 1
        %s954 = scalar_select %p953, %s950, 1
        %s955 = smul.addr %s952, 16
        %s956 = sadd.s32 %s954, %s955
        %s957 = smul.addr %s956, 8
        %s958 = scalar_lea.vmem %s8, %s957
      $region64: #{iaff_forward.9} parent=59 // pred_fallthru
        _
    $region60: #{iaff_forward.9} parent=5 // pred_fallthru
      _
  $region6: #{iaff_forward.9} parent=0 // loop_footer
    %s18 = sadd.s32 1, %s14
  $region7: #{iaff_forward.9} parent=0 // loop_footer_branch
    %13 = sbr.rel target = $region3
  $region8: #{iaff_forward.9} parent=0 // loop_exit
    _

// kernel: iaff_forward.7
$region0: #{iaff_forward.7}
  #allocation0 [shape = 'u32[]', space=smem, size = 0x4, offset = 0x4, fixed_abs, tag = 'smem constant byte address 0x4 - core index']
  #allocation1 [shape = 'u32[144,128]{1,0:T(1,128)}', space=vmem, size = 0x12000, scoped, tag = 'internal scratch']
  %s0 = inlined_call_operand.vmem [shape: bf16[2,16,256], index: 0, kind: input, shape index: {}]
  %s1 = inlined_call_operand.vmem [shape: f32[2,64,256], index: 1, kind: input, shape index: {}]
  %s2 = inlined_call_operand.vmem [shape: f32[2,64,256], index: 2, kind: input, shape index: {}]
  %s3 = inlined_call_operand.vmem [shape: f32[2,64,1], index: 3, kind: input, shape index: {}]
  %s4 = inlined_call_operand.vmem [shape: f32[16,1], index: 4, kind: input, shape index: {}]
  %s5 = inlined_call_operand.vmem [shape: f32[16,1], index: 5, kind: input, shape index: {}]
  %s6 = inlined_call_operand.vmem [shape: f32[64,16], index: 6, kind: input, shape index: {}]
  %s7 = inlined_call_operand.vmem [shape: f32[64,1], index: 7, kind: input, shape index: {}]
  %s8 = inlined_call_operand.vmem [shape: f32[16,64], index: 8, kind: input, shape index: {}]
  %s9 = inlined_call_operand.vmem [shape: f32[16,1], index: 9, kind: input, shape index: {}]
  %s10 = inlined_call_operand.vmem [shape: bf16[2,16,256], index: 10, kind: output, shape index: {0}]
  %s11 = inlined_call_operand.vmem [shape: f32[2,16,128], index: 11, kind: output, shape index: {1}]
  %s12 = inlined_call_operand.vmem [shape: f32[2,16,128], index: 12, kind: output, shape index: {2}]
  %s13 = inlined_call_operand.vmem [shape: f32[2,64,128], index: 13, kind: output, shape index: {3}]
  %14 = xla_tuple %s10, %s11, %s12, %s13
  %s15 = sld [smem:[#allocation0]]
  $region101: #{iaff_forward.7} parent=0
    _
  %s17 = ssub.s32 1, %s15
  %s18 = scalar_select 0, %s17, %s15
  loop: start=0, step=1, limit=4
  $region2: #{iaff_forward.7} parent=0 // loop_pre_header
    _
  $region3: #{iaff_forward.7} parent=0 // loop_header
    %s20 = sphi 0, %s24
    %p21 = scmp.ge.s32.totalorder %s20, 4
    %s27 = sphi 0, %s39
    %s28 = sphi 0, %s35
    %s29 = sphi 0, %s27
    %s30 = sphi 0, %s28
    %s31 = sphi 0, %s29
    %s32 = sphi 0, %s30
    %s44 = sphi 0, %s46
    %s47 = sphi 0, %s44
    %s48 = sphi 0, %s47
    %s64 = sphi 0, %s48
    %s72 = sphi 0, %s74
    %s75 = sphi 0, %s72
    %s76 = sphi 0, %s75
    %s92 = sphi 0, %s76
    %s100 = sphi 0, %s102
    %s103 = sphi 0, %s100
    %s104 = sphi 0, %s103
    %s120 = sphi 0, %s104
    %s126 = sphi 0, %s128
    %s129 = sphi 0, %s126
    %s130 = sphi 0, %s129
    %s146 = sphi 0, %s130
    %s150 = sphi 0, %s150
    %s152 = sphi 0, %s150
    %s153 = sphi 0, %s152
    %s167 = sphi 0, %s153
    %s171 = sphi 0, %s171
    %s173 = sphi 0, %s171
    %s174 = sphi 0, %s173
    %s188 = sphi 0, %s174
    %s192 = sphi 0, %s192
    %s194 = sphi 0, %s192
    %s195 = sphi 0, %s194
    %s209 = sphi 0, %s195
    %s213 = sphi 0, %s213
    %s215 = sphi 0, %s213
    %s216 = sphi 0, %s215
    %s230 = sphi 0, %s216
    %s234 = sphi 0, %s234
    %s236 = sphi 0, %s234
    %s237 = sphi 0, %s236
    %s251 = sphi 0, %s237
    %s255 = sphi 0, %s255
    %s257 = sphi 0, %s255
    %s258 = sphi 0, %s257
    %s272 = sphi 0, %s258
    %s280 = sphi 0, %s282
    %s283 = sphi 0, %s280
    %s284 = sphi 0, %s283
    %s300 = sphi 0, %s284
    %s306 = sphi 0, %s308
    %s309 = sphi 0, %s306
    %s310 = sphi 0, %s309
    %s326 = sphi 0, %s310
    %s332 = sphi 0, %s334
    %s335 = sphi 0, %s332
    %s336 = sphi 0, %s335
    %s352 = sphi 0, %s336
    %s358 = sphi 0, %s360
    %s361 = sphi 0, %s358
    %s362 = sphi 0, %s361
    %s378 = sphi 0, %s362
  $region4: #{iaff_forward.7} parent=0 // loop_header_branch
    %23 = sbr.rel (%p21) target = $region8
  $region5: #{iaff_forward.7} parent=0 // loop_body
    %s25 = ssub.s32 %s20, 1
    %s26 = ssub.s32 %s20, 2
    %s33 = sadd.s32 1, %s28
    %p34 = scmp.ge.s32.totalorder %s33, 1
    %s35 = scalar_select %p34, 0, %s33
    %s36 = sadd.s32 1, %s27
    %s37 = scalar_select %p34, %s36, %s27
    %p38 = scmp.ge.s32.totalorder %s37, 2
    %s39 = scalar_select %p38, 0, %s37
    %s40 = ssub.s32 %s27, %s39
    %s41 = ssub.s32 %s28, %s35
    %s42 = sor.u32 %s40, %s41
    %p43 = scmp.eq.s32.totalorder %s42, 0
    %s45 = sadd.s32 %s44, 1
    %s46 = scalar_select %p43, %s44, %s45
    %p49 = pneg %p43
    %p50 = scmp.eq.s32.totalorder %s20, 1
    %p51 = por %p49, %p50
    %p52 = scmp.ne.s32.totalorder %s44, %s47
    %p53 = scmp.eq.s32.totalorder %s20, 0
    %p54 = por %p52, %p53
    %p55 = scmp.ne.s32.totalorder %s44, %s47
    %p56 = scmp.eq.s32.totalorder %s25, 1
    %p57 = por %p55, %p56
    %p58 = scmp.ne.s32.totalorder %s47, %s48
    %p59 = scmp.eq.s32.totalorder %s25, 0
    %p60 = por %p58, %p59
    %p61 = scmp.ne.s32.totalorder %s47, %s48
    %p62 = scmp.eq.s32.totalorder %s26, 1
    %p63 = por %p61, %p62
    %p65 = scmp.ne.s32.totalorder %s48, %s64
    %p66 = scmp.eq.s32.totalorder %s26, 0
    %p67 = por %p65, %p66
    %s68 = ssub.s32 %s27, %s39
    %s69 = ssub.s32 %s28, %s35
    %s70 = sor.u32 %s68, %s69
    %p71 = scmp.eq.s32.totalorder %s70, 0
    %s73 = sadd.s32 %s72, 1
    %s74 = scalar_select %p71, %s72, %s73
    %p77 = pneg %p71
    %p78 = scmp.eq.s32.totalorder %s20, 1
    %p79 = por %p77, %p78
    %p80 = scmp.ne.s32.totalorder %s72, %s75
    %p81 = scmp.eq.s32.totalorder %s20, 0
    %p82 = por %p80, %p81
    %p83 = scmp.ne.s32.totalorder %s72, %s75
    %p84 = scmp.eq.s32.totalorder %s25, 1
    %p85 = por %p83, %p84
    %p86 = scmp.ne.s32.totalorder %s75, %s76
    %p87 = scmp.eq.s32.totalorder %s25, 0
    %p88 = por %p86, %p87
    %p89 = scmp.ne.s32.totalorder %s75, %s76
    %p90 = scmp.eq.s32.totalorder %s26, 1
    %p91 = por %p89, %p90
    %p93 = scmp.ne.s32.totalorder %s76, %s92
    %p94 = scmp.eq.s32.totalorder %s26, 0
    %p95 = por %p93, %p94
    %s96 = ssub.s32 %s27, %s39
    %s97 = ssub.s32 %s28, %s35
    %s98 = sor.u32 %s96, %s97
    %p99 = scmp.eq.s32.totalorder %s98, 0
    %s101 = sadd.s32 %s100, 1
    %s102 = scalar_select %p99, %s100, %s101
    %p105 = pneg %p99
    %p106 = scmp.eq.s32.totalorder %s20, 1
    %p107 = por %p105, %p106
    %p108 = scmp.ne.s32.totalorder %s100, %s103
    %p109 = scmp.eq.s32.totalorder %s20, 0
    %p110 = por %p108, %p109
    %p111 = scmp.ne.s32.totalorder %s100, %s103
    %p112 = scmp.eq.s32.totalorder %s25, 1
    %p113 = por %p111, %p112
    %p114 = scmp.ne.s32.totalorder %s103, %s104
    %p115 = scmp.eq.s32.totalorder %s25, 0
    %p116 = por %p114, %p115
    %p117 = scmp.ne.s32.totalorder %s103, %s104
    %p118 = scmp.eq.s32.totalorder %s26, 1
    %p119 = por %p117, %p118
    %p121 = scmp.ne.s32.totalorder %s104, %s120
    %p122 = scmp.eq.s32.totalorder %s26, 0
    %p123 = por %p121, %p122
    %s124 = ssub.s32 %s27, %s39
    %p125 = scmp.eq.s32.totalorder %s124, 0
    %s127 = sadd.s32 %s126, 1
    %s128 = scalar_select %p125, %s126, %s127
    %p131 = pneg %p125
    %p132 = scmp.eq.s32.totalorder %s20, 1
    %p133 = por %p131, %p132
    %p134 = scmp.ne.s32.totalorder %s126, %s129
    %p135 = scmp.eq.s32.totalorder %s20, 0
    %p136 = por %p134, %p135
    %p137 = scmp.ne.s32.totalorder %s126, %s129
    %p138 = scmp.eq.s32.totalorder %s25, 1
    %p139 = por %p137, %p138
    %p140 = scmp.ne.s32.totalorder %s129, %s130
    %p141 = scmp.eq.s32.totalorder %s25, 0
    %p142 = por %p140, %p141
    %p143 = scmp.ne.s32.totalorder %s129, %s130
    %p144 = scmp.eq.s32.totalorder %s26, 1
    %p145 = por %p143, %p144
    %p147 = scmp.ne.s32.totalorder %s130, %s146
    %p148 = scmp.eq.s32.totalorder %s26, 0
    %p149 = por %p147, %p148
    %s151 = sadd.s32 %s150, 1
    %p154 = scmp.eq.s32.totalorder %s20, 1
    %p155 = scmp.ne.s32.totalorder %s150, %s152
    %p156 = scmp.eq.s32.totalorder %s20, 0
    %p157 = por %p155, %p156
    %p158 = scmp.ne.s32.totalorder %s150, %s152
    %p159 = scmp.eq.s32.totalorder %s25, 1
    %p160 = por %p158, %p159
    %p161 = scmp.ne.s32.totalorder %s152, %s153
    %p162 = scmp.eq.s32.totalorder %s25, 0
    %p163 = por %p161, %p162
    %p164 = scmp.ne.s32.totalorder %s152, %s153
    %p165 = scmp.eq.s32.totalorder %s26, 1
    %p166 = por %p164, %p165
    %p168 = scmp.ne.s32.totalorder %s153, %s167
    %p169 = scmp.eq.s32.totalorder %s26, 0
    %p170 = por %p168, %p169
    %s172 = sadd.s32 %s171, 1
    %p175 = scmp.eq.s32.totalorder %s20, 1
    %p176 = scmp.ne.s32.totalorder %s171, %s173
    %p177 = scmp.eq.s32.totalorder %s20, 0
    %p178 = por %p176, %p177
    %p179 = scmp.ne.s32.totalorder %s171, %s173
    %p180 = scmp.eq.s32.totalorder %s25, 1
    %p181 = por %p179, %p180
    %p182 = scmp.ne.s32.totalorder %s173, %s174
    %p183 = scmp.eq.s32.totalorder %s25, 0
    %p184 = por %p182, %p183
    %p185 = scmp.ne.s32.totalorder %s173, %s174
    %p186 = scmp.eq.s32.totalorder %s26, 1
    %p187 = por %p185, %p186
    %p189 = scmp.ne.s32.totalorder %s174, %s188
    %p190 = scmp.eq.s32.totalorder %s26, 0
    %p191 = por %p189, %p190
    %s193 = sadd.s32 %s192, 1
    %p196 = scmp.eq.s32.totalorder %s20, 1
    %p197 = scmp.ne.s32.totalorder %s192, %s194
    %p198 = scmp.eq.s32.totalorder %s20, 0
    %p199 = por %p197, %p198
    %p200 = scmp.ne.s32.totalorder %s192, %s194
    %p201 = scmp.eq.s32.totalorder %s25, 1
    %p202 = por %p200, %p201
    %p203 = scmp.ne.s32.totalorder %s194, %s195
    %p204 = scmp.eq.s32.totalorder %s25, 0
    %p205 = por %p203, %p204
    %p206 = scmp.ne.s32.totalorder %s194, %s195
    %p207 = scmp.eq.s32.totalorder %s26, 1
    %p208 = por %p206, %p207
    %p210 = scmp.ne.s32.totalorder %s195, %s209
    %p211 = scmp.eq.s32.totalorder %s26, 0
    %p212 = por %p210, %p211
    %s214 = sadd.s32 %s213, 1
    %p217 = scmp.eq.s32.totalorder %s20, 1
    %p218 = scmp.ne.s32.totalorder %s213, %s215
    %p219 = scmp.eq.s32.totalorder %s20, 0
    %p220 = por %p218, %p219
    %p221 = scmp.ne.s32.totalorder %s213, %s215
    %p222 = scmp.eq.s32.totalorder %s25, 1
    %p223 = por %p221, %p222
    %p224 = scmp.ne.s32.totalorder %s215, %s216
    %p225 = scmp.eq.s32.totalorder %s25, 0
    %p226 = por %p224, %p225
    %p227 = scmp.ne.s32.totalorder %s215, %s216
    %p228 = scmp.eq.s32.totalorder %s26, 1
    %p229 = por %p227, %p228
    %p231 = scmp.ne.s32.totalorder %s216, %s230
    %p232 = scmp.eq.s32.totalorder %s26, 0
    %p233 = por %p231, %p232
    %s235 = sadd.s32 %s234, 1
    %p238 = scmp.eq.s32.totalorder %s20, 1
    %p239 = scmp.ne.s32.totalorder %s234, %s236
    %p240 = scmp.eq.s32.totalorder %s20, 0
    %p241 = por %p239, %p240
    %p242 = scmp.ne.s32.totalorder %s234, %s236
    %p243 = scmp.eq.s32.totalorder %s25, 1
    %p244 = por %p242, %p243
    %p245 = scmp.ne.s32.totalorder %s236, %s237
    %p246 = scmp.eq.s32.totalorder %s25, 0
    %p247 = por %p245, %p246
    %p248 = scmp.ne.s32.totalorder %s236, %s237
    %p249 = scmp.eq.s32.totalorder %s26, 1
    %p250 = por %p248, %p249
    %p252 = scmp.ne.s32.totalorder %s237, %s251
    %p253 = scmp.eq.s32.totalorder %s26, 0
    %p254 = por %p252, %p253
    %s256 = sadd.s32 %s255, 1
    %p259 = scmp.eq.s32.totalorder %s20, 1
    %p260 = scmp.ne.s32.totalorder %s255, %s257
    %p261 = scmp.eq.s32.totalorder %s20, 0
    %p262 = por %p260, %p261
    %p263 = scmp.ne.s32.totalorder %s255, %s257
    %p264 = scmp.eq.s32.totalorder %s25, 1
    %p265 = por %p263, %p264
    %p266 = scmp.ne.s32.totalorder %s257, %s258
    %p267 = scmp.eq.s32.totalorder %s25, 0
    %p268 = por %p266, %p267
    %p269 = scmp.ne.s32.totalorder %s257, %s258
    %p270 = scmp.eq.s32.totalorder %s26, 1
    %p271 = por %p269, %p270
    %p273 = scmp.ne.s32.totalorder %s258, %s272
    %p274 = scmp.eq.s32.totalorder %s26, 0
    %p275 = por %p273, %p274
    %s276 = ssub.s32 %s27, %s39
    %s277 = ssub.s32 %s28, %s35
    %s278 = sor.u32 %s276, %s277
    %p279 = scmp.eq.s32.totalorder %s278, 0
    %s281 = sadd.s32 %s280, 1
    %s282 = scalar_select %p279, %s280, %s281
    %p285 = pneg %p279
    %p286 = scmp.eq.s32.totalorder %s20, 1
    %p287 = por %p285, %p286
    %p288 = scmp.ne.s32.totalorder %s280, %s283
    %p289 = scmp.eq.s32.totalorder %s20, 0
    %p290 = por %p288, %p289
    %p291 = scmp.ne.s32.totalorder %s280, %s283
    %p292 = scmp.eq.s32.totalorder %s25, 1
    %p293 = por %p291, %p292
    %p294 = scmp.ne.s32.totalorder %s283, %s284
    %p295 = scmp.eq.s32.totalorder %s25, 0
    %p296 = por %p294, %p295
    %p297 = scmp.ne.s32.totalorder %s283, %s284
    %p298 = scmp.eq.s32.totalorder %s26, 1
    %p299 = por %p297, %p298
    %p301 = scmp.ne.s32.totalorder %s284, %s300
    %p302 = scmp.eq.s32.totalorder %s26, 0
    %p303 = por %p301, %p302
    %s304 = ssub.s32 %s27, %s39
    %p305 = scmp.eq.s32.totalorder %s304, 0
    %s307 = sadd.s32 %s306, 1
    %s308 = scalar_select %p305, %s306, %s307
    %p311 = pneg %p305
    %p312 = scmp.eq.s32.totalorder %s20, 1
    %p313 = por %p311, %p312
    %p314 = scmp.ne.s32.totalorder %s306, %s309
    %p315 = scmp.eq.s32.totalorder %s20, 0
    %p316 = por %p314, %p315
    %p317 = scmp.ne.s32.totalorder %s306, %s309
    %p318 = scmp.eq.s32.totalorder %s25, 1
    %p319 = por %p317, %p318
    %p320 = scmp.ne.s32.totalorder %s309, %s310
    %p321 = scmp.eq.s32.totalorder %s25, 0
    %p322 = por %p320, %p321
    %p323 = scmp.ne.s32.totalorder %s309, %s310
    %p324 = scmp.eq.s32.totalorder %s26, 1
    %p325 = por %p323, %p324
    %p327 = scmp.ne.s32.totalorder %s310, %s326
    %p328 = scmp.eq.s32.totalorder %s26, 0
    %p329 = por %p327, %p328
    %s330 = ssub.s32 %s27, %s39
    %p331 = scmp.eq.s32.totalorder %s330, 0
    %s333 = sadd.s32 %s332, 1
    %s334 = scalar_select %p331, %s332, %s333
    %p337 = pneg %p331
    %p338 = scmp.eq.s32.totalorder %s20, 1
    %p339 = por %p337, %p338
    %p340 = scmp.ne.s32.totalorder %s332, %s335
    %p341 = scmp.eq.s32.totalorder %s20, 0
    %p342 = por %p340, %p341
    %p343 = scmp.ne.s32.totalorder %s332, %s335
    %p344 = scmp.eq.s32.totalorder %s25, 1
    %p345 = por %p343, %p344
    %p346 = scmp.ne.s32.totalorder %s335, %s336
    %p347 = scmp.eq.s32.totalorder %s25, 0
    %p348 = por %p346, %p347
    %p349 = scmp.ne.s32.totalorder %s335, %s336
    %p350 = scmp.eq.s32.totalorder %s26, 1
    %p351 = por %p349, %p350
    %p353 = scmp.ne.s32.totalorder %s336, %s352
    %p354 = scmp.eq.s32.totalorder %s26, 0
    %p355 = por %p353, %p354
    %s356 = ssub.s32 %s27, %s39
    %p357 = scmp.eq.s32.totalorder %s356, 0
    %s359 = sadd.s32 %s358, 1
    %s360 = scalar_select %p357, %s358, %s359
    %p363 = pneg %p357
    %p364 = scmp.eq.s32.totalorder %s20, 1
    %p365 = por %p363, %p364
    %p366 = scmp.ne.s32.totalorder %s358, %s361
    %p367 = scmp.eq.s32.totalorder %s20, 0
    %p368 = por %p366, %p367
    %p369 = scmp.ne.s32.totalorder %s358, %s361
    %p370 = scmp.eq.s32.totalorder %s25, 1
    %p371 = por %p369, %p370
    %p372 = scmp.ne.s32.totalorder %s361, %s362
    %p373 = scmp.eq.s32.totalorder %s25, 0
    %p374 = por %p372, %p373
    %p375 = scmp.ne.s32.totalorder %s361, %s362
    %p376 = scmp.eq.s32.totalorder %s26, 1
    %p377 = por %p375, %p376
    %p379 = scmp.ne.s32.totalorder %s362, %s378
    %p380 = scmp.eq.s32.totalorder %s26, 0
    %p381 = por %p379, %p380
    %p382 = scmp.le.s32.totalorder 1, %s20
    %p383 = scmp.lt.s32.totalorder %s20, 3
    %p384 = pnand %p382, %p383
    %p385 = pneg %p384
    // Predicated region
    $region9: #{iaff_forward.7} parent=5 // pred_check
      _
    $region10: #{iaff_forward.7} parent=5 // pred_check_branch
      %387 = sbr.rel (%p384) target = $region12
    $region11: #{iaff_forward.7} parent=5 // pred_region
      %s388 = ssub.s32 %s20, 1
      // Predicated region
      $region13: #{iaff_forward.7} parent=11 // pred_check
        %p389 = pneg %p163
      $region14: #{iaff_forward.7} parent=11 // pred_check_branch
        %391 = sbr.rel (%p389) target = $region16
      $region15: #{iaff_forward.7} parent=11 // pred_region
        _
      $region16: #{iaff_forward.7} parent=11 // pred_fallthru
        _
      // Predicated region
      $region17: #{iaff_forward.7} parent=11 // pred_check
        %p392 = pneg %p184
      $region18: #{iaff_forward.7} parent=11 // pred_check_branch
        %394 = sbr.rel (%p392) target = $region20
      $region19: #{iaff_forward.7} parent=11 // pred_region
        _
      $region20: #{iaff_forward.7} parent=11 // pred_fallthru
        _
      // Predicated region
      $region21: #{iaff_forward.7} parent=11 // pred_check
        %p395 = pneg %p205
      $region22: #{iaff_forward.7} parent=11 // pred_check_branch
        %397 = sbr.rel (%p395) target = $region24
      $region23: #{iaff_forward.7} parent=11 // pred_region
        _
      $region24: #{iaff_forward.7} parent=11 // pred_fallthru
        _
      // Predicated region
      $region25: #{iaff_forward.7} parent=11 // pred_check
        %p398 = pneg %p226
      $region26: #{iaff_forward.7} parent=11 // pred_check_branch
        %400 = sbr.rel (%p398) target = $region28
      $region27: #{iaff_forward.7} parent=11 // pred_region
        _
      $region28: #{iaff_forward.7} parent=11 // pred_fallthru
        _
      // Predicated region
      $region29: #{iaff_forward.7} parent=11 // pred_check
        %p401 = pneg %p247
      $region30: #{iaff_forward.7} parent=11 // pred_check_branch
        %403 = sbr.rel (%p401) target = $region32
      $region31: #{iaff_forward.7} parent=11 // pred_region
        _
      $region32: #{iaff_forward.7} parent=11 // pred_fallthru
        _
      // Predicated region
      $region33: #{iaff_forward.7} parent=11 // pred_check
        %p404 = pneg %p268
      $region34: #{iaff_forward.7} parent=11 // pred_check_branch
        %406 = sbr.rel (%p404) target = $region36
      $region35: #{iaff_forward.7} parent=11 // pred_region
        _
      $region36: #{iaff_forward.7} parent=11 // pred_fallthru
        _
    $region12: #{iaff_forward.7} parent=5 // pred_fallthru
      _
    %p407 = scmp.lt.s32.totalorder %s20, 2
    // Predicated region
    $region37: #{iaff_forward.7} parent=5 // pred_check
      %p408 = pneg %p407
    $region38: #{iaff_forward.7} parent=5 // pred_check_branch
      %410 = sbr.rel (%p408) target = $region40
    $region39: #{iaff_forward.7} parent=5 // pred_region
      // Predicated region
      $region41: #{iaff_forward.7} parent=39 // pred_check
        %p411 = pneg %p54
      $region42: #{iaff_forward.7} parent=39 // pred_check_branch
        %413 = sbr.rel (%p411) target = $region44
      $region43: #{iaff_forward.7} parent=39 // pred_region
        %s414 = smul.u32 2, %s28
        %p415 = scmp.lt.s32.totalorder %s27, 1
        %s416 = scalar_select %p415, %s27, 1
        %p417 = scmp.lt.s32.totalorder %s414, 1
        %s418 = scalar_select %p417, %s414, 1
        %s419 = smul.addr %s416, 4
        %s420 = sadd.s32 %s418, %s419
        %s421 = smul.addr %s420, 4
        %s422 = scalar_lea.vmem %s0, %s421
        %s423 = smul.u32 2, %s28
      $region44: #{iaff_forward.7} parent=39 // pred_fallthru
        _
      // Predicated region
      $region45: #{iaff_forward.7} parent=39 // pred_check
        %p424 = pneg %p82
      $region46: #{iaff_forward.7} parent=39 // pred_check_branch
        %426 = sbr.rel (%p424) target = $region48
      $region47: #{iaff_forward.7} parent=39 // pred_region
        %s427 = smul.u32 2, %s28
        %p428 = scmp.lt.s32.totalorder %s27, 1
        %s429 = scalar_select %p428, %s27, 1
        %p430 = scmp.lt.s32.totalorder %s427, 1
        %s431 = scalar_select %p430, %s427, 1
        %s432 = smul.addr %s429, 16
        %s433 = sadd.s32 %s431, %s432
        %s434 = smul.addr %s433, 8
        %s435 = scalar_lea.vmem %s1, %s434
        %s436 = smul.u32 2, %s28
      $region48: #{iaff_forward.7} parent=39 // pred_fallthru
        _
      // Predicated region
      $region49: #{iaff_forward.7} parent=39 // pred_check
        %p437 = pneg %p110
      $region50: #{iaff_forward.7} parent=39 // pred_check_branch
        %439 = sbr.rel (%p437) target = $region52
      $region51: #{iaff_forward.7} parent=39 // pred_region
        %s440 = smul.u32 2, %s28
        %p441 = scmp.lt.s32.totalorder %s27, 1
        %s442 = scalar_select %p441, %s27, 1
        %p443 = scmp.lt.s32.totalorder %s440, 1
        %s444 = scalar_select %p443, %s440, 1
        %s445 = smul.addr %s442, 16
        %s446 = sadd.s32 %s444, %s445
        %s447 = smul.addr %s446, 8
        %s448 = scalar_lea.vmem %s2, %s447
        %s449 = smul.u32 2, %s28
      $region52: #{iaff_forward.7} parent=39 // pred_fallthru
        _
      // Predicated region
      $region53: #{iaff_forward.7} parent=39 // pred_check
        %p450 = pneg %p136
      $region54: #{iaff_forward.7} parent=39 // pred_check_branch
        %452 = sbr.rel (%p450) target = $region56
      $region55: #{iaff_forward.7} parent=39 // pred_region
        %p453 = scmp.lt.s32.totalorder %s27, 1
        %s454 = scalar_select %p453, %s27, 1
        %s455 = smul.addr %s454, 8
        %s456 = smul.addr %s455, 8
        %s457 = scalar_lea.vmem %s3, %s456
      $region56: #{iaff_forward.7} parent=39 // pred_fallthru
        _
    $region40: #{iaff_forward.7} parent=5 // pred_fallthru
      _
    %p458 = scmp.le.s32.totalorder 1, %s20
    %p459 = scmp.lt.s32.totalorder %s20, 3
    %p460 = pnand %p458, %p459
    %p461 = pneg %p460
    // Predicated region
    $region57: #{iaff_forward.7} parent=5 // pred_check
      _
    $region58: #{iaff_forward.7} parent=5 // pred_check_branch
      %463 = sbr.rel (%p460) target = $region60
    $region59: #{iaff_forward.7} parent=5 // pred_region
      %s464 = ssub.s32 %s20, 1
      %s465 = smul.u32 2, %s30
      %p466 = scmp.lt.s32.totalorder %s29, 1
      %s467 = scalar_select %p466, %s29, 1
      %p468 = scmp.lt.s32.totalorder %s465, 1
      %s469 = scalar_select %p468, %s465, 1
      %s470 = smul.addr %s467, 4
      %s471 = sadd.s32 %s469, %s470
      %s472 = smul.addr %s471, 4
      %s473 = scalar_lea.vmem %s0, %s472
      %p474 = pneg %p60
      %p475 = pneg %p57
      %s476 = smul.u32 2, %s30
      %p477 = scmp.lt.s32.totalorder %s29, 1
      %s478 = scalar_select %p477, %s29, 1
      %p479 = scmp.lt.s32.totalorder %s476, 1
      %s480 = scalar_select %p479, %s476, 1
      %s481 = smul.addr %s478, 16
      %s482 = sadd.s32 %s480, %s481
      %s483 = smul.addr %s482, 8
      %s484 = scalar_lea.vmem %s1, %s483
      %p485 = pneg %p88
      %p486 = pneg %p85
      %s487 = smul.u32 2, %s30
      %p488 = scmp.lt.s32.totalorder %s29, 1
      %s489 = scalar_select %p488, %s29, 1
      %p490 = scmp.lt.s32.totalorder %s487, 1
      %s491 = scalar_select %p490, %s487, 1
      %s492 = smul.addr %s489, 16
      %s493 = sadd.s32 %s491, %s492
      %s494 = smul.addr %s493, 8
      %s495 = scalar_lea.vmem %s2, %s494
      %p496 = pneg %p116
      %p497 = pneg %p113
      %p498 = scmp.lt.s32.totalorder %s29, 1
      %s499 = scalar_select %p498, %s29, 1
      %s500 = smul.addr %s499, 8
      %s501 = smul.addr %s500, 8
      %s502 = scalar_lea.vmem %s3, %s501
      %p503 = pneg %p142
      %p504 = pneg %p139
      %p505 = pneg %p163
      %p506 = pneg %p160
      %p507 = pneg %p184
      %p508 = pneg %p181
      %p509 = pneg %p205
      %p510 = pneg %p202
      %p511 = pneg %p226
      %p512 = pneg %p223
      %p513 = pneg %p247
      %p514 = pneg %p244
      %p515 = pneg %p268
      %p516 = pneg %p265
      %p517 = pneg %p296
      %p518 = pneg %p293
      %s519 = smul.u32 2, %s30
      %p520 = scmp.lt.s32.totalorder %s29, 1
      %s521 = scalar_select %p520, %s29, 1
      %p522 = scmp.lt.s32.totalorder %s519, 1
      %s523 = scalar_select %p522, %s519, 1
      %s524 = smul.addr %s521, 4
      %s525 = sadd.s32 %s523, %s524
      %s526 = smul.addr %s525, 4
      %s527 = scalar_lea.vmem %s10, %s526
      %p528 = pneg %p322
      %p529 = pneg %p319
      %p530 = scmp.lt.s32.totalorder %s29, 1
      %s531 = scalar_select %p530, %s29, 1
      %s532 = smul.addr %s531, 2
      %s533 = smul.addr %s532, 8
      %s534 = scalar_lea.vmem %s11, %s533
      %p535 = pneg %p348
      %p536 = pneg %p345
      %p537 = scmp.lt.s32.totalorder %s29, 1
      %s538 = scalar_select %p537, %s29, 1
      %s539 = smul.addr %s538, 2
      %s540 = smul.addr %s539, 8
      %s541 = scalar_lea.vmem %s12, %s540
      %p542 = pneg %p374
      %p543 = pneg %p371
      %p544 = scmp.lt.s32.totalorder %s29, 1
      %s545 = scalar_select %p544, %s29, 1
      %s546 = smul.addr %s545, 8
      %s547 = smul.addr %s546, 8
      %s548 = scalar_lea.vmem %s13, %s547
      %s549 = smul.u32 2, %s30
      %p550 = scmp.lt.s32.totalorder %s29, 1
      %s551 = scalar_select %p550, %s29, 1
      %p552 = scmp.lt.s32.totalorder %s549, 1
      %s553 = scalar_select %p552, %s549, 1
      %s554 = smul.addr %s551, 4
      %s555 = sadd.s32 %s553, %s554
      %s556 = smul.addr %s555, 4
      %s557 = scalar_lea.vmem %s0, %s556
      %s558 = smul.u32 2, %s30
      %s559 = smul.u32 2, %s30
      %p560 = scmp.lt.s32.totalorder %s29, 1
      %s561 = scalar_select %p560, %s29, 1
      %p562 = scmp.lt.s32.totalorder %s559, 1
      %s563 = scalar_select %p562, %s559, 1
      %s564 = smul.addr %s561, 16
      %s565 = sadd.s32 %s563, %s564
      %s566 = smul.addr %s565, 8
      %s567 = scalar_lea.vmem %s1, %s566
      %s568 = smul.u32 2, %s30
      %s569 = smul.u32 2, %s30
      %p570 = scmp.lt.s32.totalorder %s29, 1
      %s571 = scalar_select %p570, %s29, 1
      %p572 = scmp.lt.s32.totalorder %s569, 1
      %s573 = scalar_select %p572, %s569, 1
      %s574 = smul.addr %s571, 16
      %s575 = sadd.s32 %s573, %s574
      %s576 = smul.addr %s575, 8
      %s577 = scalar_lea.vmem %s2, %s576
      %s578 = smul.u32 2, %s30
      %p579 = scmp.lt.s32.totalorder %s29, 1
      %s580 = scalar_select %p579, %s29, 1
      %s581 = smul.addr %s580, 8
      %s582 = smul.addr %s581, 8
      %s583 = scalar_lea.vmem %s3, %s582
      %s584 = smul.u32 2, %s30
      %p585 = scmp.lt.s32.totalorder %s29, 1
      %s586 = scalar_select %p585, %s29, 1
      %p587 = scmp.lt.s32.totalorder %s584, 1
      %s588 = scalar_select %p587, %s584, 1
      %s589 = smul.addr %s586, 4
      %s590 = sadd.s32 %s588, %s589
      %s591 = smul.addr %s590, 4
      %s592 = scalar_lea.vmem %s10, %s591
      %s593 = smul.u32 2, %s30
      %p594 = scmp.lt.s32.totalorder %s29, 1
      %s595 = scalar_select %p594, %s29, 1
      %s596 = smul.addr %s595, 2
      %s597 = smul.addr %s596, 8
      %s598 = scalar_lea.vmem %s11, %s597
      %p599 = scmp.lt.s32.totalorder %s29, 1
      %s600 = scalar_select %p599, %s29, 1
      %s601 = smul.addr %s600, 2
      %s602 = smul.addr %s601, 8
      %s603 = scalar_lea.vmem %s12, %s602
      %p604 = scmp.lt.s32.totalorder %s29, 1
      %s605 = scalar_select %p604, %s29, 1
      %s606 = smul.addr %s605, 8
      %s607 = smul.addr %s606, 8
      %s608 = scalar_lea.vmem %s13, %s607
      %p609 = scmp.eq.s32.totalorder %s30, 0
      // Predicated region
      $region61: #{iaff_forward.7} parent=59 // pred_check
        %p610 = pneg %p609
      $region62: #{iaff_forward.7} parent=59 // pred_check_branch
        %612 = sbr.rel (%p610) target = $region64
      $region63: #{iaff_forward.7} parent=59 // pred_region
        %613 = vst [vmem:[%s598] sm:$0xff] 0.0
        %614 = vst [vmem:[%s598 + $0x8] sm:$0xff] 0.0
        %615 = vst [vmem:[%s603] sm:$0xff] 0.0
        %616 = vst [vmem:[%s603 + $0x8] sm:$0xff] 0.0
        %617 = vst [vmem:[%s608] sm:$0xff] 0.0
        %618 = vst [vmem:[%s608 + $0x8] sm:$0xff] 0.0
        %619 = vst [vmem:[%s608 + $0x10] sm:$0xff] 0.0
        %620 = vst [vmem:[%s608 + $0x18] sm:$0xff] 0.0
        %621 = vst [vmem:[%s608 + $0x20] sm:$0xff] 0.0
        %622 = vst [vmem:[%s608 + $0x28] sm:$0xff] 0.0
        %623 = vst [vmem:[%s608 + $0x30] sm:$0xff] 0.0
        %624 = vst [vmem:[%s608 + $0x38] sm:$0xff] 0.0
      $region64: #{iaff_forward.7} parent=59 // pred_fallthru
        _
      %v625 = vld [vmem:[%s557] sm:$0xff]
      %v626 = vld [vmem:[%s557 + $0x8] sm:$0xff]
      %v627 = vunpack.c.l.bf16 %v625
      %v628 = vunpack.c.h.bf16 %v625
      %v629 = vunpack.c.l.bf16 %v626
      %v630 = vunpack.c.h.bf16 %v626
      %v631 = vld [vmem:[%s4] sm:$0xff]
      %v632 = vld [vmem:[%s4 + $0x8] sm:$0xff]
      %634 = vset.pattern.permute.xlu0 0
      %635 = vperm.xlu0 %634, %v631
      %v636 = vpop.permute.xlu0 %635
      %639 = vset.pattern.permute.xlu0 0
      %640 = vperm.xlu0 %639, %v632
      %v641 = vpop.permute.xlu0 %640
      %v643 = vmul.f32 %v627, %v636
      %v644 = vmul.f32 %v628, %v636
      %v645 = vmul.f32 %v629, %v641
      %v646 = vmul.f32 %v630, %v641
      %v647 = vld [vmem:[%s5] sm:$0xff]
      %v648 = vld [vmem:[%s5 + $0x8] sm:$0xff]
      %650 = vset.pattern.permute.xlu0 0
      %651 = vperm.xlu0 %650, %v647
      %v652 = vpop.permute.xlu0 %651
      %655 = vset.pattern.permute.xlu0 0
      %656 = vperm.xlu0 %655, %v648
      %v657 = vpop.permute.xlu0 %656
      %v659 = vadd.f32 %v643, %v652
      %v660 = vadd.f32 %v644, %v652
      %v661 = vadd.f32 %v645, %v657
      %v662 = vadd.f32 %v646, %v657
      %v663 = vmax.f32 %v659, 0.0
      %v664 = vmax.f32 %v660, 0.0
      %v665 = vmax.f32 %v661, 0.0
      %v666 = vmax.f32 %v662, 0.0
      %v667 = vld [vmem:[%s6] sm:$0xff]
      %v668 = vld [vmem:[%s6 + $0x8] sm:$0xff]
      %v669 = vld [vmem:[%s6 + $0x10] sm:$0xff]
      %v670 = vld [vmem:[%s6 + $0x18] sm:$0xff]
      %v671 = vld [vmem:[%s6 + $0x20] sm:$0xff]
      %v672 = vld [vmem:[%s6 + $0x28] sm:$0xff]
      %v673 = vld [vmem:[%s6 + $0x30] sm:$0xff]
      %v674 = vld [vmem:[%s6 + $0x38] sm:$0xff]
      %v675 = vld [vmem:[%s7] sm:$0xff]
      %v676 = vld [vmem:[%s7 + $0x8] sm:$0xff]
      %v677 = vld [vmem:[%s7 + $0x10] sm:$0xff]
      %v678 = vld [vmem:[%s7 + $0x18] sm:$0xff]
      %v679 = vld [vmem:[%s7 + $0x20] sm:$0xff]
      %v680 = vld [vmem:[%s7 + $0x28] sm:$0xff]
      %v681 = vld [vmem:[%s7 + $0x30] sm:$0xff]
      %v682 = vld [vmem:[%s7 + $0x38] sm:$0xff]
      %684 = vset.pattern.permute.xlu0 0
      %685 = vperm.xlu0 %684, %v675
      %v686 = vpop.permute.xlu0 %685
      %689 = vset.pattern.permute.xlu0 0
      %690 = vperm.xlu0 %689, %v676
      %v691 = vpop.permute.xlu0 %690
      %694 = vset.pattern.permute.xlu0 0
      %695 = vperm.xlu0 %694, %v677
      %v696 = vpop.permute.xlu0 %695
      %699 = vset.pattern.permute.xlu0 0
      %700 = vperm.xlu0 %699, %v678
      %v701 = vpop.permute.xlu0 %700
      %704 = vset.pattern.permute.xlu0 0
      %705 = vperm.xlu0 %704, %v679
      %v706 = vpop.permute.xlu0 %705
      %709 = vset.pattern.permute.xlu0 0
      %710 = vperm.xlu0 %709, %v680
      %v711 = vpop.permute.xlu0 %710
      %714 = vset.pattern.permute.xlu0 0
      %715 = vperm.xlu0 %714, %v681
      %v716 = vpop.permute.xlu0 %715
      %719 = vset.pattern.permute.xlu0 0
      %720 = vperm.xlu0 %719, %v682
      %v721 = vpop.permute.xlu0 %720
      %vm723 = vcmask 130048
      %v725 = vsel %vm723, %v667, 0
      %v728 = vsel %vm723, %v668, 0
      %v731 = vsel %vm723, %v669, 0
      %v734 = vsel %vm723, %v670, 0
      %v737 = vsel %vm723, %v671, 0
      %v740 = vsel %vm723, %v672, 0
      %v743 = vsel %vm723, %v673, 0
      %v746 = vsel %vm723, %v674, 0
      %748 = vmatprep.subr.mxu0 0.0
      %749 = vmatpush1.msra.mxu0 0.0
      %750 = vmatprep.subr.mxu0 0.0
      %751 = vmatpush1.msra.mxu0 0.0
      %752 = vmatprep.subr.mxu0 0.0
      %753 = vmatpush1.msra.mxu0 0.0
      %754 = vmatprep.subr.mxu0 0.0
      %755 = vmatpush1.msra.mxu0 0.0
      %756 = vmatprep.subr.mxu0 0.0
      %757 = vmatpush1.msra.mxu0 0.0
      %758 = vmatprep.subr.mxu0 0.0
      %759 = vmatpush1.msra.mxu0 0.0
      %760 = vmatprep.subr.mxu0 0.0
      %761 = vmatpush1.msra.mxu0 0.0
      %762 = vmatprep.subr.mxu0 0.0
      %763 = vmatpush1.msra.mxu0 0.0
      %764 = vmatprep.subr.mxu0 0.0
      %765 = vmatpush1.msra.mxu0 0.0
      %766 = vmatprep.subr.mxu0 0.0
      %767 = vmatpush1.msra.mxu0 0.0
      %768 = vmatprep.subr.mxu0 0.0
      %769 = vmatpush1.msra.mxu0 0.0
      %770 = vmatprep.subr.mxu0 0.0
      %771 = vmatpush1.msra.mxu0 0.0
      %772 = vmatprep.subr.mxu0 0.0
      %773 = vmatpush1.msra.mxu0 0.0
      %774 = vmatprep.subr.mxu0 0.0
      %775 = vmatpush1.msra.mxu0 0.0
      %776 = vmatprep.subr.mxu0 %v666
      %777 = vmatpush1.msra.mxu0 %v665
      %778 = vmatprep.subr.mxu0 %v664
      %779 = vmatpush1.msra.mxu0 %v663
      %780 = vmatprep.subr.mxu0 0.0
      %781 = vmatpush2.msra.mxu0 0.0
      %782 = vmatprep.subr.mxu0 0.0
      %783 = vmatpush2.msra.mxu0 0.0
      %784 = vmatprep.subr.mxu0 0.0
      %785 = vmatpush2.msra.mxu0 0.0
      %786 = vmatprep.subr.mxu0 0.0
      %787 = vmatpush2.msra.mxu0 0.0
      %788 = vmatprep.subr.mxu0 0.0
      %789 = vmatpush2.msra.mxu0 0.0
      %790 = vmatprep.subr.mxu0 0.0
      %791 = vmatpush2.msra.mxu0 0.0
      %792 = vmatprep.subr.mxu0 0.0
      %793 = vmatpush2.msra.mxu0 0.0
      %794 = vmatprep.subr.mxu0 0.0
      %795 = vmatpush2.msra.mxu0 0.0
      %796 = vmatprep.subr.mxu0 0.0
      %797 = vmatpush2.msra.mxu0 0.0
      %798 = vmatprep.subr.mxu0 0.0
      %799 = vmatpush2.msra.mxu0 0.0
      %800 = vmatprep.subr.mxu0 0.0
      %801 = vmatpush2.msra.mxu0 0.0
      %802 = vmatprep.subr.mxu0 0.0
      %803 = vmatpush2.msra.mxu0 0.0
      %804 = vmatprep.subr.mxu0 0.0
      %805 = vmatpush2.msra.mxu0 0.0
      %806 = vmatprep.subr.mxu0 0.0
      %807 = vmatpush2.msra.mxu0 0.0
      %808 = vmatprep.subr.mxu0 0.0
      %809 = vmatpush2.msra.mxu0 0.0
      %810 = vmatprep.subr.mxu0 0.0
      %811 = vmatpush2.msra.mxu0 0.0
      %812 = vmatprep.mubr.f32.mxu0 0.0
      %813 = vmatmul.mubr.f32.gmra.mxu0 %v725
      %v814 = vpop.f32.mrf.mxu0
      %v815 = vadd.f32 %v686, %v814
      %v816 = vpop.f32.mrf.mxu0
      %v817 = vadd.f32 %v686, %v816
      %818 = vmatprep.mubr.f32.mxu0 0.0
      %819 = vmatmul.mubr.f32.gmra.mxu0 %v728
      %v820 = vpop.f32.mrf.mxu0
      %v821 = vadd.f32 %v691, %v820
      %v822 = vpop.f32.mrf.mxu0
      %v823 = vadd.f32 %v691, %v822
      %824 = vmatprep.mubr.f32.mxu0 0.0
      %825 = vmatmul.mubr.f32.gmra.mxu0 %v731
      %v826 = vpop.f32.mrf.mxu0
      %v827 = vadd.f32 %v696, %v826
      %v828 = vpop.f32.mrf.mxu0
      %v829 = vadd.f32 %v696, %v828
      %830 = vmatprep.mubr.f32.mxu0 0.0
      %831 = vmatmul.mubr.f32.gmra.mxu0 %v734
      %v832 = vpop.f32.mrf.mxu0
      %v833 = vadd.f32 %v701, %v832
      %v834 = vpop.f32.mrf.mxu0
      %v835 = vadd.f32 %v701, %v834
      %836 = vmatprep.mubr.f32.mxu0 0.0
      %837 = vmatmul.mubr.f32.gmra.mxu0 %v737
      %v838 = vpop.f32.mrf.mxu0
      %v839 = vadd.f32 %v706, %v838
      %v840 = vpop.f32.mrf.mxu0
      %v841 = vadd.f32 %v706, %v840
      %842 = vmatprep.mubr.f32.mxu0 0.0
      %843 = vmatmul.mubr.f32.gmra.mxu0 %v740
      %v844 = vpop.f32.mrf.mxu0
      %v845 = vadd.f32 %v711, %v844
      %v846 = vpop.f32.mrf.mxu0
      %v847 = vadd.f32 %v711, %v846
      %848 = vmatprep.mubr.f32.mxu0 0.0
      %849 = vmatmul.mubr.f32.gmra.mxu0 %v743
      %v850 = vpop.f32.mrf.mxu0
      %v851 = vadd.f32 %v716, %v850
      %v852 = vpop.f32.mrf.mxu0
      %v853 = vadd.f32 %v716, %v852
      %854 = vmatprep.mubr.f32.mxu0 0.0
      %855 = vmatmul.mubr.f32.gmra.mxu0 %v746
      %v856 = vpop.f32.mrf.mxu0
      %v857 = vadd.f32 %v721, %v856
      %v858 = vpop.f32.mrf.mxu0
      %v859 = vadd.f32 %v721, %v858
      %860 = vdwg.mxu0
      %v861 = vld [vmem:[%s583] sm:$0xff]
      %v862 = vld [vmem:[%s583 + $0x8] sm:$0xff]
      %v863 = vld [vmem:[%s583 + $0x10] sm:$0xff]
      %v864 = vld [vmem:[%s583 + $0x18] sm:$0xff]
      %v865 = vld [vmem:[%s583 + $0x20] sm:$0xff]
      %v866 = vld [vmem:[%s583 + $0x28] sm:$0xff]
      %v867 = vld [vmem:[%s583 + $0x30] sm:$0xff]
      %v868 = vld [vmem:[%s583 + $0x38] sm:$0xff]
      %870 = vset.pattern.permute.xlu0 0
      %871 = vperm.xlu0 %870, %v861
      %v872 = vpop.permute.xlu0 %871
      %875 = vset.pattern.permute.xlu0 0
      %876 = vperm.xlu0 %875, %v862
      %v877 = vpop.permute.xlu0 %876
      %880 = vset.pattern.permute.xlu0 0
      %881 = vperm.xlu0 %880, %v863
      %v882 = vpop.permute.xlu0 %881
      %885 = vset.pattern.permute.xlu0 0
      %886 = vperm.xlu0 %885, %v864
      %v887 = vpop.permute.xlu0 %886
      %890 = vset.pattern.permute.xlu0 0
      %891 = vperm.xlu0 %890, %v865
      %v892 = vpop.permute.xlu0 %891
      %895 = vset.pattern.permute.xlu0 0
      %896 = vperm.xlu0 %895, %v866
      %v897 = vpop.permute.xlu0 %896
      %900 = vset.pattern.permute.xlu0 0
      %901 = vperm.xlu0 %900, %v867
      %v902 = vpop.permute.xlu0 %901
      %905 = vset.pattern.permute.xlu0 0
      %906 = vperm.xlu0 %905, %v868
      %v907 = vpop.permute.xlu0 %906
      %v909 = vadd.f32 %v815, %v872
      %v910 = vadd.f32 %v817, %v872
      %v911 = vadd.f32 %v821, %v877
      %v912 = vadd.f32 %v823, %v877
      %v913 = vadd.f32 %v827, %v882
      %v914 = vadd.f32 %v829, %v882
      %v915 = vadd.f32 %v833, %v887
      %v916 = vadd.f32 %v835, %v887
      %v917 = vadd.f32 %v839, %v892
      %v918 = vadd.f32 %v841, %v892
      %v919 = vadd.f32 %v845, %v897
      %v920 = vadd.f32 %v847, %v897
      %v921 = vadd.f32 %v851, %v902
      %v922 = vadd.f32 %v853, %v902
      %v923 = vadd.f32 %v857, %v907
      %v924 = vadd.f32 %v859, %v907
      %v925 = vsub.f32 0.0, %v909
      %v926 = vsub.f32 0.0, %v910
      %v927 = vsub.f32 0.0, %v911
      %v928 = vsub.f32 0.0, %v912
      %v929 = vsub.f32 0.0, %v913
      %v930 = vsub.f32 0.0, %v914
      %v931 = vsub.f32 0.0, %v915
      %v932 = vsub.f32 0.0, %v916
      %v933 = vsub.f32 0.0, %v917
      %v934 = vsub.f32 0.0, %v918
      %v935 = vsub.f32 0.0, %v919
      %v936 = vsub.f32 0.0, %v920
      %v937 = vsub.f32 0.0, %v921
      %v938 = vsub.f32 0.0, %v922
      %v939 = vsub.f32 0.0, %v923
      %v940 = vsub.f32 0.0, %v924
      %v941 = vmul.f32 %v925, 1.442695
      %v942 = vpow.pop %v941
      %v943 = vmul.f32 %v926, 1.442695
      %v944 = vpow.pop %v943
      %v945 = vmul.f32 %v927, 1.442695
      %v946 = vpow.pop %v945
      %v947 = vmul.f32 %v928, 1.442695
      %v948 = vpow.pop %v947
      %v949 = vmul.f32 %v929, 1.442695
      %v950 = vpow.pop %v949
      %v951 = vmul.f32 %v930, 1.442695
      %v952 = vpow.pop %v951
      %v953 = vmul.f32 %v931, 1.442695
      %v954 = vpow.pop %v953
      %v955 = vmul.f32 %v932, 1.442695
      %v956 = vpow.pop %v955
      %v957 = vmul.f32 %v933, 1.442695
      %v958 = vpow.pop %v957
      %v959 = vmul.f32 %v934, 1.442695
      %v960 = vpow.pop %v959
      %v961 = vmul.f32 %v935, 1.442695
      %v962 = vpow.pop %v961
      %v963 = vmul.f32 %v936, 1.442695
      %v964 = vpow.pop %v963
      %v965 = vmul.f32 %v937, 1.442695
      %v966 = vpow.pop %v965
      %v967 = vmul.f32 %v938, 1.442695
      %v968 = vpow.pop %v967
      %v969 = vmul.f32 %v939, 1.442695
      %v970 = vpow.pop %v969
      %v971 = vmul.f32 %v940, 1.442695
      %v972 = vpow.pop %v971
      %v973 = vadd.f32 %v942, 1.0
      %v974 = vadd.f32 %v944, 1.0
      %v975 = vadd.f32 %v946, 1.0
      %v976 = vadd.f32 %v948, 1.0
      %v977 = vadd.f32 %v950, 1.0
      %v978 = vadd.f32 %v952, 1.0
      %v979 = vadd.f32 %v954, 1.0
      %v980 = vadd.f32 %v956, 1.0
      %v981 = vadd.f32 %v958, 1.0
      %v982 = vadd.f32 %v960, 1.0
      %v983 = vadd.f32 %v962, 1.0
      %v984 = vadd.f32 %v964, 1.0
      %v985 = vadd.f32 %v966, 1.0
      %v986 = vadd.f32 %v968, 1.0
      %v987 = vadd.f32 %v970, 1.0
      %v988 = vadd.f32 %v972, 1.0
      %v989 = vrcp.pop %v973
      %v990 = vrcp.pop %v974
      %v991 = vrcp.pop %v975
      %v992 = vrcp.pop %v976
      %v993 = vrcp.pop %v977
      %v994 = vrcp.pop %v978
      %v995 = vrcp.pop %v979
      %v996 = vrcp.pop %v980
      %v997 = vrcp.pop %v981
      %v998 = vrcp.pop %v982
      %v999 = vrcp.pop %v983
      %v1000 = vrcp.pop %v984
      %v1001 = vrcp.pop %v985
      %v1002 = vrcp.pop %v986
      %v1003 = vrcp.pop %v987
      %v1004 = vrcp.pop %v988
      %v1005 = vld [vmem:[%s567] sm:$0xff]
      %v1006 = vld [vmem:[%s567 + $0x8] sm:$0xff]
      %v1007 = vld [vmem:[%s567 + $0x10] sm:$0xff]
      %v1008 = vld [vmem:[%s567 + $0x18] sm:$0xff]
      %v1009 = vld [vmem:[%s567 + $0x20] sm:$0xff]
      %v1010 = vld [vmem:[%s567 + $0x28] sm:$0xff]
      %v1011 = vld [vmem:[%s567 + $0x30] sm:$0xff]
      %v1012 = vld [vmem:[%s567 + $0x38] sm:$0xff]
      %v1013 = vld [vmem:[%s567 + $0x40] sm:$0xff]
      %v1014 = vld [vmem:[%s567 + $0x48] sm:$0xff]
      %v1015 = vld [vmem:[%s567 + $0x50] sm:$0xff]
      %v1016 = vld [vmem:[%s567 + $0x58] sm:$0xff]
      %v1017 = vld [vmem:[%s567 + $0x60] sm:$0xff]
      %v1018 = vld [vmem:[%s567 + $0x68] sm:$0xff]
      %v1019 = vld [vmem:[%s567 + $0x70] sm:$0xff]
      %v1020 = vld [vmem:[%s567 + $0x78] sm:$0xff]
      %v1021 = vmul.f32 %v1005, %v989
      %v1022 = vmul.f32 %v1006, %v990
      %v1023 = vmul.f32 %v1007, %v991
      %v1024 = vmul.f32 %v1008, %v992
      %v1025 = vmul.f32 %v1009, %v993
      %v1026 = vmul.f32 %v1010, %v994
      %v1027 = vmul.f32 %v1011, %v995
      %v1028 = vmul.f32 %v1012, %v996
      %v1029 = vmul.f32 %v1013, %v997
      %v1030 = vmul.f32 %v1014, %v998
      %v1031 = vmul.f32 %v1015, %v999
      %v1032 = vmul.f32 %v1016, %v1000
      %v1033 = vmul.f32 %v1017, %v1001
      %v1034 = vmul.f32 %v1018, %v1002
      %v1035 = vmul.f32 %v1019, %v1003
      %v1036 = vmul.f32 %v1020, %v1004
      %v1037 = vld [vmem:[%s577] sm:$0xff]
      %v1038 = vld [vmem:[%s577 + $0x8] sm:$0xff]
      %v1039 = vld [vmem:[%s577 + $0x10] sm:$0xff]
      %v1040 = vld [vmem:[%s577 + $0x18] sm:$0xff]
      %v1041 = vld [vmem:[%s577 + $0x20] sm:$0xff]
      %v1042 = vld [vmem:[%s577 + $0x28] sm:$0xff]
      %v1043 = vld [vmem:[%s577 + $0x30] sm:$0xff]
      %v1044 = vld [vmem:[%s577 + $0x38] sm:$0xff]
      %v1045 = vld [vmem:[%s577 + $0x40] sm:$0xff]
      %v1046 = vld [vmem:[%s577 + $0x48] sm:$0xff]
      %v1047 = vld [vmem:[%s577 + $0x50] sm:$0xff]
      %v1048 = vld [vmem:[%s577 + $0x58] sm:$0xff]
      %v1049 = vld [vmem:[%s577 + $0x60] sm:$0xff]
      %v1050 = vld [vmem:[%s577 + $0x68] sm:$0xff]
      %v1051 = vld [vmem:[%s577 + $0x70] sm:$0xff]
      %v1052 = vld [vmem:[%s577 + $0x78] sm:$0xff]
      %v1053 = vsub.f32 1.0, %v989
      %v1054 = vsub.f32 1.0, %v990
      %v1055 = vsub.f32 1.0, %v991
      %v1056 = vsub.f32 1.0, %v992
      %v1057 = vsub.f32 1.0, %v993
      %v1058 = vsub.f32 1.0, %v994
      %v1059 = vsub.f32 1.0, %v995
      %v1060 = vsub.f32 1.0, %v996
      %v1061 = vsub.f32 1.0, %v997
      %v1062 = vsub.f32 1.0, %v998
      %v1063 = vsub.f32 1.0, %v999
      %v1064 = vsub.f32 1.0, %v1000
      %v1065 = vsub.f32 1.0, %v1001
      %v1066 = vsub.f32 1.0, %v1002
      %v1067 = vsub.f32 1.0, %v1003
      %v1068 = vsub.f32 1.0, %v1004
      %v1069 = vmul.f32 %v1037, %v1053
      %v1070 = vmul.f32 %v1038, %v1054
      %v1071 = vmul.f32 %v1039, %v1055
      %v1072 = vmul.f32 %v1040, %v1056
      %v1073 = vmul.f32 %v1041, %v1057
      %v1074 = vmul.f32 %v1042, %v1058
      %v1075 = vmul.f32 %v1043, %v1059
      %v1076 = vmul.f32 %v1044, %v1060
      %v1077 = vmul.f32 %v1045, %v1061
      %v1078 = vmul.f32 %v1046, %v1062
      %v1079 = vmul.f32 %v1047, %v1063
      %v1080 = vmul.f32 %v1048, %v1064
      %v1081 = vmul.f32 %v1049, %v1065
      %v1082 = vmul.f32 %v1050, %v1066
      %v1083 = vmul.f32 %v1051, %v1067
      %v1084 = vmul.f32 %v1052, %v1068
      %v1085 = vadd.f32 %v1021, %v1069
      %v1086 = vadd.f32 %v1022, %v1070
      %v1087 = vadd.f32 %v1023, %v1071
      %v1088 = vadd.f32 %v1024, %v1072
      %v1089 = vadd.f32 %v1025, %v1073
      %v1090 = vadd.f32 %v1026, %v1074
      %v1091 = vadd.f32 %v1027, %v1075
      %v1092 = vadd.f32 %v1028, %v1076
      %v1093 = vadd.f32 %v1029, %v1077
      %v1094 = vadd.f32 %v1030, %v1078
      %v1095 = vadd.f32 %v1031, %v1079
      %v1096 = vadd.f32 %v1032, %v1080
      %v1097 = vadd.f32 %v1033, %v1081
      %v1098 = vadd.f32 %v1034, %v1082
      %v1099 = vadd.f32 %v1035, %v1083
      %v1100 = vadd.f32 %v1036, %v1084
      %v1101 = vld [vmem:[%s8] sm:$0xff]
      %v1102 = vld [vmem:[%s8 + $0x8] sm:$0xff]
      %v1103 = vld [vmem:[%s9] sm:$0xff]
      %v1104 = vld [vmem:[%s9 + $0x8] sm:$0xff]
      %1106 = vset.pattern.permute.xlu0 0
      %1107 = vperm.xlu0 %1106, %v1103
      %v1108 = vpop.permute.xlu0 %1107
      %1111 = vset.pattern.permute.xlu0 0
      %1112 = vperm.xlu0 %1111, %v1104
      %v1113 = vpop.permute.xlu0 %1112
      %vm1115 = vcmask 523264
      %v1117 = vsel %vm1115, %v1101, 0
      %v1120 = vsel %vm1115, %v1102, 0
      %1122 = vmatprep.subr.mxu0 0.0
      %1123 = vmatpush1.msra.mxu0 0.0
      %1124 = vmatprep.subr.mxu0 0.0
      %1125 = vmatpush1.msra.mxu0 0.0
      %1126 = vmatprep.subr.mxu0 0.0
      %1127 = vmatpush1.msra.mxu0 0.0
      %1128 = vmatprep.subr.mxu0 0.0
      %1129 = vmatpush1.msra.mxu0 0.0
      %1130 = vmatprep.subr.mxu0 0.0
      %1131 = vmatpush1.msra.mxu0 0.0
      %1132 = vmatprep.subr.mxu0 0.0
      %1133 = vmatpush1.msra.mxu0 0.0
      %1134 = vmatprep.subr.mxu0 0.0
      %1135 = vmatpush1.msra.mxu0 0.0
      %1136 = vmatprep.subr.mxu0 0.0
      %1137 = vmatpush1.msra.mxu0 0.0
      %1138 = vmatprep.subr.mxu0 %v1100
      %1139 = vmatpush1.msra.mxu0 %v1099
      %1140 = vmatprep.subr.mxu0 %v1098
      %1141 = vmatpush1.msra.mxu0 %v1097
      %1142 = vmatprep.subr.mxu0 %v1096
      %1143 = vmatpush1.msra.mxu0 %v1095
      %1144 = vmatprep.subr.mxu0 %v1094
      %1145 = vmatpush1.msra.mxu0 %v1093
      %1146 = vmatprep.subr.mxu0 %v1092
      %1147 = vmatpush1.msra.mxu0 %v1091
      %1148 = vmatprep.subr.mxu0 %v1090
      %1149 = vmatpush1.msra.mxu0 %v1089
      %1150 = vmatprep.subr.mxu0 %v1088
      %1151 = vmatpush1.msra.mxu0 %v1087
      %1152 = vmatprep.subr.mxu0 %v1086
      %1153 = vmatpush1.msra.mxu0 %v1085
      %1154 = vmatprep.subr.mxu0 0.0
      %1155 = vmatpush2.msra.mxu0 0.0
      %1156 = vmatprep.subr.mxu0 0.0
      %1157 = vmatpush2.msra.mxu0 0.0
      %1158 = vmatprep.subr.mxu0 0.0
      %1159 = vmatpush2.msra.mxu0 0.0
      %1160 = vmatprep.subr.mxu0 0.0
      %1161 = vmatpush2.msra.mxu0 0.0
      %1162 = vmatprep.subr.mxu0 0.0
      %1163 = vmatpush2.msra.mxu0 0.0
      %1164 = vmatprep.subr.mxu0 0.0
      %1165 = vmatpush2.msra.mxu0 0.0
      %1166 = vmatprep.subr.mxu0 0.0
      %1167 = vmatpush2.msra.mxu0 0.0
      %1168 = vmatprep.subr.mxu0 0.0
      %1169 = vmatpush2.msra.mxu0 0.0
      %1170 = vmatprep.subr.mxu0 0.0
      %1171 = vmatpush2.msra.mxu0 0.0
      %1172 = vmatprep.subr.mxu0 0.0
      %1173 = vmatpush2.msra.mxu0 0.0
      %1174 = vmatprep.subr.mxu0 0.0
      %1175 = vmatpush2.msra.mxu0 0.0
      %1176 = vmatprep.subr.mxu0 0.0
      %1177 = vmatpush2.msra.mxu0 0.0
      %1178 = vmatprep.subr.mxu0 0.0
      %1179 = vmatpush2.msra.mxu0 0.0
      %1180 = vmatprep.subr.mxu0 0.0
      %1181 = vmatpush2.msra.mxu0 0.0
      %1182 = vmatprep.subr.mxu0 0.0
      %1183 = vmatpush2.msra.mxu0 0.0
      %1184 = vmatprep.subr.mxu0 0.0
      %1185 = vmatpush2.msra.mxu0 0.0
      %1186 = vmatprep.mubr.f32.mxu0 0.0
      %1187 = vmatmul.mubr.f32.gmra.mxu0 %v1117
      %v1188 = vpop.f32.mrf.mxu0
      %v1189 = vadd.f32 %v1108, %v1188
      %v1190 = vpop.f32.mrf.mxu0
      %v1191 = vadd.f32 %v1108, %v1190
      %1192 = vmatprep.mubr.f32.mxu0 0.0
      %1193 = vmatmul.mubr.f32.gmra.mxu0 %v1120
      %v1194 = vpop.f32.mrf.mxu0
      %v1195 = vadd.f32 %v1113, %v1194
      %v1196 = vpop.f32.mrf.mxu0
      %v1197 = vadd.f32 %v1113, %v1196
      %1198 = vdwg.mxu0
      %v1199 = vpack.c.bf16 %v1195, %v1189
      %v1200 = vpack.c.bf16 %v1197, %v1191
      %v1203 = vunpack.c.l.b16 %v1199
      %v1204 = vunpack.c.l.b16 %v1200
      %v1205 = vunpack.c.h.b16 %v1199
      %v1206 = vunpack.c.h.b16 %v1200
      %v1207 = vpack.c.b16 %v1204, %v1203
      %v1208 = vpack.c.b16 %v1206, %v1205
      %1211 = vst [vmem:[%s592] sm:$0xff] %v1207
      %1212 = vst [vmem:[%s592 + $0x8] sm:$0xff] %v1208
      %v1213 = vadd.f32 %v1189, %v1191
      %1214 = vadd.xlane.f32.xlu0 %v1213
      %v1215 = vpop.xlane.xlu0 %1214
      %v1216 = vadd.f32 %v1195, %v1197
      %1217 = vadd.xlane.f32.xlu0 %v1216
      %v1218 = vpop.xlane.xlu0 %1217
      %v1219 = vld [vmem:[%s598] sm:$0xff]
      %v1220 = vld [vmem:[%s598 + $0x8] sm:$0xff]
      %v1221 = vadd.f32 %v1219, %v1215
      %v1222 = vadd.f32 %v1220, %v1218
      %1223 = vst [vmem:[%s598] sm:$0xff] %v1221
      %1224 = vst [vmem:[%s598 + $0x8] sm:$0xff] %v1222
      %v1225 = vmul.f32 %v1189, %v1189
      %v1226 = vmul.f32 %v1191, %v1191
      %v1227 = vmul.f32 %v1195, %v1195
      %v1228 = vmul.f32 %v1197, %v1197
      %v1229 = vadd.f32 %v1225, %v1226
      %1230 = vadd.xlane.f32.xlu0 %v1229
      %v1231 = vpop.xlane.xlu0 %1230
      %v1232 = vadd.f32 %v1227, %v1228
      %1233 = vadd.xlane.f32.xlu0 %v1232
      %v1234 = vpop.xlane.xlu0 %1233
      %v1235 = vld [vmem:[%s603] sm:$0xff]
      %v1236 = vld [vmem:[%s603 + $0x8] sm:$0xff]
      %v1237 = vadd.f32 %v1235, %v1231
      %v1238 = vadd.f32 %v1236, %v1234
      %1239 = vst [vmem:[%s603] sm:$0xff] %v1237
      %1240 = vst [vmem:[%s603 + $0x8] sm:$0xff] %v1238
      %v1241 = vadd.f32 %v1085, %v1086
      %1242 = vadd.xlane.f32.xlu0 %v1241
      %v1243 = vpop.xlane.xlu0 %1242
      %v1244 = vadd.f32 %v1087, %v1088
      %1245 = vadd.xlane.f32.xlu0 %v1244
      %v1246 = vpop.xlane.xlu0 %1245
      %v1247 = vadd.f32 %v1089, %v1090
      %1248 = vadd.xlane.f32.xlu0 %v1247
      %v1249 = vpop.xlane.xlu0 %1248
      %v1250 = vadd.f32 %v1091, %v1092
      %1251 = vadd.xlane.f32.xlu0 %v1250
      %v1252 = vpop.xlane.xlu0 %1251
      %v1253 = vadd.f32 %v1093, %v1094
      %1254 = vadd.xlane.f32.xlu0 %v1253
      %v1255 = vpop.xlane.xlu0 %1254
      %v1256 = vadd.f32 %v1095, %v1096
      %1257 = vadd.xlane.f32.xlu0 %v1256
      %v1258 = vpop.xlane.xlu0 %1257
      %v1259 = vadd.f32 %v1097, %v1098
      %1260 = vadd.xlane.f32.xlu0 %v1259
      %v1261 = vpop.xlane.xlu0 %1260
      %v1262 = vadd.f32 %v1099, %v1100
      %1263 = vadd.xlane.f32.xlu0 %v1262
      %v1264 = vpop.xlane.xlu0 %1263
      %v1265 = vld [vmem:[%s608] sm:$0xff]
      %v1266 = vld [vmem:[%s608 + $0x8] sm:$0xff]
      %v1267 = vld [vmem:[%s608 + $0x10] sm:$0xff]
      %v1268 = vld [vmem:[%s608 + $0x18] sm:$0xff]
      %v1269 = vld [vmem:[%s608 + $0x20] sm:$0xff]
      %v1270 = vld [vmem:[%s608 + $0x28] sm:$0xff]
      %v1271 = vld [vmem:[%s608 + $0x30] sm:$0xff]
      %v1272 = vld [vmem:[%s608 + $0x38] sm:$0xff]
      %v1273 = vadd.f32 %v1265, %v1243
      %v1274 = vadd.f32 %v1266, %v1246
      %v1275 = vadd.f32 %v1267, %v1249
      %v1276 = vadd.f32 %v1268, %v1252
      %v1277 = vadd.f32 %v1269, %v1255
      %v1278 = vadd.f32 %v1270, %v1258
      %v1279 = vadd.f32 %v1271, %v1261
      %v1280 = vadd.f32 %v1272, %v1264
      %1281 = vst [vmem:[%s608] sm:$0xff] %v1273
      %1282 = vst [vmem:[%s608 + $0x8] sm:$0xff] %v1274
      %1283 = vst [vmem:[%s608 + $0x10] sm:$0xff] %v1275
      %1284 = vst [vmem:[%s608 + $0x18] sm:$0xff] %v1276
      %1285 = vst [vmem:[%s608 + $0x20] sm:$0xff] %v1277
      %1286 = vst [vmem:[%s608 + $0x28] sm:$0xff] %v1278
      %1287 = vst [vmem:[%s608 + $0x30] sm:$0xff] %v1279
      %1288 = vst [vmem:[%s608 + $0x38] sm:$0xff] %v1280
      %s1289 = smul.u32 2, %s30
      %p1290 = scmp.lt.s32.totalorder %s29, 1
      %s1291 = scalar_select %p1290, %s29, 1
      %p1292 = scmp.lt.s32.totalorder %s1289, 1
      %s1293 = scalar_select %p1292, %s1289, 1
      %s1294 = smul.addr %s1291, 4
      %s1295 = sadd.s32 %s1293, %s1294
      %s1296 = smul.addr %s1295, 4
      %s1297 = scalar_lea.vmem %s10, %s1296
      %p1298 = scmp.lt.s32.totalorder %s29, 1
      %s1299 = scalar_select %p1298, %s29, 1
      %s1300 = smul.addr %s1299, 2
      %s1301 = smul.addr %s1300, 8
      %s1302 = scalar_lea.vmem %s11, %s1301
      %p1303 = scmp.lt.s32.totalorder %s29, 1
      %s1304 = scalar_select %p1303, %s29, 1
      %s1305 = smul.addr %s1304, 2
      %s1306 = smul.addr %s1305, 8
      %s1307 = scalar_lea.vmem %s12, %s1306
      %p1308 = scmp.lt.s32.totalorder %s29, 1
      %s1309 = scalar_select %p1308, %s29, 1
      %s1310 = smul.addr %s1309, 8
      %s1311 = smul.addr %s1310, 8
      %s1312 = scalar_lea.vmem %s13, %s1311
      // Predicated region
      $region65: #{iaff_forward.7} parent=59 // pred_check
        %p1313 = pneg %p293
      $region66: #{iaff_forward.7} parent=59 // pred_check_branch
        %1315 = sbr.rel (%p1313) target = $region68
      $region67: #{iaff_forward.7} parent=59 // pred_region
        %s1316 = smul.u32 2, %s30
      $region68: #{iaff_forward.7} parent=59 // pred_fallthru
        _
      // Predicated region
      $region69: #{iaff_forward.7} parent=59 // pred_check
        %p1317 = pneg %p319
      $region70: #{iaff_forward.7} parent=59 // pred_check_branch
        %1319 = sbr.rel (%p1317) target = $region72
      $region71: #{iaff_forward.7} parent=59 // pred_region
        _
      $region72: #{iaff_forward.7} parent=59 // pred_fallthru
        _
      // Predicated region
      $region73: #{iaff_forward.7} parent=59 // pred_check
        %p1320 = pneg %p345
      $region74: #{iaff_forward.7} parent=59 // pred_check_branch
        %1322 = sbr.rel (%p1320) target = $region76
      $region75: #{iaff_forward.7} parent=59 // pred_region
        _
      $region76: #{iaff_forward.7} parent=59 // pred_fallthru
        _
      // Predicated region
      $region77: #{iaff_forward.7} parent=59 // pred_check
        %p1323 = pneg %p371
      $region78: #{iaff_forward.7} parent=59 // pred_check_branch
        %1325 = sbr.rel (%p1323) target = $region80
      $region79: #{iaff_forward.7} parent=59 // pred_region
        _
      $region80: #{iaff_forward.7} parent=59 // pred_fallthru
        _
    $region60: #{iaff_forward.7} parent=5 // pred_fallthru
      _
    %p1326 = scmp.le.s32.totalorder 2, %s20
    // Predicated region
    $region81: #{iaff_forward.7} parent=5 // pred_check
      %p1327 = pneg %p1326
    $region82: #{iaff_forward.7} parent=5 // pred_check_branch
      %1329 = sbr.rel (%p1327) target = $region84
    $region83: #{iaff_forward.7} parent=5 // pred_region
      %s1330 = ssub.s32 %s20, 2
      // Predicated region
      $region85: #{iaff_forward.7} parent=83 // pred_check
        %p1331 = pneg %p299
      $region86: #{iaff_forward.7} parent=83 // pred_check_branch
        %1333 = sbr.rel (%p1331) target = $region88
      $region87: #{iaff_forward.7} parent=83 // pred_region
        %s1334 = smul.u32 2, %s32
        %p1335 = scmp.lt.s32.totalorder %s31, 1
        %s1336 = scalar_select %p1335, %s31, 1
        %p1337 = scmp.lt.s32.totalorder %s1334, 1
        %s1338 = scalar_select %p1337, %s1334, 1
        %s1339 = smul.addr %s1336, 4
        %s1340 = sadd.s32 %s1338, %s1339
        %s1341 = smul.addr %s1340, 4
        %s1342 = scalar_lea.vmem %s10, %s1341
      $region88: #{iaff_forward.7} parent=83 // pred_fallthru
        _
      // Predicated region
      $region89: #{iaff_forward.7} parent=83 // pred_check
        %p1343 = pneg %p325
      $region90: #{iaff_forward.7} parent=83 // pred_check_branch
        %1345 = sbr.rel (%p1343) target = $region92
      $region91: #{iaff_forward.7} parent=83 // pred_region
        %p1346 = scmp.lt.s32.totalorder %s31, 1
        %s1347 = scalar_select %p1346, %s31, 1
        %s1348 = smul.addr %s1347, 2
        %s1349 = smul.addr %s1348, 8
        %s1350 = scalar_lea.vmem %s11, %s1349
      $region92: #{iaff_forward.7} parent=83 // pred_fallthru
        _
      // Predicated region
      $region93: #{iaff_forward.7} parent=83 // pred_check
        %p1351 = pneg %p351
      $region94: #{iaff_forward.7} parent=83 // pred_check_branch
        %1353 = sbr.rel (%p1351) target = $region96
      $region95: #{iaff_forward.7} parent=83 // pred_region
        %p1354 = scmp.lt.s32.totalorder %s31, 1
        %s1355 = scalar_select %p1354, %s31, 1
        %s1356 = smul.addr %s1355, 2
        %s1357 = smul.addr %s1356, 8
        %s1358 = scalar_lea.vmem %s12, %s1357
      $region96: #{iaff_forward.7} parent=83 // pred_fallthru
        _
      // Predicated region
      $region97: #{iaff_forward.7} parent=83 // pred_check
        %p1359 = pneg %p377
      $region98: #{iaff_forward.7} parent=83 // pred_check_branch
        %1361 = sbr.rel (%p1359) target = $region100
      $region99: #{iaff_forward.7} parent=83 // pred_region
        %p1362 = scmp.lt.s32.totalorder %s31, 1
        %s1363 = scalar_select %p1362, %s31, 1
        %s1364 = smul.addr %s1363, 8
        %s1365 = smul.addr %s1364, 8
        %s1366 = scalar_lea.vmem %s13, %s1365
      $region100: #{iaff_forward.7} parent=83 // pred_fallthru
        _
    $region84: #{iaff_forward.7} parent=5 // pred_fallthru
      _
  $region6: #{iaff_forward.7} parent=0 // loop_footer
    %s24 = sadd.s32 1, %s20
  $region7: #{iaff_forward.7} parent=0 // loop_footer_branch
    %19 = sbr.rel target = $region3
  $region8: #{iaff_forward.7} parent=0 // loop_exit
    _

</llo_original>
